<compile_context>
chip_gen: v6e
topology: v6e:2x2x1
jax: 0.10.0
libtpu: 0.0.40
codegen_flags: <defaults>
</compile_context>

<pallas_src>
import functools
import numpy as np
import jax
import jax.numpy as jnp
from jax.experimental import pallas as pl
from jax.experimental.pallas import tpu as pltpu


# ---------------------------------------------------------------------------
# Fused Pallas kernel:
#   lr       = mlp_chain(local_rep)                    (1x1 conv + BN + ReLU)*
#   f_dis    = exp(-mean_c |feat_center - f_neigh|) * lamda
#   att      = [g_dis, f_dis, f_neigh, lr] @ W_fc      (weights pre-split)
#   scores   = softmax over K
#   pooled   = sum_K ([f_neigh, lr] * scores)
#   out      = relu(pooled @ W_mlp * bn_scale + bn_bias)
# ---------------------------------------------------------------------------
def _fused_pool_kernel(*args, lamda, cf, cl, n_mlp):
    lrin_ref, fn_ref, fc_ref, gd_ref = args[:4]
    rest = args[4:]
    mlp_refs = rest[:3 * n_mlp]
    (wg_ref, wf_ref, wfn_ref, wlr_ref,
     wpfn_ref, wplr_ref, ps_ref, pb_ref, o_ref) = rest[3 * n_mlp:]

    tn, k, _ = fn_ref.shape
    fn = fn_ref[...]                         # (tn, K, cf)  gathered neighbour feats
    fcent = fc_ref[...]                      # (tn, cf)     centre features
    gd = gd_ref[...]                         # (tn, K)      geometric distance term

    # local-rep MLP chain (pt_utils.Conv2d 1x1 + folded BN + ReLU), fused
    x = lrin_ref[...].reshape(tn * k, lrin_ref.shape[-1])
    for s in range(n_mlp):
        w = mlp_refs[3 * s][...]
        sc = mlp_refs[3 * s + 1][...]
        bi = mlp_refs[3 * s + 2][...]
        x = jnp.maximum(
            jnp.dot(x, w, preferred_element_type=jnp.float32) * sc + bi, 0.0)
    lr2d = x                                  # (tn*K, cl)
    lr = lr2d.reshape(tn, k, cl)

    # cal_feature_dis
    f_dis = jnp.exp(-jnp.mean(jnp.abs(fcent[:, None, :] - fn), axis=-1)) * lamda  # (tn, K)

    # fc 1x1 conv; weight rows pre-split ([g_dis, f_dis, f_neigh, lr]) -> no
    # in-kernel concat and no unaligned sublane slicing.
    c = cf + cl
    att = (gd[..., None] * wg_ref[...][None, :, :]
           + f_dis[..., None] * wf_ref[...][None, :, :]
           + jnp.dot(fn.reshape(tn * k, cf), wfn_ref[...],
                     preferred_element_type=jnp.float32).reshape(tn, k, c)
           + jnp.dot(lr2d, wlr_ref[...],
                     preferred_element_type=jnp.float32).reshape(tn, k, c))

    # softmax over the neighbour axis (torch dim=3)
    m = jnp.max(att, axis=1, keepdims=True)
    e = jnp.exp(att - m)
    scores = e / jnp.sum(e, axis=1, keepdims=True)              # (tn, K, C)

    # attentive pooling (sum over K); feature_set = [fn | lr] along channels
    pooled_fn = jnp.sum(fn * scores[:, :, :cf], axis=1)         # (tn, cf)
    pooled_lr = jnp.sum(lr * scores[:, :, cf:], axis=1)         # (tn, cl)

    # output mlp (1x1 conv) + BN + ReLU, weight rows pre-split
    y = (jnp.dot(pooled_fn, wpfn_ref[...], preferred_element_type=jnp.float32)
         + jnp.dot(pooled_lr, wplr_ref[...], preferred_element_type=jnp.float32))
    o_ref[...] = jnp.maximum(y * ps_ref[...] + pb_ref[...], 0.0)


def _pick_tile_n(n, cap):
    """Largest N-tile that divides N, is a multiple of 8 (layout rule) and <= cap."""
    if n <= cap:
        return n
    t = (cap // 8) * 8
    while t >= 8:
        if n % t == 0:
            return t
        t -= 8
    return n  # fallback: whole axis (full-dim blocks always satisfy the (8,128) rule)


def fused_dualdis_att_pool(local_rep, f_neigh, feat_center, g_dis,
                           mlp_stack, w_fc, w_pmlp, bn_scale, bn_bias, lamda,
                           tile_cap=256):
    """mlp_stack: list of (w, bn_scale, bn_bias) applied to local_rep in order."""
    B, N, K, cf = f_neigh.shape
    cr = local_rep.shape[-1]
    cl = mlp_stack[-1][0].shape[1]
    c = cf + cl
    dout = w_pmlp.shape[1]
    n_mlp = len(mlp_stack)

    # tile_cap=256 keeps double-buffered tiles well under v7x's 64 MiB VMEM
    # even at production K/C while amortizing the ~0.35us per-grid-step cost.
    tile_n = _pick_tile_n(N, tile_cap)
    grid = (B, N // tile_n)

    # Pre-split weights in the wrapper (row order of w_fc: [g_dis, f_dis, fn, lr]).
    w_g = w_fc[0:1, :]
    w_f = w_fc[1:2, :]
    w_fn = w_fc[2:2 + cf, :]
    w_lr = w_fc[2 + cf:, :]
    wp_fn = w_pmlp[:cf, :]
    wp_lr = w_pmlp[cf:, :]

    args = [local_rep, f_neigh, feat_center, g_dis]
    in_specs = [
        pl.BlockSpec((None, tile_n, K, cr), lambda b, i: (b, i, 0, 0)),
        pl.BlockSpec((None, tile_n, K, cf), lambda b, i: (b, i, 0, 0)),
        pl.BlockSpec((None, tile_n, cf), lambda b, i: (b, i, 0)),
        pl.BlockSpec((None, tile_n, K), lambda b, i: (b, i, 0)),
    ]

    mlp_flops = 0
    cin = cr
    for (w, s, b) in mlp_stack:
        cout = w.shape[1]
        args += [w, s.reshape(1, -1), b.reshape(1, -1)]
        in_specs += [
            pl.BlockSpec((cin, cout), lambda bb, ii: (0, 0)),
            pl.BlockSpec((1, cout), lambda bb, ii: (0, 0)),
            pl.BlockSpec((1, cout), lambda bb, ii: (0, 0)),
        ]
        mlp_flops += 2 * cin * cout
        cin = cout

    args += [w_g, w_f, w_fn, w_lr, wp_fn, wp_lr,
             bn_scale.reshape(1, -1), bn_bias.reshape(1, -1)]
    in_specs += [
        pl.BlockSpec((1, c), lambda b, i: (0, 0)),
        pl.BlockSpec((1, c), lambda b, i: (0, 0)),
        pl.BlockSpec((cf, c), lambda b, i: (0, 0)),
        pl.BlockSpec((cl, c), lambda b, i: (0, 0)),
        pl.BlockSpec((cf, dout), lambda b, i: (0, 0)),
        pl.BlockSpec((cl, dout), lambda b, i: (0, 0)),
        pl.BlockSpec((1, dout), lambda b, i: (0, 0)),
        pl.BlockSpec((1, dout), lambda b, i: (0, 0)),
    ]

    flops = B * N * (K * (mlp_flops + 2 * cf * c + 2 * cl * c + 4 * c)
                     + 2 * (cf + cl) * dout)
    transcendentals = B * N * K * (c + 1)
    bytes_accessed = sum(int(np.prod(a.shape)) * 4 for a in args) + B * N * dout * 4
    cost = pl.CostEstimate(flops=int(flops),
                           transcendentals=int(transcendentals),
                           bytes_accessed=int(bytes_accessed))

    kern = functools.partial(_fused_pool_kernel, lamda=lamda, cf=cf, cl=cl,
                             n_mlp=n_mlp)
    return pl.pallas_call(
        kern,
        out_shape=jax.ShapeDtypeStruct((B, N, dout), jnp.float32),
        grid=grid,
        in_specs=in_specs,
        out_specs=pl.BlockSpec((None, tile_n, dout), lambda b, i: (b, i, 0)),
        compiler_params=pltpu.CompilerParams(
            dimension_semantics=("parallel", "parallel"),
            vmem_limit_bytes=32 * 1024 * 1024),
        cost_estimate=cost,
    )(*args)


# ---------------------------------------------------------------------------
# Plain-JAX glue: gather + polar-geometry (data-dependent gather / atan2)
# TODO(synk): the K-expanded neighbour gather still materializes in HBM via
# XLA; a further win is scalar-prefetching neigh_idx and DMA-gathering rows
# of `feature` inside the kernel (memory_space=pl.ANY).
# ---------------------------------------------------------------------------
def gather_neighbour(pc, neigh_idx):
    # pc: (B, N, D), neigh_idx: (B, N, K)  ->  (B, N, K, D)
    return jax.vmap(lambda p, idx: p[idx])(pc, neigh_idx)


def local_polar_representation(xyz, neigh_idx):
    B, N, _ = xyz.shape
    K = neigh_idx.shape[-1]
    neighbor_xyz = gather_neighbour(xyz, neigh_idx)                     # (B,N,K,3)
    xyz_tile = jnp.broadcast_to(xyz[:, :, None, :], (B, N, K, 3))
    relative_xyz = xyz_tile - neighbor_xyz
    relative_alpha = jnp.arctan2(relative_xyz[..., 1], relative_xyz[..., 0])[..., None]
    relative_xydis = jnp.sqrt(jnp.sum(relative_xyz[..., :2] ** 2, axis=-1))
    relative_beta = jnp.arctan2(relative_xyz[..., 2], relative_xydis)[..., None]
    relative_dis = jnp.sqrt(jnp.sum(relative_xyz ** 2, axis=-1, keepdims=True))
    relative_info = jnp.concatenate([relative_dis, xyz_tile, neighbor_xyz], axis=-1)  # (B,N,K,7)
    geometric_dis = jnp.exp(-relative_dis)                                            # (B,N,K,1)
    local_volume = jnp.max(relative_dis[..., 0], axis=-1) ** 3                        # (B,N)

    neighbor_mean = jnp.mean(neighbor_xyz, axis=-2)
    direction = xyz - neighbor_mean
    direction_tile = jnp.broadcast_to(direction[:, :, None, :], (B, N, K, 3))
    direction_alpha = jnp.arctan2(direction_tile[..., 1], direction_tile[..., 0])[..., None]
    direction_xydis = jnp.sqrt(jnp.sum(direction_tile[..., :2] ** 2, axis=-1))
    direction_beta = jnp.arctan2(direction_tile[..., 2], direction_xydis)[..., None]
    angle_alpha = relative_alpha - direction_alpha
    angle_beta = relative_beta - direction_beta
    angle_updated = jnp.concatenate([angle_alpha, angle_beta], axis=-1)
    local_rep = jnp.concatenate([angle_updated, relative_info], axis=-1)              # (B,N,K,9)

    global_dis = jnp.sqrt(jnp.sum(xyz ** 2, axis=-1, keepdims=True))                  # (B,N,1)
    global_volume = jnp.max(global_dis, axis=-1) ** 3                                 # (B,N)
    lg_volume_ratio = (local_volume / global_volume)[..., None]                       # (B,N,1)
    return local_rep, geometric_dis[..., 0], lg_volume_ratio   # g_dis as (B,N,K)


# ---------------------------------------------------------------------------
# Full Local_Context_Learning forward
# ---------------------------------------------------------------------------
def local_context_learning(xyz, feature, neigh_idx, params, lamda):
    local_rep, g_dis, lg_volume_ratio = local_polar_representation(xyz, neigh_idx)

    # layer 1: lr1 = mlp1(local_rep) is computed inside the fused kernel
    f_neigh = gather_neighbour(feature, neigh_idx)                       # (B,N,K,d_in)
    f_lc1 = fused_dualdis_att_pool(
        local_rep, f_neigh, feature, g_dis,
        [(params["w_mlp1"], params["s_mlp1"], params["b_mlp1"])],
        params["w_fc1"], params["w_pmlp1"], params["s_pmlp1"], params["b_pmlp1"],
        lamda)                                                           # (B,N,d_out//2)

    # layer 2: lr2 = mlp2(mlp1(local_rep)) is recomputed inside the fused kernel
    # (cheaper than writing/reading the K-expanded lr1 through HBM).
    f_neigh2 = gather_neighbour(f_lc1, neigh_idx)                        # (B,N,K,d_out//2)
    f_lc2 = fused_dualdis_att_pool(
        local_rep, f_neigh2, f_lc1, g_dis,
        [(params["w_mlp1"], params["s_mlp1"], params["b_mlp1"]),
         (params["w_mlp2"], params["s_mlp2"], params["b_mlp2"])],
        params["w_fc2"], params["w_pmlp2"], params["s_pmlp2"], params["b_pmlp2"],
        lamda)                                                           # (B,N,d_out)
    return f_lc2, lg_volume_ratio


# ---------------------------------------------------------------------------
# Deterministic synthetic parameters.
# TODO(synk): training-mode batch statistics of nn.BatchNorm2d are not
# reproduced; BN is folded as a deterministic per-channel affine (eval form).
# ---------------------------------------------------------------------------
def make_params(d_in, d_out, key):
    ks = jax.random.split(key, 6)

    def w(k, cin, cout):
        return jax.random.normal(k, (cin, cout), jnp.float32) / np.sqrt(cin)

    def bn(c):
        scale = 1.0 + 0.05 * jnp.arange(c, dtype=jnp.float32)
        bias = 0.01 * jnp.arange(c, dtype=jnp.float32) - 0.02
        return scale, bias

    dh = d_out // 2
    s1, b1 = bn(d_in)
    s2, b2 = bn(dh)
    sp1, bp1 = bn(dh)
    sp2, bp2 = bn(d_out)
    return dict(
        w_mlp1=w(ks[0], 9, d_in), s_mlp1=s1, b_mlp1=b1,
        w_fc1=w(ks[1], 2 * d_in + 2, 2 * d_in),
        w_pmlp1=w(ks[2], 2 * d_in, dh), s_pmlp1=sp1, b_pmlp1=bp1,
        w_mlp2=w(ks[3], d_in, dh), s_mlp2=s2, b_mlp2=b2,
        w_fc2=w(ks[4], d_out + 2, d_out),
        w_pmlp2=w(ks[5], d_out, d_out), s_pmlp2=sp2, b_pmlp2=bp2,
    )


# ---------------------------------------------------------------------------
# Pure-JAX reference for correctness checking
# ---------------------------------------------------------------------------
def _ref_pw(x, w, s, b):
    return jnp.maximum(x @ w * s + b, 0.0)


def _ref_pool(f_neigh, local_rep, feat_center, g_dis, w_fc, w_mlp, s, b, lamda):
    feature_set = jnp.concatenate([f_neigh, local_rep], axis=-1)
    f_dis = jnp.exp(-jnp.mean(jnp.abs(feat_center[:, :, None, :] - f_neigh), axis=-1)) * lamda
    concat = jnp.concatenate([g_dis[..., None], f_dis[..., None], feature_set], axis=-1)
    att = jnp.einsum("bnkc,cd->bnkd", concat, w_fc)
    scores = jax.nn.softmax(att, axis=2)
    f_lc = jnp.sum(feature_set * scores, axis=2)
    return jnp.maximum(jnp.einsum("bnc,cd->bnd", f_lc, w_mlp) * s + b, 0.0)


def reference_forward(xyz, feature, neigh_idx, params, lamda):
    B, N, K = neigh_idx.shape
    d_in = feature.shape[-1]
    local_rep, g_dis, lg = local_polar_representation(xyz, neigh_idx)
    lr1 = _ref_pw(local_rep.reshape(B * N * K, 9), params["w_mlp1"],
                  params["s_mlp1"], params["b_mlp1"]).reshape(B, N, K, -1)
    f_neigh = gather_neighbour(feature, neigh_idx)
    f_lc1 = _ref_pool(f_neigh, lr1, feature, g_dis, params["w_fc1"],
                      params["w_pmlp1"], params["s_pmlp1"], params["b_pmlp1"], lamda)
    lr2 = _ref_pw(lr1.reshape(B * N * K, d_in), params["w_mlp2"],
                  params["s_mlp2"], params["b_mlp2"]).reshape(B, N, K, -1)
    f_neigh2 = gather_neighbour(f_lc1, neigh_idx)
    f_lc2 = _ref_pool(f_neigh2, lr2, f_lc1, g_dis, params["w_fc2"],
                      params["w_pmlp2"], params["s_pmlp2"], params["b_pmlp2"], lamda)
    return f_lc2, lg


if __name__ == "__main__":
    B, N, K = 2, 16, 8
    d_in, d_out = 8, 16
    lamda = 0.5

    key = jax.random.PRNGKey(0)
    k_xyz, k_feat, k_idx, k_par = jax.random.split(key, 4)
    xyz = jax.random.normal(k_xyz, (B, N, 3), jnp.float32)
    feature = jax.random.normal(k_feat, (B, N, d_in), jnp.float32)
    neigh_idx = jax.random.randint(k_idx, (B, N, K), 0, N).astype(jnp.int32)
    params = make_params(d_in, d_out, k_par)

    fwd = jax.jit(lambda x, f, i: local_context_learning(x, f, i, params, lamda))
    f_lc, lg_ratio = fwd(xyz, feature, neigh_idx)
    jax.block_until_ready((f_lc, lg_ratio))

    # sanity check against a pure-JAX reference (tightened vs previous 5e-2)
    f_ref, lg_ref = reference_forward(xyz, feature, neigh_idx, params, lamda)
    np.testing.assert_allclose(np.asarray(f_lc), np.asarray(f_ref), rtol=2e-2, atol=2e-2)
    np.testing.assert_allclose(np.asarray(lg_ratio), np.asarray(lg_ref), rtol=1e-4, atol=1e-4)
    assert f_lc.shape == (B, N, d_out) and lg_ratio.shape == (B, N, 1)

    print("KERNEL_OK")
</pallas_src>

<mosaic_0001>
module attributes {stable_mosaic.version = 11 : i64} {
  func.func @_fused_pool_kernel(%arg0: i32, %arg1: i32, %arg2: memref<1x16x8x9xf32, #tpu.memory_space<vmem>>, %arg3: memref<1x16x8x8xf32, #tpu.memory_space<vmem>>, %arg4: memref<1x16x8xf32, #tpu.memory_space<vmem>>, %arg5: memref<1x16x8xf32, #tpu.memory_space<vmem>>, %arg6: memref<9x8xf32, #tpu.memory_space<vmem>>, %arg7: memref<1x8xf32, #tpu.memory_space<vmem>>, %arg8: memref<1x8xf32, #tpu.memory_space<vmem>>, %arg9: memref<1x16xf32, #tpu.memory_space<vmem>>, %arg10: memref<1x16xf32, #tpu.memory_space<vmem>>, %arg11: memref<8x16xf32, #tpu.memory_space<vmem>>, %arg12: memref<8x16xf32, #tpu.memory_space<vmem>>, %arg13: memref<8x8xf32, #tpu.memory_space<vmem>>, %arg14: memref<8x8xf32, #tpu.memory_space<vmem>>, %arg15: memref<1x8xf32, #tpu.memory_space<vmem>>, %arg16: memref<1x8xf32, #tpu.memory_space<vmem>>, %arg17: memref<1x16x8xf32, #tpu.memory_space<vmem>>) attributes {dimension_semantics = [#tpu.dimension_semantics<parallel>, #tpu.dimension_semantics<parallel>], iteration_bounds = array<i64: 2, 1>, scalar_prefetch = 0 : i64, scratch_operands = 0 : i64, tpu.core_type = #tpu.core_type<tc>, window_params = [{transform_indices = @transform_0, window_bounds = array<i64: 1, 16, 8, 9>}, {transform_indices = @transform_1, window_bounds = array<i64: 1, 16, 8, 8>}, {transform_indices = @transform_2, window_bounds = array<i64: 1, 16, 8>}, {transform_indices = @transform_3, window_bounds = array<i64: 1, 16, 8>}, {pipeline_mode = #tpu.pipeline_mode<synchronous>, transform_indices = @transform_4, window_bounds = array<i64: 9, 8>}, {pipeline_mode = #tpu.pipeline_mode<synchronous>, transform_indices = @transform_5, window_bounds = array<i64: 1, 8>}, {pipeline_mode = #tpu.pipeline_mode<synchronous>, transform_indices = @transform_6, window_bounds = array<i64: 1, 8>}, {pipeline_mode = #tpu.pipeline_mode<synchronous>, transform_indices = @transform_7, window_bounds = array<i64: 1, 16>}, {pipeline_mode = #tpu.pipeline_mode<synchronous>, transform_indices = @transform_8, window_bounds = array<i64: 1, 16>}, {pipeline_mode = #tpu.pipeline_mode<synchronous>, transform_indices = @transform_9, window_bounds = array<i64: 8, 16>}, {pipeline_mode = #tpu.pipeline_mode<synchronous>, transform_indices = @transform_10, window_bounds = array<i64: 8, 16>}, {pipeline_mode = #tpu.pipeline_mode<synchronous>, transform_indices = @transform_11, window_bounds = array<i64: 8, 8>}, {pipeline_mode = #tpu.pipeline_mode<synchronous>, transform_indices = @transform_12, window_bounds = array<i64: 8, 8>}, {pipeline_mode = #tpu.pipeline_mode<synchronous>, transform_indices = @transform_13, window_bounds = array<i64: 1, 8>}, {pipeline_mode = #tpu.pipeline_mode<synchronous>, transform_indices = @transform_14, window_bounds = array<i64: 1, 8>}, {transform_indices = @transform_15, window_bounds = array<i64: 1, 16, 8>}]} {
    %c0 = arith.constant 0 : index
    %c0_0 = arith.constant 0 : index
    %c0_1 = arith.constant 0 : index
    %c0_2 = arith.constant 0 : index
    %0 = vector.load %arg3[%c0, %c0_0, %c0_1, %c0_2] : memref<1x16x8x8xf32, #tpu.memory_space<vmem>>, vector<1x16x8x8xf32>
    %1 = vector.shape_cast %0 : vector<1x16x8x8xf32> to vector<16x8x8xf32>
    %c0_3 = arith.constant 0 : index
    %c0_4 = arith.constant 0 : index
    %c0_5 = arith.constant 0 : index
    %2 = vector.load %arg4[%c0_3, %c0_4, %c0_5] : memref<1x16x8xf32, #tpu.memory_space<vmem>>, vector<1x16x8xf32>
    %3 = vector.shape_cast %2 : vector<1x16x8xf32> to vector<16x8xf32>
    %c0_6 = arith.constant 0 : index
    %c0_7 = arith.constant 0 : index
    %c0_8 = arith.constant 0 : index
    %4 = vector.load %arg5[%c0_6, %c0_7, %c0_8] : memref<1x16x8xf32, #tpu.memory_space<vmem>>, vector<1x16x8xf32>
    %5 = vector.shape_cast %4 : vector<1x16x8xf32> to vector<16x8xf32>
    %c0_9 = arith.constant 0 : index
    %c0_10 = arith.constant 0 : index
    %c0_11 = arith.constant 0 : index
    %c0_12 = arith.constant 0 : index
    %6 = vector.load %arg2[%c0_9, %c0_10, %c0_11, %c0_12] : memref<1x16x8x9xf32, #tpu.memory_space<vmem>>, vector<1x16x8x9xf32>
    %7 = vector.shape_cast %6 : vector<1x16x8x9xf32> to vector<16x8x9xf32>
    %8 = vector.shape_cast %7 : vector<16x8x9xf32> to vector<128x9xf32>
    %c0_13 = arith.constant 0 : index
    %c0_14 = arith.constant 0 : index
    %9 = vector.load %arg6[%c0_13, %c0_14] : memref<9x8xf32, #tpu.memory_space<vmem>>, vector<9x8xf32>
    %c0_15 = arith.constant 0 : index
    %c0_16 = arith.constant 0 : index
    %10 = vector.load %arg7[%c0_15, %c0_16] : memref<1x8xf32, #tpu.memory_space<vmem>>, vector<1x8xf32>
    %c0_17 = arith.constant 0 : index
    %c0_18 = arith.constant 0 : index
    %11 = vector.load %arg8[%c0_17, %c0_18] : memref<1x8xf32, #tpu.memory_space<vmem>>, vector<1x8xf32>
    %cst = arith.constant dense<0.000000e+00> : vector<128x8xf32>
    %12 = tpu.matmul %8, %9, %cst {dimension_numbers = #tpu.dot_dimension_numbers<[1], [0], [0], [1], [0, 0, 1, 1], [], []>} : vector<128x9xf32>, vector<9x8xf32>, vector<128x8xf32> -> vector<128x8xf32>
    %13 = vector.broadcast %10 : vector<1x8xf32> to vector<128x8xf32>
    %14 = arith.mulf %12, %13 : vector<128x8xf32>
    %15 = vector.broadcast %11 : vector<1x8xf32> to vector<128x8xf32>
    %16 = arith.addf %14, %15 : vector<128x8xf32>
    %cst_19 = arith.constant 0.000000e+00 : f32
    %17 = vector.broadcast %cst_19 : f32 to vector<128x8xf32>
    %18 = arith.maximumf %16, %17 : vector<128x8xf32>
    %19 = vector.shape_cast %18 : vector<128x8xf32> to vector<16x8x8xf32>
    %20 = vector.shape_cast %3 : vector<16x8xf32> to vector<16x1x8xf32>
    %21 = vector.broadcast %20 : vector<16x1x8xf32> to vector<16x8x8xf32>
    %22 = arith.subf %21, %1 : vector<16x8x8xf32>
    %23 = math.absf %22 : vector<16x8x8xf32>
    %cst_20 = arith.constant dense<0.000000e+00> : vector<16x8xf32>
    %24 = vector.multi_reduction <add>, %23, %cst_20 [2] : vector<16x8x8xf32> to vector<16x8xf32>
    %cst_21 = arith.constant 8.000000e+00 : f32
    %25 = vector.broadcast %cst_21 : f32 to vector<16x8xf32>
    %26 = arith.divf %24, %25 : vector<16x8xf32>
    %cst_22 = arith.constant 0.000000e+00 : f32
    %27 = vector.broadcast %cst_22 : f32 to vector<16x8xf32>
    %28 = arith.subf %27, %26 : vector<16x8xf32>
    %29 = math.exp %28 : vector<16x8xf32>
    %cst_23 = arith.constant 5.000000e-01 : f32
    %30 = vector.broadcast %cst_23 : f32 to vector<16x8xf32>
    %31 = arith.mulf %29, %30 : vector<16x8xf32>
    %32 = vector.shape_cast %5 : vector<16x8xf32> to vector<16x8x1xf32>
    %c0_24 = arith.constant 0 : index
    %c0_25 = arith.constant 0 : index
    %33 = vector.load %arg9[%c0_24, %c0_25] : memref<1x16xf32, #tpu.memory_space<vmem>>, vector<1x16xf32>
    %34 = vector.shape_cast %33 : vector<1x16xf32> to vector<1x1x16xf32>
    %35 = vector.broadcast %32 : vector<16x8x1xf32> to vector<16x8x16xf32>
    %36 = vector.broadcast %34 : vector<1x1x16xf32> to vector<16x8x16xf32>
    %37 = arith.mulf %35, %36 : vector<16x8x16xf32>
    %38 = vector.shape_cast %31 : vector<16x8xf32> to vector<16x8x1xf32>
    %c0_26 = arith.constant 0 : index
    %c0_27 = arith.constant 0 : index
    %39 = vector.load %arg10[%c0_26, %c0_27] : memref<1x16xf32, #tpu.memory_space<vmem>>, vector<1x16xf32>
    %40 = vector.shape_cast %39 : vector<1x16xf32> to vector<1x1x16xf32>
    %41 = vector.broadcast %38 : vector<16x8x1xf32> to vector<16x8x16xf32>
    %42 = vector.broadcast %40 : vector<1x1x16xf32> to vector<16x8x16xf32>
    %43 = arith.mulf %41, %42 : vector<16x8x16xf32>
    %44 = arith.addf %37, %43 : vector<16x8x16xf32>
    %45 = vector.shape_cast %1 : vector<16x8x8xf32> to vector<128x8xf32>
    %c0_28 = arith.constant 0 : index
    %c0_29 = arith.constant 0 : index
    %46 = vector.load %arg11[%c0_28, %c0_29] : memref<8x16xf32, #tpu.memory_space<vmem>>, vector<8x16xf32>
    %cst_30 = arith.constant dense<0.000000e+00> : vector<128x16xf32>
    %47 = tpu.matmul %45, %46, %cst_30 {dimension_numbers = #tpu.dot_dimension_numbers<[1], [0], [0], [1], [0, 0, 1, 1], [], []>} : vector<128x8xf32>, vector<8x16xf32>, vector<128x16xf32> -> vector<128x16xf32>
    %48 = vector.shape_cast %47 : vector<128x16xf32> to vector<16x8x16xf32>
    %49 = arith.addf %44, %48 : vector<16x8x16xf32>
    %c0_31 = arith.constant 0 : index
    %c0_32 = arith.constant 0 : index
    %50 = vector.load %arg12[%c0_31, %c0_32] : memref<8x16xf32, #tpu.memory_space<vmem>>, vector<8x16xf32>
    %cst_33 = arith.constant dense<0.000000e+00> : vector<128x16xf32>
    %51 = tpu.matmul %18, %50, %cst_33 {dimension_numbers = #tpu.dot_dimension_numbers<[1], [0], [0], [1], [0, 0, 1, 1], [], []>} : vector<128x8xf32>, vector<8x16xf32>, vector<128x16xf32> -> vector<128x16xf32>
    %52 = vector.shape_cast %51 : vector<128x16xf32> to vector<16x8x16xf32>
    %53 = arith.addf %49, %52 : vector<16x8x16xf32>
    %cst_34 = arith.constant dense<0xFF800000> : vector<16x16xf32>
    %54 = vector.multi_reduction <maximumf>, %53, %cst_34 [1] : vector<16x8x16xf32> to vector<16x16xf32>
    %55 = vector.shape_cast %54 : vector<16x16xf32> to vector<16x1x16xf32>
    %56 = vector.broadcast %55 : vector<16x1x16xf32> to vector<16x8x16xf32>
    %57 = arith.subf %53, %56 : vector<16x8x16xf32>
    %58 = math.exp %57 : vector<16x8x16xf32>
    %cst_35 = arith.constant dense<0.000000e+00> : vector<16x16xf32>
    %59 = vector.multi_reduction <add>, %58, %cst_35 [1] : vector<16x8x16xf32> to vector<16x16xf32>
    %60 = vector.shape_cast %59 : vector<16x16xf32> to vector<16x1x16xf32>
    %61 = vector.broadcast %60 : vector<16x1x16xf32> to vector<16x8x16xf32>
    %62 = arith.divf %58, %61 : vector<16x8x16xf32>
    %63 = vector.extract_strided_slice %62 {offsets = [0, 0, 0], sizes = [16, 8, 8], strides = [1, 1, 1]} : vector<16x8x16xf32> to vector<16x8x8xf32>
    %64 = arith.mulf %1, %63 : vector<16x8x8xf32>
    %cst_36 = arith.constant dense<0.000000e+00> : vector<16x8xf32>
    %65 = vector.multi_reduction <add>, %64, %cst_36 [1] : vector<16x8x8xf32> to vector<16x8xf32>
    %66 = vector.extract_strided_slice %62 {offsets = [0, 0, 8], sizes = [16, 8, 8], strides = [1, 1, 1]} : vector<16x8x16xf32> to vector<16x8x8xf32>
    %67 = arith.mulf %19, %66 : vector<16x8x8xf32>
    %cst_37 = arith.constant dense<0.000000e+00> : vector<16x8xf32>
    %68 = vector.multi_reduction <add>, %67, %cst_37 [1] : vector<16x8x8xf32> to vector<16x8xf32>
    %c0_38 = arith.constant 0 : index
    %c0_39 = arith.constant 0 : index
    %69 = vector.load %arg13[%c0_38, %c0_39] : memref<8x8xf32, #tpu.memory_space<vmem>>, vector<8x8xf32>
    %cst_40 = arith.constant dense<0.000000e+00> : vector<16x8xf32>
    %70 = tpu.matmul %65, %69, %cst_40 {dimension_numbers = #tpu.dot_dimension_numbers<[1], [0], [0], [1], [0, 0, 1, 1], [], []>} : vector<16x8xf32>, vector<8x8xf32>, vector<16x8xf32> -> vector<16x8xf32>
    %c0_41 = arith.constant 0 : index
    %c0_42 = arith.constant 0 : index
    %71 = vector.load %arg14[%c0_41, %c0_42] : memref<8x8xf32, #tpu.memory_space<vmem>>, vector<8x8xf32>
    %cst_43 = arith.constant dense<0.000000e+00> : vector<16x8xf32>
    %72 = tpu.matmul %68, %71, %cst_43 {dimension_numbers = #tpu.dot_dimension_numbers<[1], [0], [0], [1], [0, 0, 1, 1], [], []>} : vector<16x8xf32>, vector<8x8xf32>, vector<16x8xf32> -> vector<16x8xf32>
    %73 = arith.addf %70, %72 : vector<16x8xf32>
    %c0_44 = arith.constant 0 : index
    %c0_45 = arith.constant 0 : index
    %74 = vector.load %arg15[%c0_44, %c0_45] : memref<1x8xf32, #tpu.memory_space<vmem>>, vector<1x8xf32>
    %75 = vector.broadcast %74 : vector<1x8xf32> to vector<16x8xf32>
    %76 = arith.mulf %73, %75 : vector<16x8xf32>
    %c0_46 = arith.constant 0 : index
    %c0_47 = arith.constant 0 : index
    %77 = vector.load %arg16[%c0_46, %c0_47] : memref<1x8xf32, #tpu.memory_space<vmem>>, vector<1x8xf32>
    %78 = vector.broadcast %77 : vector<1x8xf32> to vector<16x8xf32>
    %79 = arith.addf %76, %78 : vector<16x8xf32>
    %cst_48 = arith.constant 0.000000e+00 : f32
    %80 = vector.broadcast %cst_48 : f32 to vector<16x8xf32>
    %81 = arith.maximumf %79, %80 : vector<16x8xf32>
    %c0_49 = arith.constant 0 : index
    %c0_50 = arith.constant 0 : index
    %c0_51 = arith.constant 0 : index
    %82 = vector.load %arg17[%c0_49, %c0_50, %c0_51] : memref<1x16x8xf32, #tpu.memory_space<vmem>>, vector<1x16x8xf32>
    %83 = vector.shape_cast %82 : vector<1x16x8xf32> to vector<16x8xf32>
    %84 = vector.shape_cast %81 : vector<16x8xf32> to vector<1x16x8xf32>
    tpu.vector_store %arg17[%c0_49, %c0_50, %c0_51], %84 {strides = array<i32>} : memref<1x16x8xf32, #tpu.memory_space<vmem>>, vector<1x16x8xf32>,
    return
  }
  func.func @transform_0(%arg0: i32, %arg1: i32) -> (i32, i32, i32, i32) {
    %c0_i32 = arith.constant 0 : i32
    %c0_i32_0 = arith.constant 0 : i32
    %c0_i32_1 = arith.constant 0 : i32
    return %arg0, %arg1, %c0_i32, %c0_i32_0 : i32, i32, i32, i32
  }
  func.func @transform_1(%arg0: i32, %arg1: i32) -> (i32, i32, i32, i32) {
    %c0_i32 = arith.constant 0 : i32
    %c0_i32_0 = arith.constant 0 : i32
    %c0_i32_1 = arith.constant 0 : i32
    return %arg0, %arg1, %c0_i32, %c0_i32_0 : i32, i32, i32, i32
  }
  func.func @transform_2(%arg0: i32, %arg1: i32) -> (i32, i32, i32) {
    %c0_i32 = arith.constant 0 : i32
    %c0_i32_0 = arith.constant 0 : i32
    return %arg0, %arg1, %c0_i32 : i32, i32, i32
  }
  func.func @transform_3(%arg0: i32, %arg1: i32) -> (i32, i32, i32) {
    %c0_i32 = arith.constant 0 : i32
    %c0_i32_0 = arith.constant 0 : i32
    return %arg0, %arg1, %c0_i32 : i32, i32, i32
  }
  func.func @transform_4(%arg0: i32, %arg1: i32) -> (i32, i32) {
    %c0_i32 = arith.constant 0 : i32
    %c0_i32_0 = arith.constant 0 : i32
    %c0_i32_1 = arith.constant 0 : i32
    return %c0_i32, %c0_i32_0 : i32, i32
  }
  func.func @transform_5(%arg0: i32, %arg1: i32) -> (i32, i32) {
    %c0_i32 = arith.constant 0 : i32
    %c0_i32_0 = arith.constant 0 : i32
    %c0_i32_1 = arith.constant 0 : i32
    return %c0_i32, %c0_i32_0 : i32, i32
  }
  func.func @transform_6(%arg0: i32, %arg1: i32) -> (i32, i32) {
    %c0_i32 = arith.constant 0 : i32
    %c0_i32_0 = arith.constant 0 : i32
    %c0_i32_1 = arith.constant 0 : i32
    return %c0_i32, %c0_i32_0 : i32, i32
  }
  func.func @transform_7(%arg0: i32, %arg1: i32) -> (i32, i32) {
    %c0_i32 = arith.constant 0 : i32
    %c0_i32_0 = arith.constant 0 : i32
    %c0_i32_1 = arith.constant 0 : i32
    return %c0_i32, %c0_i32_0 : i32, i32
  }
  func.func @transform_8(%arg0: i32, %arg1: i32) -> (i32, i32) {
    %c0_i32 = arith.constant 0 : i32
    %c0_i32_0 = arith.constant 0 : i32
    %c0_i32_1 = arith.constant 0 : i32
    return %c0_i32, %c0_i32_0 : i32, i32
  }
  func.func @transform_9(%arg0: i32, %arg1: i32) -> (i32, i32) {
    %c0_i32 = arith.constant 0 : i32
    %c0_i32_0 = arith.constant 0 : i32
    %c0_i32_1 = arith.constant 0 : i32
    return %c0_i32, %c0_i32_0 : i32, i32
  }
  func.func @transform_10(%arg0: i32, %arg1: i32) -> (i32, i32) {
    %c0_i32 = arith.constant 0 : i32
    %c0_i32_0 = arith.constant 0 : i32
    %c0_i32_1 = arith.constant 0 : i32
    return %c0_i32, %c0_i32_0 : i32, i32
  }
  func.func @transform_11(%arg0: i32, %arg1: i32) -> (i32, i32) {
    %c0_i32 = arith.constant 0 : i32
    %c0_i32_0 = arith.constant 0 : i32
    %c0_i32_1 = arith.constant 0 : i32
    return %c0_i32, %c0_i32_0 : i32, i32
  }
  func.func @transform_12(%arg0: i32, %arg1: i32) -> (i32, i32) {
    %c0_i32 = arith.constant 0 : i32
    %c0_i32_0 = arith.constant 0 : i32
    %c0_i32_1 = arith.constant 0 : i32
    return %c0_i32, %c0_i32_0 : i32, i32
  }
  func.func @transform_13(%arg0: i32, %arg1: i32) -> (i32, i32) {
    %c0_i32 = arith.constant 0 : i32
    %c0_i32_0 = arith.constant 0 : i32
    %c0_i32_1 = arith.constant 0 : i32
    return %c0_i32, %c0_i32_0 : i32, i32
  }
  func.func @transform_14(%arg0: i32, %arg1: i32) -> (i32, i32) {
    %c0_i32 = arith.constant 0 : i32
    %c0_i32_0 = arith.constant 0 : i32
    %c0_i32_1 = arith.constant 0 : i32
    return %c0_i32, %c0_i32_0 : i32, i32
  }
  func.func @transform_15(%arg0: i32, %arg1: i32) -> (i32, i32, i32) {
    %c0_i32 = arith.constant 0 : i32
    %c0_i32_0 = arith.constant 0 : i32
    return %arg0, %arg1, %c0_i32 : i32, i32, i32
  }
}

module attributes {stable_mosaic.version = 11 : i64} {
  func.func @_fused_pool_kernel(%arg0: i32, %arg1: i32, %arg2: memref<1x16x8x9xf32, #tpu.memory_space<vmem>>, %arg3: memref<1x16x8x8xf32, #tpu.memory_space<vmem>>, %arg4: memref<1x16x8xf32, #tpu.memory_space<vmem>>, %arg5: memref<1x16x8xf32, #tpu.memory_space<vmem>>, %arg6: memref<9x8xf32, #tpu.memory_space<vmem>>, %arg7: memref<1x8xf32, #tpu.memory_space<vmem>>, %arg8: memref<1x8xf32, #tpu.memory_space<vmem>>, %arg9: memref<8x8xf32, #tpu.memory_space<vmem>>, %arg10: memref<1x8xf32, #tpu.memory_space<vmem>>, %arg11: memref<1x8xf32, #tpu.memory_space<vmem>>, %arg12: memref<1x16xf32, #tpu.memory_space<vmem>>, %arg13: memref<1x16xf32, #tpu.memory_space<vmem>>, %arg14: memref<8x16xf32, #tpu.memory_space<vmem>>, %arg15: memref<8x16xf32, #tpu.memory_space<vmem>>, %arg16: memref<8x16xf32, #tpu.memory_space<vmem>>, %arg17: memref<8x16xf32, #tpu.memory_space<vmem>>, %arg18: memref<1x16xf32, #tpu.memory_space<vmem>>, %arg19: memref<1x16xf32, #tpu.memory_space<vmem>>, %arg20: memref<1x16x16xf32, #tpu.memory_space<vmem>>) attributes {dimension_semantics = [#tpu.dimension_semantics<parallel>, #tpu.dimension_semantics<parallel>], iteration_bounds = array<i64: 2, 1>, scalar_prefetch = 0 : i64, scratch_operands = 0 : i64, tpu.core_type = #tpu.core_type<tc>, window_params = [{transform_indices = @transform_0, window_bounds = array<i64: 1, 16, 8, 9>}, {transform_indices = @transform_1, window_bounds = array<i64: 1, 16, 8, 8>}, {transform_indices = @transform_2, window_bounds = array<i64: 1, 16, 8>}, {transform_indices = @transform_3, window_bounds = array<i64: 1, 16, 8>}, {pipeline_mode = #tpu.pipeline_mode<synchronous>, transform_indices = @transform_4, window_bounds = array<i64: 9, 8>}, {pipeline_mode = #tpu.pipeline_mode<synchronous>, transform_indices = @transform_5, window_bounds = array<i64: 1, 8>}, {pipeline_mode = #tpu.pipeline_mode<synchronous>, transform_indices = @transform_6, window_bounds = array<i64: 1, 8>}, {pipeline_mode = #tpu.pipeline_mode<synchronous>, transform_indices = @transform_7, window_bounds = array<i64: 8, 8>}, {pipeline_mode = #tpu.pipeline_mode<synchronous>, transform_indices = @transform_8, window_bounds = array<i64: 1, 8>}, {pipeline_mode = #tpu.pipeline_mode<synchronous>, transform_indices = @transform_9, window_bounds = array<i64: 1, 8>}, {pipeline_mode = #tpu.pipeline_mode<synchronous>, transform_indices = @transform_10, window_bounds = array<i64: 1, 16>}, {pipeline_mode = #tpu.pipeline_mode<synchronous>, transform_indices = @transform_11, window_bounds = array<i64: 1, 16>}, {pipeline_mode = #tpu.pipeline_mode<synchronous>, transform_indices = @transform_12, window_bounds = array<i64: 8, 16>}, {pipeline_mode = #tpu.pipeline_mode<synchronous>, transform_indices = @transform_13, window_bounds = array<i64: 8, 16>}, {pipeline_mode = #tpu.pipeline_mode<synchronous>, transform_indices = @transform_14, window_bounds = array<i64: 8, 16>}, {pipeline_mode = #tpu.pipeline_mode<synchronous>, transform_indices = @transform_15, window_bounds = array<i64: 8, 16>}, {pipeline_mode = #tpu.pipeline_mode<synchronous>, transform_indices = @transform_16, window_bounds = array<i64: 1, 16>}, {pipeline_mode = #tpu.pipeline_mode<synchronous>, transform_indices = @transform_17, window_bounds = array<i64: 1, 16>}, {transform_indices = @transform_18, window_bounds = array<i64: 1, 16, 16>}]} {
    %c0 = arith.constant 0 : index
    %c0_0 = arith.constant 0 : index
    %c0_1 = arith.constant 0 : index
    %c0_2 = arith.constant 0 : index
    %0 = vector.load %arg3[%c0, %c0_0, %c0_1, %c0_2] : memref<1x16x8x8xf32, #tpu.memory_space<vmem>>, vector<1x16x8x8xf32>
    %1 = vector.shape_cast %0 : vector<1x16x8x8xf32> to vector<16x8x8xf32>
    %c0_3 = arith.constant 0 : index
    %c0_4 = arith.constant 0 : index
    %c0_5 = arith.constant 0 : index
    %2 = vector.load %arg4[%c0_3, %c0_4, %c0_5] : memref<1x16x8xf32, #tpu.memory_space<vmem>>, vector<1x16x8xf32>
    %3 = vector.shape_cast %2 : vector<1x16x8xf32> to vector<16x8xf32>
    %c0_6 = arith.constant 0 : index
    %c0_7 = arith.constant 0 : index
    %c0_8 = arith.constant 0 : index
    %4 = vector.load %arg5[%c0_6, %c0_7, %c0_8] : memref<1x16x8xf32, #tpu.memory_space<vmem>>, vector<1x16x8xf32>
    %5 = vector.shape_cast %4 : vector<1x16x8xf32> to vector<16x8xf32>
    %c0_9 = arith.constant 0 : index
    %c0_10 = arith.constant 0 : index
    %c0_11 = arith.constant 0 : index
    %c0_12 = arith.constant 0 : index
    %6 = vector.load %arg2[%c0_9, %c0_10, %c0_11, %c0_12] : memref<1x16x8x9xf32, #tpu.memory_space<vmem>>, vector<1x16x8x9xf32>
    %7 = vector.shape_cast %6 : vector<1x16x8x9xf32> to vector<16x8x9xf32>
    %8 = vector.shape_cast %7 : vector<16x8x9xf32> to vector<128x9xf32>
    %c0_13 = arith.constant 0 : index
    %c0_14 = arith.constant 0 : index
    %9 = vector.load %arg6[%c0_13, %c0_14] : memref<9x8xf32, #tpu.memory_space<vmem>>, vector<9x8xf32>
    %c0_15 = arith.constant 0 : index
    %c0_16 = arith.constant 0 : index
    %10 = vector.load %arg7[%c0_15, %c0_16] : memref<1x8xf32, #tpu.memory_space<vmem>>, vector<1x8xf32>
    %c0_17 = arith.constant 0 : index
    %c0_18 = arith.constant 0 : index
    %11 = vector.load %arg8[%c0_17, %c0_18] : memref<1x8xf32, #tpu.memory_space<vmem>>, vector<1x8xf32>
    %cst = arith.constant dense<0.000000e+00> : vector<128x8xf32>
    %12 = tpu.matmul %8, %9, %cst {dimension_numbers = #tpu.dot_dimension_numbers<[1], [0], [0], [1], [0, 0, 1, 1], [], []>} : vector<128x9xf32>, vector<9x8xf32>, vector<128x8xf32> -> vector<128x8xf32>
    %13 = vector.broadcast %10 : vector<1x8xf32> to vector<128x8xf32>
    %14 = arith.mulf %12, %13 : vector<128x8xf32>
    %15 = vector.broadcast %11 : vector<1x8xf32> to vector<128x8xf32>
    %16 = arith.addf %14, %15 : vector<128x8xf32>
    %cst_19 = arith.constant 0.000000e+00 : f32
    %17 = vector.broadcast %cst_19 : f32 to vector<128x8xf32>
    %18 = arith.maximumf %16, %17 : vector<128x8xf32>
    %c0_20 = arith.constant 0 : index
    %c0_21 = arith.constant 0 : index
    %19 = vector.load %arg9[%c0_20, %c0_21] : memref<8x8xf32, #tpu.memory_space<vmem>>, vector<8x8xf32>
    %c0_22 = arith.constant 0 : index
    %c0_23 = arith.constant 0 : index
    %20 = vector.load %arg10[%c0_22, %c0_23] : memref<1x8xf32, #tpu.memory_space<vmem>>, vector<1x8xf32>
    %c0_24 = arith.constant 0 : index
    %c0_25 = arith.constant 0 : index
    %21 = vector.load %arg11[%c0_24, %c0_25] : memref<1x8xf32, #tpu.memory_space<vmem>>, vector<1x8xf32>
    %cst_26 = arith.constant dense<0.000000e+00> : vector<128x8xf32>
    %22 = tpu.matmul %18, %19, %cst_26 {dimension_numbers = #tpu.dot_dimension_numbers<[1], [0], [0], [1], [0, 0, 1, 1], [], []>} : vector<128x8xf32>, vector<8x8xf32>, vector<128x8xf32> -> vector<128x8xf32>
    %23 = vector.broadcast %20 : vector<1x8xf32> to vector<128x8xf32>
    %24 = arith.mulf %22, %23 : vector<128x8xf32>
    %25 = vector.broadcast %21 : vector<1x8xf32> to vector<128x8xf32>
    %26 = arith.addf %24, %25 : vector<128x8xf32>
    %cst_27 = arith.constant 0.000000e+00 : f32
    %27 = vector.broadcast %cst_27 : f32 to vector<128x8xf32>
    %28 = arith.maximumf %26, %27 : vector<128x8xf32>
    %29 = vector.shape_cast %28 : vector<128x8xf32> to vector<16x8x8xf32>
    %30 = vector.shape_cast %3 : vector<16x8xf32> to vector<16x1x8xf32>
    %31 = vector.broadcast %30 : vector<16x1x8xf32> to vector<16x8x8xf32>
    %32 = arith.subf %31, %1 : vector<16x8x8xf32>
    %33 = math.absf %32 : vector<16x8x8xf32>
    %cst_28 = arith.constant dense<0.000000e+00> : vector<16x8xf32>
    %34 = vector.multi_reduction <add>, %33, %cst_28 [2] : vector<16x8x8xf32> to vector<16x8xf32>
    %cst_29 = arith.constant 8.000000e+00 : f32
    %35 = vector.broadcast %cst_29 : f32 to vector<16x8xf32>
    %36 = arith.divf %34, %35 : vector<16x8xf32>
    %cst_30 = arith.constant 0.000000e+00 : f32
    %37 = vector.broadcast %cst_30 : f32 to vector<16x8xf32>
    %38 = arith.subf %37, %36 : vector<16x8xf32>
    %39 = math.exp %38 : vector<16x8xf32>
    %cst_31 = arith.constant 5.000000e-01 : f32
    %40 = vector.broadcast %cst_31 : f32 to vector<16x8xf32>
    %41 = arith.mulf %39, %40 : vector<16x8xf32>
    %42 = vector.shape_cast %5 : vector<16x8xf32> to vector<16x8x1xf32>
    %c0_32 = arith.constant 0 : index
    %c0_33 = arith.constant 0 : index
    %43 = vector.load %arg12[%c0_32, %c0_33] : memref<1x16xf32, #tpu.memory_space<vmem>>, vector<1x16xf32>
    %44 = vector.shape_cast %43 : vector<1x16xf32> to vector<1x1x16xf32>
    %45 = vector.broadcast %42 : vector<16x8x1xf32> to vector<16x8x16xf32>
    %46 = vector.broadcast %44 : vector<1x1x16xf32> to vector<16x8x16xf32>
    %47 = arith.mulf %45, %46 : vector<16x8x16xf32>
    %48 = vector.shape_cast %41 : vector<16x8xf32> to vector<16x8x1xf32>
    %c0_34 = arith.constant 0 : index
    %c0_35 = arith.constant 0 : index
    %49 = vector.load %arg13[%c0_34, %c0_35] : memref<1x16xf32, #tpu.memory_space<vmem>>, vector<1x16xf32>
    %50 = vector.shape_cast %49 : vector<1x16xf32> to vector<1x1x16xf32>
    %51 = vector.broadcast %48 : vector<16x8x1xf32> to vector<16x8x16xf32>
    %52 = vector.broadcast %50 : vector<1x1x16xf32> to vector<16x8x16xf32>
    %53 = arith.mulf %51, %52 : vector<16x8x16xf32>
    %54 = arith.addf %47, %53 : vector<16x8x16xf32>
    %55 = vector.shape_cast %1 : vector<16x8x8xf32> to vector<128x8xf32>
    %c0_36 = arith.constant 0 : index
    %c0_37 = arith.constant 0 : index
    %56 = vector.load %arg14[%c0_36, %c0_37] : memref<8x16xf32, #tpu.memory_space<vmem>>, vector<8x16xf32>
    %cst_38 = arith.constant dense<0.000000e+00> : vector<128x16xf32>
    %57 = tpu.matmul %55, %56, %cst_38 {dimension_numbers = #tpu.dot_dimension_numbers<[1], [0], [0], [1], [0, 0, 1, 1], [], []>} : vector<128x8xf32>, vector<8x16xf32>, vector<128x16xf32> -> vector<128x16xf32>
    %58 = vector.shape_cast %57 : vector<128x16xf32> to vector<16x8x16xf32>
    %59 = arith.addf %54, %58 : vector<16x8x16xf32>
    %c0_39 = arith.constant 0 : index
    %c0_40 = arith.constant 0 : index
    %60 = vector.load %arg15[%c0_39, %c0_40] : memref<8x16xf32, #tpu.memory_space<vmem>>, vector<8x16xf32>
    %cst_41 = arith.constant dense<0.000000e+00> : vector<128x16xf32>
    %61 = tpu.matmul %28, %60, %cst_41 {dimension_numbers = #tpu.dot_dimension_numbers<[1], [0], [0], [1], [0, 0, 1, 1], [], []>} : vector<128x8xf32>, vector<8x16xf32>, vector<128x16xf32> -> vector<128x16xf32>
    %62 = vector.shape_cast %61 : vector<128x16xf32> to vector<16x8x16xf32>
    %63 = arith.addf %59, %62 : vector<16x8x16xf32>
    %cst_42 = arith.constant dense<0xFF800000> : vector<16x16xf32>
    %64 = vector.multi_reduction <maximumf>, %63, %cst_42 [1] : vector<16x8x16xf32> to vector<16x16xf32>
    %65 = vector.shape_cast %64 : vector<16x16xf32> to vector<16x1x16xf32>
    %66 = vector.broadcast %65 : vector<16x1x16xf32> to vector<16x8x16xf32>
    %67 = arith.subf %63, %66 : vector<16x8x16xf32>
    %68 = math.exp %67 : vector<16x8x16xf32>
    %cst_43 = arith.constant dense<0.000000e+00> : vector<16x16xf32>
    %69 = vector.multi_reduction <add>, %68, %cst_43 [1] : vector<16x8x16xf32> to vector<16x16xf32>
    %70 = vector.shape_cast %69 : vector<16x16xf32> to vector<16x1x16xf32>
    %71 = vector.broadcast %70 : vector<16x1x16xf32> to vector<16x8x16xf32>
    %72 = arith.divf %68, %71 : vector<16x8x16xf32>
    %73 = vector.extract_strided_slice %72 {offsets = [0, 0, 0], sizes = [16, 8, 8], strides = [1, 1, 1]} : vector<16x8x16xf32> to vector<16x8x8xf32>
    %74 = arith.mulf %1, %73 : vector<16x8x8xf32>
    %cst_44 = arith.constant dense<0.000000e+00> : vector<16x8xf32>
    %75 = vector.multi_reduction <add>, %74, %cst_44 [1] : vector<16x8x8xf32> to vector<16x8xf32>
    %76 = vector.extract_strided_slice %72 {offsets = [0, 0, 8], sizes = [16, 8, 8], strides = [1, 1, 1]} : vector<16x8x16xf32> to vector<16x8x8xf32>
    %77 = arith.mulf %29, %76 : vector<16x8x8xf32>
    %cst_45 = arith.constant dense<0.000000e+00> : vector<16x8xf32>
    %78 = vector.multi_reduction <add>, %77, %cst_45 [1] : vector<16x8x8xf32> to vector<16x8xf32>
    %c0_46 = arith.constant 0 : index
    %c0_47 = arith.constant 0 : index
    %79 = vector.load %arg16[%c0_46, %c0_47] : memref<8x16xf32, #tpu.memory_space<vmem>>, vector<8x16xf32>
    %cst_48 = arith.constant dense<0.000000e+00> : vector<16x16xf32>
    %80 = tpu.matmul %75, %79, %cst_48 {dimension_numbers = #tpu.dot_dimension_numbers<[1], [0], [0], [1], [0, 0, 1, 1], [], []>} : vector<16x8xf32>, vector<8x16xf32>, vector<16x16xf32> -> vector<16x16xf32>
    %c0_49 = arith.constant 0 : index
    %c0_50 = arith.constant 0 : index
    %81 = vector.load %arg17[%c0_49, %c0_50] : memref<8x16xf32, #tpu.memory_space<vmem>>, vector<8x16xf32>
    %cst_51 = arith.constant dense<0.000000e+00> : vector<16x16xf32>
    %82 = tpu.matmul %78, %81, %cst_51 {dimension_numbers = #tpu.dot_dimension_numbers<[1], [0], [0], [1], [0, 0, 1, 1], [], []>} : vector<16x8xf32>, vector<8x16xf32>, vector<16x16xf32> -> vector<16x16xf32>
    %83 = arith.addf %80, %82 : vector<16x16xf32>
    %c0_52 = arith.constant 0 : index
    %c0_53 = arith.constant 0 : index
    %84 = vector.load %arg18[%c0_52, %c0_53] : memref<1x16xf32, #tpu.memory_space<vmem>>, vector<1x16xf32>
    %85 = vector.broadcast %84 : vector<1x16xf32> to vector<16x16xf32>
    %86 = arith.mulf %83, %85 : vector<16x16xf32>
    %c0_54 = arith.constant 0 : index
    %c0_55 = arith.constant 0 : index
    %87 = vector.load %arg19[%c0_54, %c0_55] : memref<1x16xf32, #tpu.memory_space<vmem>>, vector<1x16xf32>
    %88 = vector.broadcast %87 : vector<1x16xf32> to vector<16x16xf32>
    %89 = arith.addf %86, %88 : vector<16x16xf32>
    %cst_56 = arith.constant 0.000000e+00 : f32
    %90 = vector.broadcast %cst_56 : f32 to vector<16x16xf32>
    %91 = arith.maximumf %89, %90 : vector<16x16xf32>
    %c0_57 = arith.constant 0 : index
    %c0_58 = arith.constant 0 : index
    %c0_59 = arith.constant 0 : index
    %92 = vector.load %arg20[%c0_57, %c0_58, %c0_59] : memref<1x16x16xf32, #tpu.memory_space<vmem>>, vector<1x16x16xf32>
    %93 = vector.shape_cast %92 : vector<1x16x16xf32> to vector<16x16xf32>
    %94 = vector.shape_cast %91 : vector<16x16xf32> to vector<1x16x16xf32>
    tpu.vector_store %arg20[%c0_57, %c0_58, %c0_59], %94 {strides = array<i32>} : memref<1x16x16xf32, #tpu.memory_space<vmem>>, vector<1x16x16xf32>,
    return
  }
  func.func @transform_0(%arg0: i32, %arg1: i32) -> (i32, i32, i32, i32) {
    %c0_i32 = arith.constant 0 : i32
    %c0_i32_0 = arith.constant 0 : i32
    %c0_i32_1 = arith.constant 0 : i32
    return %arg0, %arg1, %c0_i32, %c0_i32_0 : i32, i32, i32, i32
  }
  func.func @transform_1(%arg0: i32, %arg1: i32) -> (i32, i32, i32, i32) {
    %c0_i32 = arith.constant 0 : i32
    %c0_i32_0 = arith.constant 0 : i32
    %c0_i32_1 = arith.constant 0 : i32
    return %arg0, %arg1, %c0_i32, %c0_i32_0 : i32, i32, i32, i32
  }
  func.func @transform_2(%arg0: i32, %arg1: i32) -> (i32, i32, i32) {
    %c0_i32 = arith.constant 0 : i32
    %c0_i32_0 = arith.constant 0 : i32
    return %arg0, %arg1, %c0_i32 : i32, i32, i32
  }
  func.func @transform_3(%arg0: i32, %arg1: i32) -> (i32, i32, i32) {
    %c0_i32 = arith.constant 0 : i32
    %c0_i32_0 = arith.constant 0 : i32
    return %arg0, %arg1, %c0_i32 : i32, i32, i32
  }
  func.func @transform_4(%arg0: i32, %arg1: i32) -> (i32, i32) {
    %c0_i32 = arith.constant 0 : i32
    %c0_i32_0 = arith.constant 0 : i32
    %c0_i32_1 = arith.constant 0 : i32
    return %c0_i32, %c0_i32_0 : i32, i32
  }
  func.func @transform_5(%arg0: i32, %arg1: i32) -> (i32, i32) {
    %c0_i32 = arith.constant 0 : i32
    %c0_i32_0 = arith.constant 0 : i32
    %c0_i32_1 = arith.constant 0 : i32
    return %c0_i32, %c0_i32_0 : i32, i32
  }
  func.func @transform_6(%arg0: i32, %arg1: i32) -> (i32, i32) {
    %c0_i32 = arith.constant 0 : i32
    %c0_i32_0 = arith.constant 0 : i32
    %c0_i32_1 = arith.constant 0 : i32
    return %c0_i32, %c0_i32_0 : i32, i32
  }
  func.func @transform_7(%arg0: i32, %arg1: i32) -> (i32, i32) {
    %c0_i32 = arith.constant 0 : i32
    %c0_i32_0 = arith.constant 0 : i32
    %c0_i32_1 = arith.constant 0 : i32
    return %c0_i32, %c0_i32_0 : i32, i32
  }
  func.func @transform_8(%arg0: i32, %arg1: i32) -> (i32, i32) {
    %c0_i32 = arith.constant 0 : i32
    %c0_i32_0 = arith.constant 0 : i32
    %c0_i32_1 = arith.constant 0 : i32
    return %c0_i32, %c0_i32_0 : i32, i32
  }
  func.func @transform_9(%arg0: i32, %arg1: i32) -> (i32, i32) {
    %c0_i32 = arith.constant 0 : i32
    %c0_i32_0 = arith.constant 0 : i32
    %c0_i32_1 = arith.constant 0 : i32
    return %c0_i32, %c0_i32_0 : i32, i32
  }
  func.func @transform_10(%arg0: i32, %arg1: i32) -> (i32, i32) {
    %c0_i32 = arith.constant 0 : i32
    %c0_i32_0 = arith.constant 0 : i32
    %c0_i32_1 = arith.constant 0 : i32
    return %c0_i32, %c0_i32_0 : i32, i32
  }
  func.func @transform_11(%arg0: i32, %arg1: i32) -> (i32, i32) {
    %c0_i32 = arith.constant 0 : i32
    %c0_i32_0 = arith.constant 0 : i32
    %c0_i32_1 = arith.constant 0 : i32
    return %c0_i32, %c0_i32_0 : i32, i32
  }
  func.func @transform_12(%arg0: i32, %arg1: i32) -> (i32, i32) {
    %c0_i32 = arith.constant 0 : i32
    %c0_i32_0 = arith.constant 0 : i32
    %c0_i32_1 = arith.constant 0 : i32
    return %c0_i32, %c0_i32_0 : i32, i32
  }
  func.func @transform_13(%arg0: i32, %arg1: i32) -> (i32, i32) {
    %c0_i32 = arith.constant 0 : i32
    %c0_i32_0 = arith.constant 0 : i32
    %c0_i32_1 = arith.constant 0 : i32
    return %c0_i32, %c0_i32_0 : i32, i32
  }
  func.func @transform_14(%arg0: i32, %arg1: i32) -> (i32, i32) {
    %c0_i32 = arith.constant 0 : i32
    %c0_i32_0 = arith.constant 0 : i32
    %c0_i32_1 = arith.constant 0 : i32
    return %c0_i32, %c0_i32_0 : i32, i32
  }
  func.func @transform_15(%arg0: i32, %arg1: i32) -> (i32, i32) {
    %c0_i32 = arith.constant 0 : i32
    %c0_i32_0 = arith.constant 0 : i32
    %c0_i32_1 = arith.constant 0 : i32
    return %c0_i32, %c0_i32_0 : i32, i32
  }
  func.func @transform_16(%arg0: i32, %arg1: i32) -> (i32, i32) {
    %c0_i32 = arith.constant 0 : i32
    %c0_i32_0 = arith.constant 0 : i32
    %c0_i32_1 = arith.constant 0 : i32
    return %c0_i32, %c0_i32_0 : i32, i32
  }
  func.func @transform_17(%arg0: i32, %arg1: i32) -> (i32, i32) {
    %c0_i32 = arith.constant 0 : i32
    %c0_i32_0 = arith.constant 0 : i32
    %c0_i32_1 = arith.constant 0 : i32
    return %c0_i32, %c0_i32_0 : i32, i32
  }
  func.func @transform_18(%arg0: i32, %arg1: i32) -> (i32, i32, i32) {
    %c0_i32 = arith.constant 0 : i32
    %c0_i32_0 = arith.constant 0 : i32
    return %arg0, %arg1, %c0_i32 : i32, i32, i32
  }
}

</mosaic_0001>

<llo_original>
// kernel: _lambda_.2
$region0: #{_lambda_.2}
  #allocation0 [shape = 'u32[]', space=smem, size = 0x4, offset = 0x4, fixed_abs, tag = 'smem constant byte address 0x4 - core index']
  #allocation1 [shape = 'u32[144,128]{1,0:T(1,128)}', space=vmem, size = 0x12000, scoped, tag = 'internal scratch']
  %s0 = inlined_call_operand.vmem [shape: f32[2,16,8,9], index: 0, kind: input, shape index: {}]
  %s1 = inlined_call_operand.vmem [shape: f32[2,16,8,8], index: 1, kind: input, shape index: {}]
  %s2 = inlined_call_operand.vmem [shape: f32[2,16,8], index: 2, kind: input, shape index: {}]
  %s3 = inlined_call_operand.vmem [shape: f32[2,16,8], index: 3, kind: input, shape index: {}]
  %s4 = inlined_call_operand.vmem [shape: f32[9,8], index: 4, kind: input, shape index: {}]
  %s5 = inlined_call_operand.vmem [shape: f32[1,8], index: 5, kind: input, shape index: {}, may-alias: {5,13}]
  %s6 = inlined_call_operand.vmem [shape: f32[1,8], index: 6, kind: input, shape index: {}, may-alias: {6,14}]
  %s7 = inlined_call_operand.vmem [shape: f32[1,16], index: 7, kind: input, shape index: {}]
  %s8 = inlined_call_operand.vmem [shape: f32[1,16], index: 8, kind: input, shape index: {}]
  %s9 = inlined_call_operand.vmem [shape: f32[8,16], index: 9, kind: input, shape index: {}]
  %s10 = inlined_call_operand.vmem [shape: f32[8,16], index: 10, kind: input, shape index: {}]
  %s11 = inlined_call_operand.vmem [shape: f32[8,8], index: 11, kind: input, shape index: {}]
  %s12 = inlined_call_operand.vmem [shape: f32[8,8], index: 12, kind: input, shape index: {}]
  %s13 = inlined_call_operand.vmem [shape: f32[1,8], index: 13, kind: input, shape index: {}, may-alias: {5,13}]
  %s14 = inlined_call_operand.vmem [shape: f32[1,8], index: 14, kind: input, shape index: {}, may-alias: {6,14}]
  %s15 = inlined_call_operand.vmem [shape: f32[2,16,8], index: 15, kind: output, shape index: {}]
  %s16 = sld [smem:[#allocation0]]
  $region93: #{_lambda_.2} parent=0
    _
  %s18 = ssub.s32 1, %s16
  %s19 = scalar_select 0, %s18, %s16
  loop: start=0, step=1, limit=4
  $region2: #{_lambda_.2} parent=0 // loop_pre_header
    _
  $region3: #{_lambda_.2} parent=0 // loop_header
    %s21 = sphi 0, %s25
    %p22 = scmp.ge.s32.totalorder %s21, 4
    %s28 = sphi 0, %s40
    %s29 = sphi 0, %s36
    %s30 = sphi 0, %s28
    %s31 = sphi 0, %s29
    %s32 = sphi 0, %s30
    %s33 = sphi 0, %s31
    %s45 = sphi 0, %s47
    %s48 = sphi 0, %s45
    %s49 = sphi 0, %s48
    %s65 = sphi 0, %s49
    %s73 = sphi 0, %s75
    %s76 = sphi 0, %s73
    %s77 = sphi 0, %s76
    %s93 = sphi 0, %s77
    %s101 = sphi 0, %s103
    %s104 = sphi 0, %s101
    %s105 = sphi 0, %s104
    %s121 = sphi 0, %s105
    %s129 = sphi 0, %s131
    %s132 = sphi 0, %s129
    %s133 = sphi 0, %s132
    %s149 = sphi 0, %s133
    %s153 = sphi 0, %s153
    %s155 = sphi 0, %s153
    %s156 = sphi 0, %s155
    %s170 = sphi 0, %s156
    %s174 = sphi 0, %s174
    %s176 = sphi 0, %s174
    %s177 = sphi 0, %s176
    %s191 = sphi 0, %s177
    %s195 = sphi 0, %s195
    %s197 = sphi 0, %s195
    %s198 = sphi 0, %s197
    %s212 = sphi 0, %s198
    %s216 = sphi 0, %s216
    %s218 = sphi 0, %s216
    %s219 = sphi 0, %s218
    %s233 = sphi 0, %s219
    %s237 = sphi 0, %s237
    %s239 = sphi 0, %s237
    %s240 = sphi 0, %s239
    %s254 = sphi 0, %s240
    %s258 = sphi 0, %s258
    %s260 = sphi 0, %s258
    %s261 = sphi 0, %s260
    %s275 = sphi 0, %s261
    %s279 = sphi 0, %s279
    %s281 = sphi 0, %s279
    %s282 = sphi 0, %s281
    %s296 = sphi 0, %s282
    %s300 = sphi 0, %s300
    %s302 = sphi 0, %s300
    %s303 = sphi 0, %s302
    %s317 = sphi 0, %s303
    %s321 = sphi 0, %s321
    %s323 = sphi 0, %s321
    %s324 = sphi 0, %s323
    %s338 = sphi 0, %s324
    %s342 = sphi 0, %s342
    %s344 = sphi 0, %s342
    %s345 = sphi 0, %s344
    %s359 = sphi 0, %s345
    %s363 = sphi 0, %s363
    %s365 = sphi 0, %s363
    %s366 = sphi 0, %s365
    %s380 = sphi 0, %s366
    %s388 = sphi 0, %s390
    %s391 = sphi 0, %s388
    %s392 = sphi 0, %s391
    %s408 = sphi 0, %s392
  $region4: #{_lambda_.2} parent=0 // loop_header_branch
    %24 = sbr.rel (%p22) target = $region8
  $region5: #{_lambda_.2} parent=0 // loop_body
    %s26 = ssub.s32 %s21, 1
    %s27 = ssub.s32 %s21, 2
    %s34 = sadd.s32 1, %s29
    %p35 = scmp.ge.s32.totalorder %s34, 1
    %s36 = scalar_select %p35, 0, %s34
    %s37 = sadd.s32 1, %s28
    %s38 = scalar_select %p35, %s37, %s28
    %p39 = scmp.ge.s32.totalorder %s38, 2
    %s40 = scalar_select %p39, 0, %s38
    %s41 = ssub.s32 %s28, %s40
    %s42 = ssub.s32 %s29, %s36
    %s43 = sor.u32 %s41, %s42
    %p44 = scmp.eq.s32.totalorder %s43, 0
    %s46 = sadd.s32 %s45, 1
    %s47 = scalar_select %p44, %s45, %s46
    %p50 = pneg %p44
    %p51 = scmp.eq.s32.totalorder %s21, 1
    %p52 = por %p50, %p51
    %p53 = scmp.ne.s32.totalorder %s45, %s48
    %p54 = scmp.eq.s32.totalorder %s21, 0
    %p55 = por %p53, %p54
    %p56 = scmp.ne.s32.totalorder %s45, %s48
    %p57 = scmp.eq.s32.totalorder %s26, 1
    %p58 = por %p56, %p57
    %p59 = scmp.ne.s32.totalorder %s48, %s49
    %p60 = scmp.eq.s32.totalorder %s26, 0
    %p61 = por %p59, %p60
    %p62 = scmp.ne.s32.totalorder %s48, %s49
    %p63 = scmp.eq.s32.totalorder %s27, 1
    %p64 = por %p62, %p63
    %p66 = scmp.ne.s32.totalorder %s49, %s65
    %p67 = scmp.eq.s32.totalorder %s27, 0
    %p68 = por %p66, %p67
    %s69 = ssub.s32 %s28, %s40
    %s70 = ssub.s32 %s29, %s36
    %s71 = sor.u32 %s69, %s70
    %p72 = scmp.eq.s32.totalorder %s71, 0
    %s74 = sadd.s32 %s73, 1
    %s75 = scalar_select %p72, %s73, %s74
    %p78 = pneg %p72
    %p79 = scmp.eq.s32.totalorder %s21, 1
    %p80 = por %p78, %p79
    %p81 = scmp.ne.s32.totalorder %s73, %s76
    %p82 = scmp.eq.s32.totalorder %s21, 0
    %p83 = por %p81, %p82
    %p84 = scmp.ne.s32.totalorder %s73, %s76
    %p85 = scmp.eq.s32.totalorder %s26, 1
    %p86 = por %p84, %p85
    %p87 = scmp.ne.s32.totalorder %s76, %s77
    %p88 = scmp.eq.s32.totalorder %s26, 0
    %p89 = por %p87, %p88
    %p90 = scmp.ne.s32.totalorder %s76, %s77
    %p91 = scmp.eq.s32.totalorder %s27, 1
    %p92 = por %p90, %p91
    %p94 = scmp.ne.s32.totalorder %s77, %s93
    %p95 = scmp.eq.s32.totalorder %s27, 0
    %p96 = por %p94, %p95
    %s97 = ssub.s32 %s28, %s40
    %s98 = ssub.s32 %s29, %s36
    %s99 = sor.u32 %s97, %s98
    %p100 = scmp.eq.s32.totalorder %s99, 0
    %s102 = sadd.s32 %s101, 1
    %s103 = scalar_select %p100, %s101, %s102
    %p106 = pneg %p100
    %p107 = scmp.eq.s32.totalorder %s21, 1
    %p108 = por %p106, %p107
    %p109 = scmp.ne.s32.totalorder %s101, %s104
    %p110 = scmp.eq.s32.totalorder %s21, 0
    %p111 = por %p109, %p110
    %p112 = scmp.ne.s32.totalorder %s101, %s104
    %p113 = scmp.eq.s32.totalorder %s26, 1
    %p114 = por %p112, %p113
    %p115 = scmp.ne.s32.totalorder %s104, %s105
    %p116 = scmp.eq.s32.totalorder %s26, 0
    %p117 = por %p115, %p116
    %p118 = scmp.ne.s32.totalorder %s104, %s105
    %p119 = scmp.eq.s32.totalorder %s27, 1
    %p120 = por %p118, %p119
    %p122 = scmp.ne.s32.totalorder %s105, %s121
    %p123 = scmp.eq.s32.totalorder %s27, 0
    %p124 = por %p122, %p123
    %s125 = ssub.s32 %s28, %s40
    %s126 = ssub.s32 %s29, %s36
    %s127 = sor.u32 %s125, %s126
    %p128 = scmp.eq.s32.totalorder %s127, 0
    %s130 = sadd.s32 %s129, 1
    %s131 = scalar_select %p128, %s129, %s130
    %p134 = pneg %p128
    %p135 = scmp.eq.s32.totalorder %s21, 1
    %p136 = por %p134, %p135
    %p137 = scmp.ne.s32.totalorder %s129, %s132
    %p138 = scmp.eq.s32.totalorder %s21, 0
    %p139 = por %p137, %p138
    %p140 = scmp.ne.s32.totalorder %s129, %s132
    %p141 = scmp.eq.s32.totalorder %s26, 1
    %p142 = por %p140, %p141
    %p143 = scmp.ne.s32.totalorder %s132, %s133
    %p144 = scmp.eq.s32.totalorder %s26, 0
    %p145 = por %p143, %p144
    %p146 = scmp.ne.s32.totalorder %s132, %s133
    %p147 = scmp.eq.s32.totalorder %s27, 1
    %p148 = por %p146, %p147
    %p150 = scmp.ne.s32.totalorder %s133, %s149
    %p151 = scmp.eq.s32.totalorder %s27, 0
    %p152 = por %p150, %p151
    %s154 = sadd.s32 %s153, 1
    %p157 = scmp.eq.s32.totalorder %s21, 1
    %p158 = scmp.ne.s32.totalorder %s153, %s155
    %p159 = scmp.eq.s32.totalorder %s21, 0
    %p160 = por %p158, %p159
    %p161 = scmp.ne.s32.totalorder %s153, %s155
    %p162 = scmp.eq.s32.totalorder %s26, 1
    %p163 = por %p161, %p162
    %p164 = scmp.ne.s32.totalorder %s155, %s156
    %p165 = scmp.eq.s32.totalorder %s26, 0
    %p166 = por %p164, %p165
    %p167 = scmp.ne.s32.totalorder %s155, %s156
    %p168 = scmp.eq.s32.totalorder %s27, 1
    %p169 = por %p167, %p168
    %p171 = scmp.ne.s32.totalorder %s156, %s170
    %p172 = scmp.eq.s32.totalorder %s27, 0
    %p173 = por %p171, %p172
    %s175 = sadd.s32 %s174, 1
    %p178 = scmp.eq.s32.totalorder %s21, 1
    %p179 = scmp.ne.s32.totalorder %s174, %s176
    %p180 = scmp.eq.s32.totalorder %s21, 0
    %p181 = por %p179, %p180
    %p182 = scmp.ne.s32.totalorder %s174, %s176
    %p183 = scmp.eq.s32.totalorder %s26, 1
    %p184 = por %p182, %p183
    %p185 = scmp.ne.s32.totalorder %s176, %s177
    %p186 = scmp.eq.s32.totalorder %s26, 0
    %p187 = por %p185, %p186
    %p188 = scmp.ne.s32.totalorder %s176, %s177
    %p189 = scmp.eq.s32.totalorder %s27, 1
    %p190 = por %p188, %p189
    %p192 = scmp.ne.s32.totalorder %s177, %s191
    %p193 = scmp.eq.s32.totalorder %s27, 0
    %p194 = por %p192, %p193
    %s196 = sadd.s32 %s195, 1
    %p199 = scmp.eq.s32.totalorder %s21, 1
    %p200 = scmp.ne.s32.totalorder %s195, %s197
    %p201 = scmp.eq.s32.totalorder %s21, 0
    %p202 = por %p200, %p201
    %p203 = scmp.ne.s32.totalorder %s195, %s197
    %p204 = scmp.eq.s32.totalorder %s26, 1
    %p205 = por %p203, %p204
    %p206 = scmp.ne.s32.totalorder %s197, %s198
    %p207 = scmp.eq.s32.totalorder %s26, 0
    %p208 = por %p206, %p207
    %p209 = scmp.ne.s32.totalorder %s197, %s198
    %p210 = scmp.eq.s32.totalorder %s27, 1
    %p211 = por %p209, %p210
    %p213 = scmp.ne.s32.totalorder %s198, %s212
    %p214 = scmp.eq.s32.totalorder %s27, 0
    %p215 = por %p213, %p214
    %s217 = sadd.s32 %s216, 1
    %p220 = scmp.eq.s32.totalorder %s21, 1
    %p221 = scmp.ne.s32.totalorder %s216, %s218
    %p222 = scmp.eq.s32.totalorder %s21, 0
    %p223 = por %p221, %p222
    %p224 = scmp.ne.s32.totalorder %s216, %s218
    %p225 = scmp.eq.s32.totalorder %s26, 1
    %p226 = por %p224, %p225
    %p227 = scmp.ne.s32.totalorder %s218, %s219
    %p228 = scmp.eq.s32.totalorder %s26, 0
    %p229 = por %p227, %p228
    %p230 = scmp.ne.s32.totalorder %s218, %s219
    %p231 = scmp.eq.s32.totalorder %s27, 1
    %p232 = por %p230, %p231
    %p234 = scmp.ne.s32.totalorder %s219, %s233
    %p235 = scmp.eq.s32.totalorder %s27, 0
    %p236 = por %p234, %p235
    %s238 = sadd.s32 %s237, 1
    %p241 = scmp.eq.s32.totalorder %s21, 1
    %p242 = scmp.ne.s32.totalorder %s237, %s239
    %p243 = scmp.eq.s32.totalorder %s21, 0
    %p244 = por %p242, %p243
    %p245 = scmp.ne.s32.totalorder %s237, %s239
    %p246 = scmp.eq.s32.totalorder %s26, 1
    %p247 = por %p245, %p246
    %p248 = scmp.ne.s32.totalorder %s239, %s240
    %p249 = scmp.eq.s32.totalorder %s26, 0
    %p250 = por %p248, %p249
    %p251 = scmp.ne.s32.totalorder %s239, %s240
    %p252 = scmp.eq.s32.totalorder %s27, 1
    %p253 = por %p251, %p252
    %p255 = scmp.ne.s32.totalorder %s240, %s254
    %p256 = scmp.eq.s32.totalorder %s27, 0
    %p257 = por %p255, %p256
    %s259 = sadd.s32 %s258, 1
    %p262 = scmp.eq.s32.totalorder %s21, 1
    %p263 = scmp.ne.s32.totalorder %s258, %s260
    %p264 = scmp.eq.s32.totalorder %s21, 0
    %p265 = por %p263, %p264
    %p266 = scmp.ne.s32.totalorder %s258, %s260
    %p267 = scmp.eq.s32.totalorder %s26, 1
    %p268 = por %p266, %p267
    %p269 = scmp.ne.s32.totalorder %s260, %s261
    %p270 = scmp.eq.s32.totalorder %s26, 0
    %p271 = por %p269, %p270
    %p272 = scmp.ne.s32.totalorder %s260, %s261
    %p273 = scmp.eq.s32.totalorder %s27, 1
    %p274 = por %p272, %p273
    %p276 = scmp.ne.s32.totalorder %s261, %s275
    %p277 = scmp.eq.s32.totalorder %s27, 0
    %p278 = por %p276, %p277
    %s280 = sadd.s32 %s279, 1
    %p283 = scmp.eq.s32.totalorder %s21, 1
    %p284 = scmp.ne.s32.totalorder %s279, %s281
    %p285 = scmp.eq.s32.totalorder %s21, 0
    %p286 = por %p284, %p285
    %p287 = scmp.ne.s32.totalorder %s279, %s281
    %p288 = scmp.eq.s32.totalorder %s26, 1
    %p289 = por %p287, %p288
    %p290 = scmp.ne.s32.totalorder %s281, %s282
    %p291 = scmp.eq.s32.totalorder %s26, 0
    %p292 = por %p290, %p291
    %p293 = scmp.ne.s32.totalorder %s281, %s282
    %p294 = scmp.eq.s32.totalorder %s27, 1
    %p295 = por %p293, %p294
    %p297 = scmp.ne.s32.totalorder %s282, %s296
    %p298 = scmp.eq.s32.totalorder %s27, 0
    %p299 = por %p297, %p298
    %s301 = sadd.s32 %s300, 1
    %p304 = scmp.eq.s32.totalorder %s21, 1
    %p305 = scmp.ne.s32.totalorder %s300, %s302
    %p306 = scmp.eq.s32.totalorder %s21, 0
    %p307 = por %p305, %p306
    %p308 = scmp.ne.s32.totalorder %s300, %s302
    %p309 = scmp.eq.s32.totalorder %s26, 1
    %p310 = por %p308, %p309
    %p311 = scmp.ne.s32.totalorder %s302, %s303
    %p312 = scmp.eq.s32.totalorder %s26, 0
    %p313 = por %p311, %p312
    %p314 = scmp.ne.s32.totalorder %s302, %s303
    %p315 = scmp.eq.s32.totalorder %s27, 1
    %p316 = por %p314, %p315
    %p318 = scmp.ne.s32.totalorder %s303, %s317
    %p319 = scmp.eq.s32.totalorder %s27, 0
    %p320 = por %p318, %p319
    %s322 = sadd.s32 %s321, 1
    %p325 = scmp.eq.s32.totalorder %s21, 1
    %p326 = scmp.ne.s32.totalorder %s321, %s323
    %p327 = scmp.eq.s32.totalorder %s21, 0
    %p328 = por %p326, %p327
    %p329 = scmp.ne.s32.totalorder %s321, %s323
    %p330 = scmp.eq.s32.totalorder %s26, 1
    %p331 = por %p329, %p330
    %p332 = scmp.ne.s32.totalorder %s323, %s324
    %p333 = scmp.eq.s32.totalorder %s26, 0
    %p334 = por %p332, %p333
    %p335 = scmp.ne.s32.totalorder %s323, %s324
    %p336 = scmp.eq.s32.totalorder %s27, 1
    %p337 = por %p335, %p336
    %p339 = scmp.ne.s32.totalorder %s324, %s338
    %p340 = scmp.eq.s32.totalorder %s27, 0
    %p341 = por %p339, %p340
    %s343 = sadd.s32 %s342, 1
    %p346 = scmp.eq.s32.totalorder %s21, 1
    %p347 = scmp.ne.s32.totalorder %s342, %s344
    %p348 = scmp.eq.s32.totalorder %s21, 0
    %p349 = por %p347, %p348
    %p350 = scmp.ne.s32.totalorder %s342, %s344
    %p351 = scmp.eq.s32.totalorder %s26, 1
    %p352 = por %p350, %p351
    %p353 = scmp.ne.s32.totalorder %s344, %s345
    %p354 = scmp.eq.s32.totalorder %s26, 0
    %p355 = por %p353, %p354
    %p356 = scmp.ne.s32.totalorder %s344, %s345
    %p357 = scmp.eq.s32.totalorder %s27, 1
    %p358 = por %p356, %p357
    %p360 = scmp.ne.s32.totalorder %s345, %s359
    %p361 = scmp.eq.s32.totalorder %s27, 0
    %p362 = por %p360, %p361
    %s364 = sadd.s32 %s363, 1
    %p367 = scmp.eq.s32.totalorder %s21, 1
    %p368 = scmp.ne.s32.totalorder %s363, %s365
    %p369 = scmp.eq.s32.totalorder %s21, 0
    %p370 = por %p368, %p369
    %p371 = scmp.ne.s32.totalorder %s363, %s365
    %p372 = scmp.eq.s32.totalorder %s26, 1
    %p373 = por %p371, %p372
    %p374 = scmp.ne.s32.totalorder %s365, %s366
    %p375 = scmp.eq.s32.totalorder %s26, 0
    %p376 = por %p374, %p375
    %p377 = scmp.ne.s32.totalorder %s365, %s366
    %p378 = scmp.eq.s32.totalorder %s27, 1
    %p379 = por %p377, %p378
    %p381 = scmp.ne.s32.totalorder %s366, %s380
    %p382 = scmp.eq.s32.totalorder %s27, 0
    %p383 = por %p381, %p382
    %s384 = ssub.s32 %s28, %s40
    %s385 = ssub.s32 %s29, %s36
    %s386 = sor.u32 %s384, %s385
    %p387 = scmp.eq.s32.totalorder %s386, 0
    %s389 = sadd.s32 %s388, 1
    %s390 = scalar_select %p387, %s388, %s389
    %p393 = pneg %p387
    %p394 = scmp.eq.s32.totalorder %s21, 1
    %p395 = por %p393, %p394
    %p396 = scmp.ne.s32.totalorder %s388, %s391
    %p397 = scmp.eq.s32.totalorder %s21, 0
    %p398 = por %p396, %p397
    %p399 = scmp.ne.s32.totalorder %s388, %s391
    %p400 = scmp.eq.s32.totalorder %s26, 1
    %p401 = por %p399, %p400
    %p402 = scmp.ne.s32.totalorder %s391, %s392
    %p403 = scmp.eq.s32.totalorder %s26, 0
    %p404 = por %p402, %p403
    %p405 = scmp.ne.s32.totalorder %s391, %s392
    %p406 = scmp.eq.s32.totalorder %s27, 1
    %p407 = por %p405, %p406
    %p409 = scmp.ne.s32.totalorder %s392, %s408
    %p410 = scmp.eq.s32.totalorder %s27, 0
    %p411 = por %p409, %p410
    %p412 = scmp.le.s32.totalorder 1, %s21
    %p413 = scmp.lt.s32.totalorder %s21, 3
    %p414 = pnand %p412, %p413
    %p415 = pneg %p414
    // Predicated region
    $region9: #{_lambda_.2} parent=5 // pred_check
      _
    $region10: #{_lambda_.2} parent=5 // pred_check_branch
      %417 = sbr.rel (%p414) target = $region12
    $region11: #{_lambda_.2} parent=5 // pred_region
      %s418 = ssub.s32 %s21, 1
      // Predicated region
      $region13: #{_lambda_.2} parent=11 // pred_check
        %p419 = pneg %p166
      $region14: #{_lambda_.2} parent=11 // pred_check_branch
        %421 = sbr.rel (%p419) target = $region16
      $region15: #{_lambda_.2} parent=11 // pred_region
        _
      $region16: #{_lambda_.2} parent=11 // pred_fallthru
        _
      // Predicated region
      $region17: #{_lambda_.2} parent=11 // pred_check
        %p422 = pneg %p187
      $region18: #{_lambda_.2} parent=11 // pred_check_branch
        %424 = sbr.rel (%p422) target = $region20
      $region19: #{_lambda_.2} parent=11 // pred_region
        _
      $region20: #{_lambda_.2} parent=11 // pred_fallthru
        _
      // Predicated region
      $region21: #{_lambda_.2} parent=11 // pred_check
        %p425 = pneg %p208
      $region22: #{_lambda_.2} parent=11 // pred_check_branch
        %427 = sbr.rel (%p425) target = $region24
      $region23: #{_lambda_.2} parent=11 // pred_region
        _
      $region24: #{_lambda_.2} parent=11 // pred_fallthru
        _
      // Predicated region
      $region25: #{_lambda_.2} parent=11 // pred_check
        %p428 = pneg %p229
      $region26: #{_lambda_.2} parent=11 // pred_check_branch
        %430 = sbr.rel (%p428) target = $region28
      $region27: #{_lambda_.2} parent=11 // pred_region
        _
      $region28: #{_lambda_.2} parent=11 // pred_fallthru
        _
      // Predicated region
      $region29: #{_lambda_.2} parent=11 // pred_check
        %p431 = pneg %p250
      $region30: #{_lambda_.2} parent=11 // pred_check_branch
        %433 = sbr.rel (%p431) target = $region32
      $region31: #{_lambda_.2} parent=11 // pred_region
        _
      $region32: #{_lambda_.2} parent=11 // pred_fallthru
        _
      // Predicated region
      $region33: #{_lambda_.2} parent=11 // pred_check
        %p434 = pneg %p271
      $region34: #{_lambda_.2} parent=11 // pred_check_branch
        %436 = sbr.rel (%p434) target = $region36
      $region35: #{_lambda_.2} parent=11 // pred_region
        _
      $region36: #{_lambda_.2} parent=11 // pred_fallthru
        _
      // Predicated region
      $region37: #{_lambda_.2} parent=11 // pred_check
        %p437 = pneg %p292
      $region38: #{_lambda_.2} parent=11 // pred_check_branch
        %439 = sbr.rel (%p437) target = $region40
      $region39: #{_lambda_.2} parent=11 // pred_region
        _
      $region40: #{_lambda_.2} parent=11 // pred_fallthru
        _
      // Predicated region
      $region41: #{_lambda_.2} parent=11 // pred_check
        %p440 = pneg %p313
      $region42: #{_lambda_.2} parent=11 // pred_check_branch
        %442 = sbr.rel (%p440) target = $region44
      $region43: #{_lambda_.2} parent=11 // pred_region
        _
      $region44: #{_lambda_.2} parent=11 // pred_fallthru
        _
      // Predicated region
      $region45: #{_lambda_.2} parent=11 // pred_check
        %p443 = pneg %p334
      $region46: #{_lambda_.2} parent=11 // pred_check_branch
        %445 = sbr.rel (%p443) target = $region48
      $region47: #{_lambda_.2} parent=11 // pred_region
        _
      $region48: #{_lambda_.2} parent=11 // pred_fallthru
        _
      // Predicated region
      $region49: #{_lambda_.2} parent=11 // pred_check
        %p446 = pneg %p355
      $region50: #{_lambda_.2} parent=11 // pred_check_branch
        %448 = sbr.rel (%p446) target = $region52
      $region51: #{_lambda_.2} parent=11 // pred_region
        _
      $region52: #{_lambda_.2} parent=11 // pred_fallthru
        _
      // Predicated region
      $region53: #{_lambda_.2} parent=11 // pred_check
        %p449 = pneg %p376
      $region54: #{_lambda_.2} parent=11 // pred_check_branch
        %451 = sbr.rel (%p449) target = $region56
      $region55: #{_lambda_.2} parent=11 // pred_region
        _
      $region56: #{_lambda_.2} parent=11 // pred_fallthru
        _
    $region12: #{_lambda_.2} parent=5 // pred_fallthru
      _
    %p452 = scmp.lt.s32.totalorder %s21, 2
    // Predicated region
    $region57: #{_lambda_.2} parent=5 // pred_check
      %p453 = pneg %p452
    $region58: #{_lambda_.2} parent=5 // pred_check_branch
      %455 = sbr.rel (%p453) target = $region60
    $region59: #{_lambda_.2} parent=5 // pred_region
      // Predicated region
      $region61: #{_lambda_.2} parent=59 // pred_check
        %p456 = pneg %p55
      $region62: #{_lambda_.2} parent=59 // pred_check_branch
        %458 = sbr.rel (%p456) target = $region64
      $region63: #{_lambda_.2} parent=59 // pred_region
        %s459 = smul.u32 16, %s29
        %p460 = scmp.lt.s32.totalorder %s28, 1
        %s461 = scalar_select %p460, %s28, 1
        %p462 = scmp.lt.s32.totalorder %s459, 15
        %s463 = scalar_select %p462, %s459, 15
        %s464 = smul.addr %s461, 16
        %s465 = sadd.s32 %s463, %s464
        %s466 = smul.addr %s465, 8
        %s467 = scalar_lea.vmem %s0, %s466
        %s468 = smul.u32 16, %s29
      $region64: #{_lambda_.2} parent=59 // pred_fallthru
        _
      // Predicated region
      $region65: #{_lambda_.2} parent=59 // pred_check
        %p469 = pneg %p83
      $region66: #{_lambda_.2} parent=59 // pred_check_branch
        %471 = sbr.rel (%p469) target = $region68
      $region67: #{_lambda_.2} parent=59 // pred_region
        %s472 = smul.u32 16, %s29
        %p473 = scmp.lt.s32.totalorder %s28, 1
        %s474 = scalar_select %p473, %s28, 1
        %p475 = scmp.lt.s32.totalorder %s472, 15
        %s476 = scalar_select %p475, %s472, 15
        %s477 = smul.addr %s474, 16
        %s478 = sadd.s32 %s476, %s477
        %s479 = smul.addr %s478, 8
        %s480 = scalar_lea.vmem %s1, %s479
        %s481 = smul.u32 16, %s29
      $region68: #{_lambda_.2} parent=59 // pred_fallthru
        _
      // Predicated region
      $region69: #{_lambda_.2} parent=59 // pred_check
        %p482 = pneg %p111
      $region70: #{_lambda_.2} parent=59 // pred_check_branch
        %484 = sbr.rel (%p482) target = $region72
      $region71: #{_lambda_.2} parent=59 // pred_region
        %s485 = smul.u32 2, %s29
        %p486 = scmp.lt.s32.totalorder %s28, 1
        %s487 = scalar_select %p486, %s28, 1
        %p488 = scmp.lt.s32.totalorder %s485, 1
        %s489 = scalar_select %p488, %s485, 1
        %s490 = smul.addr %s487, 2
        %s491 = sadd.s32 %s489, %s490
        %s492 = smul.addr %s491, 8
        %s493 = scalar_lea.vmem %s2, %s492
        %s494 = smul.u32 2, %s29
      $region72: #{_lambda_.2} parent=59 // pred_fallthru
        _
      // Predicated region
      $region73: #{_lambda_.2} parent=59 // pred_check
        %p495 = pneg %p139
      $region74: #{_lambda_.2} parent=59 // pred_check_branch
        %497 = sbr.rel (%p495) target = $region76
      $region75: #{_lambda_.2} parent=59 // pred_region
        %s498 = smul.u32 2, %s29
        %p499 = scmp.lt.s32.totalorder %s28, 1
        %s500 = scalar_select %p499, %s28, 1
        %p501 = scmp.lt.s32.totalorder %s498, 1
        %s502 = scalar_select %p501, %s498, 1
        %s503 = smul.addr %s500, 2
        %s504 = sadd.s32 %s502, %s503
        %s505 = smul.addr %s504, 8
        %s506 = scalar_lea.vmem %s3, %s505
        %s507 = smul.u32 2, %s29
      $region76: #{_lambda_.2} parent=59 // pred_fallthru
        _
    $region60: #{_lambda_.2} parent=5 // pred_fallthru
      _
    %p508 = scmp.le.s32.totalorder 1, %s21
    %p509 = scmp.lt.s32.totalorder %s21, 3
    %p510 = pnand %p508, %p509
    %p511 = pneg %p510
    // Predicated region
    $region77: #{_lambda_.2} parent=5 // pred_check
      _
    $region78: #{_lambda_.2} parent=5 // pred_check_branch
      %513 = sbr.rel (%p510) target = $region80
    $region79: #{_lambda_.2} parent=5 // pred_region
      %s514 = ssub.s32 %s21, 1
      %s515 = smul.u32 16, %s31
      %p516 = scmp.lt.s32.totalorder %s30, 1
      %s517 = scalar_select %p516, %s30, 1
      %p518 = scmp.lt.s32.totalorder %s515, 15
      %s519 = scalar_select %p518, %s515, 15
      %s520 = smul.addr %s517, 16
      %s521 = sadd.s32 %s519, %s520
      %s522 = smul.addr %s521, 8
      %s523 = scalar_lea.vmem %s0, %s522
      %p524 = pneg %p61
      %p525 = pneg %p58
      %s526 = smul.u32 16, %s31
      %p527 = scmp.lt.s32.totalorder %s30, 1
      %s528 = scalar_select %p527, %s30, 1
      %p529 = scmp.lt.s32.totalorder %s526, 15
      %s530 = scalar_select %p529, %s526, 15
      %s531 = smul.addr %s528, 16
      %s532 = sadd.s32 %s530, %s531
      %s533 = smul.addr %s532, 8
      %s534 = scalar_lea.vmem %s1, %s533
      %p535 = pneg %p89
      %p536 = pneg %p86
      %s537 = smul.u32 2, %s31
      %p538 = scmp.lt.s32.totalorder %s30, 1
      %s539 = scalar_select %p538, %s30, 1
      %p540 = scmp.lt.s32.totalorder %s537, 1
      %s541 = scalar_select %p540, %s537, 1
      %s542 = smul.addr %s539, 2
      %s543 = sadd.s32 %s541, %s542
      %s544 = smul.addr %s543, 8
      %s545 = scalar_lea.vmem %s2, %s544
      %p546 = pneg %p117
      %p547 = pneg %p114
      %s548 = smul.u32 2, %s31
      %p549 = scmp.lt.s32.totalorder %s30, 1
      %s550 = scalar_select %p549, %s30, 1
      %p551 = scmp.lt.s32.totalorder %s548, 1
      %s552 = scalar_select %p551, %s548, 1
      %s553 = smul.addr %s550, 2
      %s554 = sadd.s32 %s552, %s553
      %s555 = smul.addr %s554, 8
      %s556 = scalar_lea.vmem %s3, %s555
      %p557 = pneg %p145
      %p558 = pneg %p142
      %p559 = pneg %p166
      %p560 = pneg %p163
      %p561 = pneg %p187
      %p562 = pneg %p184
      %p563 = pneg %p208
      %p564 = pneg %p205
      %p565 = pneg %p229
      %p566 = pneg %p226
      %p567 = pneg %p250
      %p568 = pneg %p247
      %p569 = pneg %p271
      %p570 = pneg %p268
      %p571 = pneg %p292
      %p572 = pneg %p289
      %p573 = pneg %p313
      %p574 = pneg %p310
      %p575 = pneg %p334
      %p576 = pneg %p331
      %p577 = pneg %p355
      %p578 = pneg %p352
      %p579 = pneg %p376
      %p580 = pneg %p373
      %p581 = pneg %p404
      %p582 = pneg %p401
      %s583 = smul.u32 2, %s31
      %p584 = scmp.lt.s32.totalorder %s30, 1
      %s585 = scalar_select %p584, %s30, 1
      %p586 = scmp.lt.s32.totalorder %s583, 1
      %s587 = scalar_select %p586, %s583, 1
      %s588 = smul.addr %s585, 2
      %s589 = sadd.s32 %s587, %s588
      %s590 = smul.addr %s589, 8
      %s591 = scalar_lea.vmem %s15, %s590
      %s592 = smul.u32 16, %s31
      %p593 = scmp.lt.s32.totalorder %s30, 1
      %s594 = scalar_select %p593, %s30, 1
      %p595 = scmp.lt.s32.totalorder %s592, 15
      %s596 = scalar_select %p595, %s592, 15
      %s597 = smul.addr %s594, 16
      %s598 = sadd.s32 %s596, %s597
      %s599 = smul.addr %s598, 8
      %s600 = scalar_lea.vmem %s0, %s599
      %s601 = smul.u32 16, %s31
      %s602 = smul.u32 16, %s31
      %p603 = scmp.lt.s32.totalorder %s30, 1
      %s604 = scalar_select %p603, %s30, 1
      %p605 = scmp.lt.s32.totalorder %s602, 15
      %s606 = scalar_select %p605, %s602, 15
      %s607 = smul.addr %s604, 16
      %s608 = sadd.s32 %s606, %s607
      %s609 = smul.addr %s608, 8
      %s610 = scalar_lea.vmem %s1, %s609
      %s611 = smul.u32 16, %s31
      %s612 = smul.u32 2, %s31
      %p613 = scmp.lt.s32.totalorder %s30, 1
      %s614 = scalar_select %p613, %s30, 1
      %p615 = scmp.lt.s32.totalorder %s612, 1
      %s616 = scalar_select %p615, %s612, 1
      %s617 = smul.addr %s614, 2
      %s618 = sadd.s32 %s616, %s617
      %s619 = smul.addr %s618, 8
      %s620 = scalar_lea.vmem %s2, %s619
      %s621 = smul.u32 2, %s31
      %s622 = smul.u32 2, %s31
      %p623 = scmp.lt.s32.totalorder %s30, 1
      %s624 = scalar_select %p623, %s30, 1
      %p625 = scmp.lt.s32.totalorder %s622, 1
      %s626 = scalar_select %p625, %s622, 1
      %s627 = smul.addr %s624, 2
      %s628 = sadd.s32 %s626, %s627
      %s629 = smul.addr %s628, 8
      %s630 = scalar_lea.vmem %s3, %s629
      %s631 = smul.u32 2, %s31
      %s632 = smul.u32 2, %s31
      %p633 = scmp.lt.s32.totalorder %s30, 1
      %s634 = scalar_select %p633, %s30, 1
      %p635 = scmp.lt.s32.totalorder %s632, 1
      %s636 = scalar_select %p635, %s632, 1
      %s637 = smul.addr %s634, 2
      %s638 = sadd.s32 %s636, %s637
      %s639 = smul.addr %s638, 8
      %s640 = scalar_lea.vmem %s15, %s639
      %s641 = smul.u32 2, %s31
      %v642 = vld [vmem:[%s610] sm:$0xff]
      %v643 = vld [vmem:[%s610 + $0x8] sm:$0xff]
      %v644 = vld [vmem:[%s610 + $0x10] sm:$0xff]
      %v645 = vld [vmem:[%s610 + $0x18] sm:$0xff]
      %v646 = vld [vmem:[%s610 + $0x20] sm:$0xff]
      %v647 = vld [vmem:[%s610 + $0x28] sm:$0xff]
      %v648 = vld [vmem:[%s610 + $0x30] sm:$0xff]
      %v649 = vld [vmem:[%s610 + $0x38] sm:$0xff]
      %v650 = vld [vmem:[%s610 + $0x40] sm:$0xff]
      %v651 = vld [vmem:[%s610 + $0x48] sm:$0xff]
      %v652 = vld [vmem:[%s610 + $0x50] sm:$0xff]
      %v653 = vld [vmem:[%s610 + $0x58] sm:$0xff]
      %v654 = vld [vmem:[%s610 + $0x60] sm:$0xff]
      %v655 = vld [vmem:[%s610 + $0x68] sm:$0xff]
      %v656 = vld [vmem:[%s610 + $0x70] sm:$0xff]
      %v657 = vld [vmem:[%s610 + $0x78] sm:$0xff]
      %v658 = vld [vmem:[%s620] sm:$0xff]
      %v659 = vld [vmem:[%s620 + $0x8] sm:$0xff]
      %v660 = vld [vmem:[%s630] sm:$0xff]
      %v661 = vld [vmem:[%s630 + $0x8] sm:$0xff]
      %v662 = vld [vmem:[%s600] sm:$0xff]
      %v663 = vld [vmem:[%s600 + $0x8] sm:$0xff]
      %v664 = vld [vmem:[%s600 + $0x10] sm:$0xff]
      %v665 = vld [vmem:[%s600 + $0x18] sm:$0xff]
      %v666 = vld [vmem:[%s600 + $0x20] sm:$0xff]
      %v667 = vld [vmem:[%s600 + $0x28] sm:$0xff]
      %v668 = vld [vmem:[%s600 + $0x30] sm:$0xff]
      %v669 = vld [vmem:[%s600 + $0x38] sm:$0xff]
      %v670 = vld [vmem:[%s600 + $0x40] sm:$0xff]
      %v671 = vld [vmem:[%s600 + $0x48] sm:$0xff]
      %v672 = vld [vmem:[%s600 + $0x50] sm:$0xff]
      %v673 = vld [vmem:[%s600 + $0x58] sm:$0xff]
      %v674 = vld [vmem:[%s600 + $0x60] sm:$0xff]
      %v675 = vld [vmem:[%s600 + $0x68] sm:$0xff]
      %v676 = vld [vmem:[%s600 + $0x70] sm:$0xff]
      %v677 = vld [vmem:[%s600 + $0x78] sm:$0xff]
      %v678 = vld [vmem:[%s4] sm:$0xff]
      %v679 = vld [vmem:[%s4 + $0x8] sm:$0x1]
      %v680 = vld [vmem:[%s5] sm:$0x1]
      %v681 = vld [vmem:[%s6] sm:$0x1]
      %vm682 = vcmask 72704
      %v684 = vsel %vm682, %v662, 0
      %v687 = vsel %vm682, %v663, 0
      %v690 = vsel %vm682, %v664, 0
      %v693 = vsel %vm682, %v665, 0
      %v696 = vsel %vm682, %v666, 0
      %v699 = vsel %vm682, %v667, 0
      %v702 = vsel %vm682, %v668, 0
      %v705 = vsel %vm682, %v669, 0
      %v708 = vsel %vm682, %v670, 0
      %v711 = vsel %vm682, %v671, 0
      %v714 = vsel %vm682, %v672, 0
      %v717 = vsel %vm682, %v673, 0
      %v720 = vsel %vm682, %v674, 0
      %v723 = vsel %vm682, %v675, 0
      %v726 = vsel %vm682, %v676, 0
      %v729 = vsel %vm682, %v677, 0
      %vm731 = vcmask 1040384
      %v733 = vsel %vm731, %v679, 0
      %735 = vmatprep.subr.mxu0 0.0
      %736 = vmatpush1.msra.mxu0 0.0
      %737 = vmatprep.subr.mxu0 0.0
      %738 = vmatpush1.msra.mxu0 0.0
      %739 = vmatprep.subr.mxu0 0.0
      %740 = vmatpush1.msra.mxu0 0.0
      %741 = vmatprep.subr.mxu0 0.0
      %742 = vmatpush1.msra.mxu0 0.0
      %743 = vmatprep.subr.mxu0 0.0
      %744 = vmatpush1.msra.mxu0 0.0
      %745 = vmatprep.subr.mxu0 0.0
      %746 = vmatpush1.msra.mxu0 0.0
      %747 = vmatprep.subr.mxu0 0.0
      %748 = vmatpush1.msra.mxu0 0.0
      %749 = vmatprep.subr.mxu0 0.0
      %750 = vmatpush1.msra.mxu0 0.0
      %751 = vmatprep.subr.mxu0 0.0
      %752 = vmatpush1.msra.mxu0 0.0
      %753 = vmatprep.subr.mxu0 0.0
      %754 = vmatpush1.msra.mxu0 0.0
      %755 = vmatprep.subr.mxu0 0.0
      %756 = vmatpush1.msra.mxu0 0.0
      %757 = vmatprep.subr.mxu0 0.0
      %758 = vmatpush1.msra.mxu0 0.0
      %759 = vmatprep.subr.mxu0 0.0
      %760 = vmatpush1.msra.mxu0 0.0
      %761 = vmatprep.subr.mxu0 0.0
      %762 = vmatpush1.msra.mxu0 0.0
      %763 = vmatprep.subr.mxu0 0.0
      %764 = vmatpush1.msra.mxu0 %v733
      %765 = vmatprep.subr.mxu0 0.0
      %766 = vmatpush1.msra.mxu0 %v678
      %767 = vmatprep.subr.mxu0 0.0
      %768 = vmatpush2.msra.mxu0 0.0
      %769 = vmatprep.subr.mxu0 0.0
      %770 = vmatpush2.msra.mxu0 0.0
      %771 = vmatprep.subr.mxu0 0.0
      %772 = vmatpush2.msra.mxu0 0.0
      %773 = vmatprep.subr.mxu0 0.0
      %774 = vmatpush2.msra.mxu0 0.0
      %775 = vmatprep.subr.mxu0 0.0
      %776 = vmatpush2.msra.mxu0 0.0
      %777 = vmatprep.subr.mxu0 0.0
      %778 = vmatpush2.msra.mxu0 0.0
      %779 = vmatprep.subr.mxu0 0.0
      %780 = vmatpush2.msra.mxu0 0.0
      %781 = vmatprep.subr.mxu0 0.0
      %782 = vmatpush2.msra.mxu0 0.0
      %783 = vmatprep.subr.mxu0 0.0
      %784 = vmatpush2.msra.mxu0 0.0
      %785 = vmatprep.subr.mxu0 0.0
      %786 = vmatpush2.msra.mxu0 0.0
      %787 = vmatprep.subr.mxu0 0.0
      %788 = vmatpush2.msra.mxu0 0.0
      %789 = vmatprep.subr.mxu0 0.0
      %790 = vmatpush2.msra.mxu0 0.0
      %791 = vmatprep.subr.mxu0 0.0
      %792 = vmatpush2.msra.mxu0 0.0
      %793 = vmatprep.subr.mxu0 0.0
      %794 = vmatpush2.msra.mxu0 0.0
      %795 = vmatprep.subr.mxu0 0.0
      %796 = vmatpush2.msra.mxu0 0.0
      %797 = vmatprep.subr.mxu0 0.0
      %798 = vmatpush2.msra.mxu0 0.0
      %799 = vmatprep.mubr.f32.mxu0 0.0
      %800 = vmatmul.mubr.f32.gmra.mxu0 %v684
      %v801 = vpop.f32.mrf.mxu0
      %v802 = vadd.f32 0.0, %v801
      %v803 = vpop.f32.mrf.mxu0
      %804 = vmatprep.mubr.f32.mxu0 0.0
      %805 = vmatmul.mubr.f32.gmra.mxu0 %v687
      %v806 = vpop.f32.mrf.mxu0
      %v807 = vadd.f32 0.0, %v806
      %v808 = vpop.f32.mrf.mxu0
      %809 = vmatprep.mubr.f32.mxu0 0.0
      %810 = vmatmul.mubr.f32.gmra.mxu0 %v690
      %v811 = vpop.f32.mrf.mxu0
      %v812 = vadd.f32 0.0, %v811
      %v813 = vpop.f32.mrf.mxu0
      %814 = vmatprep.mubr.f32.mxu0 0.0
      %815 = vmatmul.mubr.f32.gmra.mxu0 %v693
      %v816 = vpop.f32.mrf.mxu0
      %v817 = vadd.f32 0.0, %v816
      %v818 = vpop.f32.mrf.mxu0
      %819 = vmatprep.mubr.f32.mxu0 0.0
      %820 = vmatmul.mubr.f32.gmra.mxu0 %v696
      %v821 = vpop.f32.mrf.mxu0
      %v822 = vadd.f32 0.0, %v821
      %v823 = vpop.f32.mrf.mxu0
      %824 = vmatprep.mubr.f32.mxu0 0.0
      %825 = vmatmul.mubr.f32.gmra.mxu0 %v699
      %v826 = vpop.f32.mrf.mxu0
      %v827 = vadd.f32 0.0, %v826
      %v828 = vpop.f32.mrf.mxu0
      %829 = vmatprep.mubr.f32.mxu0 0.0
      %830 = vmatmul.mubr.f32.gmra.mxu0 %v702
      %v831 = vpop.f32.mrf.mxu0
      %v832 = vadd.f32 0.0, %v831
      %v833 = vpop.f32.mrf.mxu0
      %834 = vmatprep.mubr.f32.mxu0 0.0
      %835 = vmatmul.mubr.f32.gmra.mxu0 %v705
      %v836 = vpop.f32.mrf.mxu0
      %v837 = vadd.f32 0.0, %v836
      %v838 = vpop.f32.mrf.mxu0
      %839 = vmatprep.mubr.f32.mxu0 0.0
      %840 = vmatmul.mubr.f32.gmra.mxu0 %v708
      %v841 = vpop.f32.mrf.mxu0
      %v842 = vadd.f32 0.0, %v841
      %v843 = vpop.f32.mrf.mxu0
      %844 = vmatprep.mubr.f32.mxu0 0.0
      %845 = vmatmul.mubr.f32.gmra.mxu0 %v711
      %v846 = vpop.f32.mrf.mxu0
      %v847 = vadd.f32 0.0, %v846
      %v848 = vpop.f32.mrf.mxu0
      %849 = vmatprep.mubr.f32.mxu0 0.0
      %850 = vmatmul.mubr.f32.gmra.mxu0 %v714
      %v851 = vpop.f32.mrf.mxu0
      %v852 = vadd.f32 0.0, %v851
      %v853 = vpop.f32.mrf.mxu0
      %854 = vmatprep.mubr.f32.mxu0 0.0
      %855 = vmatmul.mubr.f32.gmra.mxu0 %v717
      %v856 = vpop.f32.mrf.mxu0
      %v857 = vadd.f32 0.0, %v856
      %v858 = vpop.f32.mrf.mxu0
      %859 = vmatprep.mubr.f32.mxu0 0.0
      %860 = vmatmul.mubr.f32.gmra.mxu0 %v720
      %v861 = vpop.f32.mrf.mxu0
      %v862 = vadd.f32 0.0, %v861
      %v863 = vpop.f32.mrf.mxu0
      %864 = vmatprep.mubr.f32.mxu0 0.0
      %865 = vmatmul.mubr.f32.gmra.mxu0 %v723
      %v866 = vpop.f32.mrf.mxu0
      %v867 = vadd.f32 0.0, %v866
      %v868 = vpop.f32.mrf.mxu0
      %869 = vmatprep.mubr.f32.mxu0 0.0
      %870 = vmatmul.mubr.f32.gmra.mxu0 %v726
      %v871 = vpop.f32.mrf.mxu0
      %v872 = vadd.f32 0.0, %v871
      %v873 = vpop.f32.mrf.mxu0
      %874 = vmatprep.mubr.f32.mxu0 0.0
      %875 = vmatmul.mubr.f32.gmra.mxu0 %v729
      %v876 = vpop.f32.mrf.mxu0
      %v877 = vadd.f32 0.0, %v876
      %v878 = vpop.f32.mrf.mxu0
      %879 = vdwg.mxu0
      %v881 = vlaneseq
      %v882 = vshrl.u32 %v881, 7
      %v883 = vsub.s32 0, %v882
      %v884 = vrot.slane %v680, %v883
      %v886 = vmul.f32 %v802, %v884
      %v887 = vmul.f32 %v807, %v884
      %v888 = vmul.f32 %v812, %v884
      %v889 = vmul.f32 %v817, %v884
      %v890 = vmul.f32 %v822, %v884
      %v891 = vmul.f32 %v827, %v884
      %v892 = vmul.f32 %v832, %v884
      %v893 = vmul.f32 %v837, %v884
      %v894 = vmul.f32 %v842, %v884
      %v895 = vmul.f32 %v847, %v884
      %v896 = vmul.f32 %v852, %v884
      %v897 = vmul.f32 %v857, %v884
      %v898 = vmul.f32 %v862, %v884
      %v899 = vmul.f32 %v867, %v884
      %v900 = vmul.f32 %v872, %v884
      %v901 = vmul.f32 %v877, %v884
      %v903 = vlaneseq
      %v904 = vshrl.u32 %v903, 7
      %v905 = vsub.s32 0, %v904
      %v906 = vrot.slane %v681, %v905
      %v908 = vadd.f32 %v886, %v906
      %v909 = vadd.f32 %v887, %v906
      %v910 = vadd.f32 %v888, %v906
      %v911 = vadd.f32 %v889, %v906
      %v912 = vadd.f32 %v890, %v906
      %v913 = vadd.f32 %v891, %v906
      %v914 = vadd.f32 %v892, %v906
      %v915 = vadd.f32 %v893, %v906
      %v916 = vadd.f32 %v894, %v906
      %v917 = vadd.f32 %v895, %v906
      %v918 = vadd.f32 %v896, %v906
      %v919 = vadd.f32 %v897, %v906
      %v920 = vadd.f32 %v898, %v906
      %v921 = vadd.f32 %v899, %v906
      %v922 = vadd.f32 %v900, %v906
      %v923 = vadd.f32 %v901, %v906
      %v924 = vmax.f32 %v908, 0.0
      %v925 = vmax.f32 %v909, 0.0
      %v926 = vmax.f32 %v910, 0.0
      %v927 = vmax.f32 %v911, 0.0
      %v928 = vmax.f32 %v912, 0.0
      %v929 = vmax.f32 %v913, 0.0
      %v930 = vmax.f32 %v914, 0.0
      %v931 = vmax.f32 %v915, 0.0
      %v932 = vmax.f32 %v916, 0.0
      %v933 = vmax.f32 %v917, 0.0
      %v934 = vmax.f32 %v918, 0.0
      %v935 = vmax.f32 %v919, 0.0
      %v936 = vmax.f32 %v920, 0.0
      %v937 = vmax.f32 %v921, 0.0
      %v938 = vmax.f32 %v922, 0.0
      %v939 = vmax.f32 %v923, 0.0
      %v942 = vcombine.high %v658, %v658
      %v944 = vunpack.c.l.s4 1966171168
      %v945 = vunpack.c.0.s8 %v944
      %v946 = vlaneseq
      %v947 = vshrl.u32 %v946, 7
      %v948 = vsub.s32 %v945, %v947
      %v949 = vrot.slane %v658, %v948
      %v951 = vunpack.c.l.s4 1966171168
      %v952 = vunpack.c.0.s8 %v951
      %v953 = vlaneseq
      %v954 = vshrl.u32 %v953, 7
      %v955 = vsub.s32 %v952, %v954
      %v956 = vrot.slane %v942, %v955
      %v957 = vcombine.high %v949, %v949
      %v958 = vcombine.high %v956, %v956
      %v960 = vunpack.c.l.s4 1966171168
      %v961 = vunpack.c.0.s8 %v960
      %v962 = vlaneseq
      %v963 = vshrl.u32 %v962, 7
      %v964 = vsub.s32 %v961, %v963
      %v965 = vrot.slane %v949, %v964
      %v967 = vunpack.c.l.s4 1966171168
      %v968 = vunpack.c.0.s8 %v967
      %v969 = vlaneseq
      %v970 = vshrl.u32 %v969, 7
      %v971 = vsub.s32 %v968, %v970
      %v972 = vrot.slane %v956, %v971
      %v974 = vunpack.c.l.s4 1966171168
      %v975 = vunpack.c.0.s8 %v974
      %v976 = vlaneseq
      %v977 = vshrl.u32 %v976, 7
      %v978 = vsub.s32 %v975, %v977
      %v979 = vrot.slane %v957, %v978
      %v981 = vunpack.c.l.s4 1966171168
      %v982 = vunpack.c.0.s8 %v981
      %v983 = vlaneseq
      %v984 = vshrl.u32 %v983, 7
      %v985 = vsub.s32 %v982, %v984
      %v986 = vrot.slane %v958, %v985
      %v987 = vcombine.high %v965, %v965
      %v988 = vcombine.high %v972, %v972
      %v989 = vcombine.high %v979, %v979
      %v990 = vcombine.high %v986, %v986
      %v991 = vcombine.high %v659, %v659
      %v993 = vunpack.c.l.s4 1966171168
      %v994 = vunpack.c.0.s8 %v993
      %v995 = vlaneseq
      %v996 = vshrl.u32 %v995, 7
      %v997 = vsub.s32 %v994, %v996
      %v998 = vrot.slane %v659, %v997
      %v1000 = vunpack.c.l.s4 1966171168
      %v1001 = vunpack.c.0.s8 %v1000
      %v1002 = vlaneseq
      %v1003 = vshrl.u32 %v1002, 7
      %v1004 = vsub.s32 %v1001, %v1003
      %v1005 = vrot.slane %v991, %v1004
      %v1006 = vcombine.high %v998, %v998
      %v1007 = vcombine.high %v1005, %v1005
      %v1009 = vunpack.c.l.s4 1966171168
      %v1010 = vunpack.c.0.s8 %v1009
      %v1011 = vlaneseq
      %v1012 = vshrl.u32 %v1011, 7
      %v1013 = vsub.s32 %v1010, %v1012
      %v1014 = vrot.slane %v998, %v1013
      %v1016 = vunpack.c.l.s4 1966171168
      %v1017 = vunpack.c.0.s8 %v1016
      %v1018 = vlaneseq
      %v1019 = vshrl.u32 %v1018, 7
      %v1020 = vsub.s32 %v1017, %v1019
      %v1021 = vrot.slane %v1005, %v1020
      %v1023 = vunpack.c.l.s4 1966171168
      %v1024 = vunpack.c.0.s8 %v1023
      %v1025 = vlaneseq
      %v1026 = vshrl.u32 %v1025, 7
      %v1027 = vsub.s32 %v1024, %v1026
      %v1028 = vrot.slane %v1006, %v1027
      %v1030 = vunpack.c.l.s4 1966171168
      %v1031 = vunpack.c.0.s8 %v1030
      %v1032 = vlaneseq
      %v1033 = vshrl.u32 %v1032, 7
      %v1034 = vsub.s32 %v1031, %v1033
      %v1035 = vrot.slane %v1007, %v1034
      %v1036 = vcombine.high %v1014, %v1014
      %v1037 = vcombine.high %v1021, %v1021
      %v1038 = vcombine.high %v1028, %v1028
      %v1039 = vcombine.high %v1035, %v1035
      %v1040 = vlaneseq
      %v1041 = vshrl.u32 %v1040, 7
      %v1042 = vsub.s32 0, %v1041
      %v1043 = vrot.slane %v965, %v1042
      %v1044 = vlaneseq
      %v1045 = vshrl.u32 %v1044, 7
      %v1046 = vsub.s32 0, %v1045
      %v1047 = vrot.slane %v979, %v1046
      %v1048 = vlaneseq
      %v1049 = vshrl.u32 %v1048, 7
      %v1050 = vsub.s32 0, %v1049
      %v1051 = vrot.slane %v987, %v1050
      %v1052 = vlaneseq
      %v1053 = vshrl.u32 %v1052, 7
      %v1054 = vsub.s32 0, %v1053
      %v1055 = vrot.slane %v989, %v1054
      %v1056 = vlaneseq
      %v1057 = vshrl.u32 %v1056, 7
      %v1058 = vsub.s32 0, %v1057
      %v1059 = vrot.slane %v972, %v1058
      %v1060 = vlaneseq
      %v1061 = vshrl.u32 %v1060, 7
      %v1062 = vsub.s32 0, %v1061
      %v1063 = vrot.slane %v986, %v1062
      %v1064 = vlaneseq
      %v1065 = vshrl.u32 %v1064, 7
      %v1066 = vsub.s32 0, %v1065
      %v1067 = vrot.slane %v988, %v1066
      %v1068 = vlaneseq
      %v1069 = vshrl.u32 %v1068, 7
      %v1070 = vsub.s32 0, %v1069
      %v1071 = vrot.slane %v990, %v1070
      %v1072 = vlaneseq
      %v1073 = vshrl.u32 %v1072, 7
      %v1074 = vsub.s32 0, %v1073
      %v1075 = vrot.slane %v1014, %v1074
      %v1076 = vlaneseq
      %v1077 = vshrl.u32 %v1076, 7
      %v1078 = vsub.s32 0, %v1077
      %v1079 = vrot.slane %v1028, %v1078
      %v1080 = vlaneseq
      %v1081 = vshrl.u32 %v1080, 7
      %v1082 = vsub.s32 0, %v1081
      %v1083 = vrot.slane %v1036, %v1082
      %v1084 = vlaneseq
      %v1085 = vshrl.u32 %v1084, 7
      %v1086 = vsub.s32 0, %v1085
      %v1087 = vrot.slane %v1038, %v1086
      %v1088 = vlaneseq
      %v1089 = vshrl.u32 %v1088, 7
      %v1090 = vsub.s32 0, %v1089
      %v1091 = vrot.slane %v1021, %v1090
      %v1092 = vlaneseq
      %v1093 = vshrl.u32 %v1092, 7
      %v1094 = vsub.s32 0, %v1093
      %v1095 = vrot.slane %v1035, %v1094
      %v1096 = vlaneseq
      %v1097 = vshrl.u32 %v1096, 7
      %v1098 = vsub.s32 0, %v1097
      %v1099 = vrot.slane %v1037, %v1098
      %v1100 = vlaneseq
      %v1101 = vshrl.u32 %v1100, 7
      %v1102 = vsub.s32 0, %v1101
      %v1103 = vrot.slane %v1039, %v1102
      %v1120 = vsub.f32 %v1043, %v642
      %v1121 = vsub.f32 %v1047, %v643
      %v1122 = vsub.f32 %v1051, %v644
      %v1123 = vsub.f32 %v1055, %v645
      %v1124 = vsub.f32 %v1059, %v646
      %v1125 = vsub.f32 %v1063, %v647
      %v1126 = vsub.f32 %v1067, %v648
      %v1127 = vsub.f32 %v1071, %v649
      %v1128 = vsub.f32 %v1075, %v650
      %v1129 = vsub.f32 %v1079, %v651
      %v1130 = vsub.f32 %v1083, %v652
      %v1131 = vsub.f32 %v1087, %v653
      %v1132 = vsub.f32 %v1091, %v654
      %v1133 = vsub.f32 %v1095, %v655
      %v1134 = vsub.f32 %v1099, %v656
      %v1135 = vsub.f32 %v1103, %v657
      %v1136 = vand.u32 2147483647, %v1120
      %v1137 = vand.u32 2147483647, %v1121
      %v1138 = vand.u32 2147483647, %v1122
      %v1139 = vand.u32 2147483647, %v1123
      %v1140 = vand.u32 2147483647, %v1124
      %v1141 = vand.u32 2147483647, %v1125
      %v1142 = vand.u32 2147483647, %v1126
      %v1143 = vand.u32 2147483647, %v1127
      %v1144 = vand.u32 2147483647, %v1128
      %v1145 = vand.u32 2147483647, %v1129
      %v1146 = vand.u32 2147483647, %v1130
      %v1147 = vand.u32 2147483647, %v1131
      %v1148 = vand.u32 2147483647, %v1132
      %v1149 = vand.u32 2147483647, %v1133
      %v1150 = vand.u32 2147483647, %v1134
      %v1151 = vand.u32 2147483647, %v1135
      %vm1152 = vcmask 64512
      %v1153 = vsel %vm1152, %v1136, 0.0
      %1154 = vadd.xlane.f32.xlu0 %v1153
      %v1155 = vpop.xlane.xlu0 %1154
      %v1156 = vsel %vm1152, %v1137, 0.0
      %1157 = vadd.xlane.f32.xlu0 %v1156
      %v1158 = vpop.xlane.xlu0 %1157
      %v1159 = vsel %vm1152, %v1138, 0.0
      %1160 = vadd.xlane.f32.xlu0 %v1159
      %v1161 = vpop.xlane.xlu0 %1160
      %v1162 = vsel %vm1152, %v1139, 0.0
      %1163 = vadd.xlane.f32.xlu0 %v1162
      %v1164 = vpop.xlane.xlu0 %1163
      %v1165 = vsel %vm1152, %v1140, 0.0
      %1166 = vadd.xlane.f32.xlu0 %v1165
      %v1167 = vpop.xlane.xlu0 %1166
      %v1168 = vsel %vm1152, %v1141, 0.0
      %1169 = vadd.xlane.f32.xlu0 %v1168
      %v1170 = vpop.xlane.xlu0 %1169
      %v1171 = vsel %vm1152, %v1142, 0.0
      %1172 = vadd.xlane.f32.xlu0 %v1171
      %v1173 = vpop.xlane.xlu0 %1172
      %v1174 = vsel %vm1152, %v1143, 0.0
      %1175 = vadd.xlane.f32.xlu0 %v1174
      %v1176 = vpop.xlane.xlu0 %1175
      %v1177 = vsel %vm1152, %v1144, 0.0
      %1178 = vadd.xlane.f32.xlu0 %v1177
      %v1179 = vpop.xlane.xlu0 %1178
      %v1180 = vsel %vm1152, %v1145, 0.0
      %1181 = vadd.xlane.f32.xlu0 %v1180
      %v1182 = vpop.xlane.xlu0 %1181
      %v1183 = vsel %vm1152, %v1146, 0.0
      %1184 = vadd.xlane.f32.xlu0 %v1183
      %v1185 = vpop.xlane.xlu0 %1184
      %v1186 = vsel %vm1152, %v1147, 0.0
      %1187 = vadd.xlane.f32.xlu0 %v1186
      %v1188 = vpop.xlane.xlu0 %1187
      %v1189 = vsel %vm1152, %v1148, 0.0
      %1190 = vadd.xlane.f32.xlu0 %v1189
      %v1191 = vpop.xlane.xlu0 %1190
      %v1192 = vsel %vm1152, %v1149, 0.0
      %1193 = vadd.xlane.f32.xlu0 %v1192
      %v1194 = vpop.xlane.xlu0 %1193
      %v1195 = vsel %vm1152, %v1150, 0.0
      %1196 = vadd.xlane.f32.xlu0 %v1195
      %v1197 = vpop.xlane.xlu0 %1196
      %v1198 = vsel %vm1152, %v1151, 0.0
      %1199 = vadd.xlane.f32.xlu0 %v1198
      %v1200 = vpop.xlane.xlu0 %1199
      %v1201 = vrcp.pop 8.0
      %v1202 = vmul.f32 %v1155, %v1201
      %v1203 = vmul.f32 %v1158, %v1201
      %v1204 = vmul.f32 %v1161, %v1201
      %v1205 = vmul.f32 %v1164, %v1201
      %v1206 = vmul.f32 %v1167, %v1201
      %v1207 = vmul.f32 %v1170, %v1201
      %v1208 = vmul.f32 %v1173, %v1201
      %v1209 = vmul.f32 %v1176, %v1201
      %v1210 = vmul.f32 %v1179, %v1201
      %v1211 = vmul.f32 %v1182, %v1201
      %v1212 = vmul.f32 %v1185, %v1201
      %v1213 = vmul.f32 %v1188, %v1201
      %v1214 = vmul.f32 %v1191, %v1201
      %v1215 = vmul.f32 %v1194, %v1201
      %v1216 = vmul.f32 %v1197, %v1201
      %v1217 = vmul.f32 %v1200, %v1201
      %v1218 = vsub.f32 0.0, %v1202
      %v1219 = vsub.f32 0.0, %v1203
      %v1220 = vsub.f32 0.0, %v1204
      %v1221 = vsub.f32 0.0, %v1205
      %v1222 = vsub.f32 0.0, %v1206
      %v1223 = vsub.f32 0.0, %v1207
      %v1224 = vsub.f32 0.0, %v1208
      %v1225 = vsub.f32 0.0, %v1209
      %v1226 = vsub.f32 0.0, %v1210
      %v1227 = vsub.f32 0.0, %v1211
      %v1228 = vsub.f32 0.0, %v1212
      %v1229 = vsub.f32 0.0, %v1213
      %v1230 = vsub.f32 0.0, %v1214
      %v1231 = vsub.f32 0.0, %v1215
      %v1232 = vsub.f32 0.0, %v1216
      %v1233 = vsub.f32 0.0, %v1217
      %v1234 = vmul.f32 %v1218, 1.442695
      %v1235 = vpow.pop %v1234
      %v1236 = vmul.f32 %v1219, 1.442695
      %v1237 = vpow.pop %v1236
      %v1238 = vmul.f32 %v1220, 1.442695
      %v1239 = vpow.pop %v1238
      %v1240 = vmul.f32 %v1221, 1.442695
      %v1241 = vpow.pop %v1240
      %v1242 = vmul.f32 %v1222, 1.442695
      %v1243 = vpow.pop %v1242
      %v1244 = vmul.f32 %v1223, 1.442695
      %v1245 = vpow.pop %v1244
      %v1246 = vmul.f32 %v1224, 1.442695
      %v1247 = vpow.pop %v1246
      %v1248 = vmul.f32 %v1225, 1.442695
      %v1249 = vpow.pop %v1248
      %v1250 = vmul.f32 %v1226, 1.442695
      %v1251 = vpow.pop %v1250
      %v1252 = vmul.f32 %v1227, 1.442695
      %v1253 = vpow.pop %v1252
      %v1254 = vmul.f32 %v1228, 1.442695
      %v1255 = vpow.pop %v1254
      %v1256 = vmul.f32 %v1229, 1.442695
      %v1257 = vpow.pop %v1256
      %v1258 = vmul.f32 %v1230, 1.442695
      %v1259 = vpow.pop %v1258
      %v1260 = vmul.f32 %v1231, 1.442695
      %v1261 = vpow.pop %v1260
      %v1262 = vmul.f32 %v1232, 1.442695
      %v1263 = vpow.pop %v1262
      %v1264 = vmul.f32 %v1233, 1.442695
      %v1265 = vpow.pop %v1264
      %v1266 = vmul.f32 %v1235, 0.5
      %v1267 = vmul.f32 %v1237, 0.5
      %v1268 = vmul.f32 %v1239, 0.5
      %v1269 = vmul.f32 %v1241, 0.5
      %v1270 = vmul.f32 %v1243, 0.5
      %v1271 = vmul.f32 %v1245, 0.5
      %v1272 = vmul.f32 %v1247, 0.5
      %v1273 = vmul.f32 %v1249, 0.5
      %v1274 = vmul.f32 %v1251, 0.5
      %v1275 = vmul.f32 %v1253, 0.5
      %v1276 = vmul.f32 %v1255, 0.5
      %v1277 = vmul.f32 %v1257, 0.5
      %v1278 = vmul.f32 %v1259, 0.5
      %v1279 = vmul.f32 %v1261, 0.5
      %v1280 = vmul.f32 %v1263, 0.5
      %v1281 = vmul.f32 %v1265, 0.5
      %v1282 = vlaneseq
      %v1283 = vshrl.u32 %v1282, 7
      %v1284 = vsub.s32 0, %v1283
      %v1285 = vrot.slane %v660, %v1284
      %1287 = vbcast.lane.b32.xlu0 %v1285, 256
      %v1288 = vpop.permute.xlu0 %1287
      %v1289 = vlaneseq
      %v1290 = vshrl.u32 %v1289, 7
      %v1291 = vsub.s32 1, %v1290
      %v1292 = vrot.slane %v660, %v1291
      %1294 = vbcast.lane.b32.xlu0 %v1292, 256
      %v1295 = vpop.permute.xlu0 %1294
      %v1296 = vlaneseq
      %v1297 = vshrl.u32 %v1296, 7
      %v1298 = vsub.s32 2, %v1297
      %v1299 = vrot.slane %v660, %v1298
      %1301 = vbcast.lane.b32.xlu0 %v1299, 256
      %v1302 = vpop.permute.xlu0 %1301
      %v1303 = vlaneseq
      %v1304 = vshrl.u32 %v1303, 7
      %v1305 = vsub.s32 3, %v1304
      %v1306 = vrot.slane %v660, %v1305
      %1308 = vbcast.lane.b32.xlu0 %v1306, 256
      %v1309 = vpop.permute.xlu0 %1308
      %v1310 = vlaneseq
      %v1311 = vshrl.u32 %v1310, 7
      %v1312 = vsub.s32 4, %v1311
      %v1313 = vrot.slane %v660, %v1312
      %1315 = vbcast.lane.b32.xlu0 %v1313, 256
      %v1316 = vpop.permute.xlu0 %1315
      %v1317 = vlaneseq
      %v1318 = vshrl.u32 %v1317, 7
      %v1319 = vsub.s32 5, %v1318
      %v1320 = vrot.slane %v660, %v1319
      %1322 = vbcast.lane.b32.xlu0 %v1320, 256
      %v1323 = vpop.permute.xlu0 %1322
      %v1324 = vlaneseq
      %v1325 = vshrl.u32 %v1324, 7
      %v1326 = vsub.s32 6, %v1325
      %v1327 = vrot.slane %v660, %v1326
      %1329 = vbcast.lane.b32.xlu0 %v1327, 256
      %v1330 = vpop.permute.xlu0 %1329
      %v1331 = vlaneseq
      %v1332 = vshrl.u32 %v1331, 7
      %v1333 = vsub.s32 7, %v1332
      %v1334 = vrot.slane %v660, %v1333
      %1336 = vbcast.lane.b32.xlu0 %v1334, 256
      %v1337 = vpop.permute.xlu0 %1336
      %v1338 = vlaneseq
      %v1339 = vshrl.u32 %v1338, 7
      %v1340 = vsub.s32 0, %v1339
      %v1341 = vrot.slane %v661, %v1340
      %1343 = vbcast.lane.b32.xlu0 %v1341, 256
      %v1344 = vpop.permute.xlu0 %1343
      %v1345 = vlaneseq
      %v1346 = vshrl.u32 %v1345, 7
      %v1347 = vsub.s32 1, %v1346
      %v1348 = vrot.slane %v661, %v1347
      %1350 = vbcast.lane.b32.xlu0 %v1348, 256
      %v1351 = vpop.permute.xlu0 %1350
      %v1352 = vlaneseq
      %v1353 = vshrl.u32 %v1352, 7
      %v1354 = vsub.s32 2, %v1353
      %v1355 = vrot.slane %v661, %v1354
      %1357 = vbcast.lane.b32.xlu0 %v1355, 256
      %v1358 = vpop.permute.xlu0 %1357
      %v1359 = vlaneseq
      %v1360 = vshrl.u32 %v1359, 7
      %v1361 = vsub.s32 3, %v1360
      %v1362 = vrot.slane %v661, %v1361
      %1364 = vbcast.lane.b32.xlu0 %v1362, 256
      %v1365 = vpop.permute.xlu0 %1364
      %v1366 = vlaneseq
      %v1367 = vshrl.u32 %v1366, 7
      %v1368 = vsub.s32 4, %v1367
      %v1369 = vrot.slane %v661, %v1368
      %1371 = vbcast.lane.b32.xlu0 %v1369, 256
      %v1372 = vpop.permute.xlu0 %1371
      %v1373 = vlaneseq
      %v1374 = vshrl.u32 %v1373, 7
      %v1375 = vsub.s32 5, %v1374
      %v1376 = vrot.slane %v661, %v1375
      %1378 = vbcast.lane.b32.xlu0 %v1376, 256
      %v1379 = vpop.permute.xlu0 %1378
      %v1380 = vlaneseq
      %v1381 = vshrl.u32 %v1380, 7
      %v1382 = vsub.s32 6, %v1381
      %v1383 = vrot.slane %v661, %v1382
      %1385 = vbcast.lane.b32.xlu0 %v1383, 256
      %v1386 = vpop.permute.xlu0 %1385
      %v1387 = vlaneseq
      %v1388 = vshrl.u32 %v1387, 7
      %v1389 = vsub.s32 7, %v1388
      %v1390 = vrot.slane %v661, %v1389
      %1392 = vbcast.lane.b32.xlu0 %v1390, 256
      %v1393 = vpop.permute.xlu0 %1392
      %v1394 = vld [vmem:[%s7] sm:$0x1]
      %v1396 = vlaneseq
      %v1397 = vshrl.u32 %v1396, 7
      %v1398 = vsub.s32 0, %v1397
      %v1399 = vrot.slane %v1394, %v1398
      %v1401 = vmul.f32 %v1288, %v1399
      %v1402 = vmul.f32 %v1295, %v1399
      %v1403 = vmul.f32 %v1302, %v1399
      %v1404 = vmul.f32 %v1309, %v1399
      %v1405 = vmul.f32 %v1316, %v1399
      %v1406 = vmul.f32 %v1323, %v1399
      %v1407 = vmul.f32 %v1330, %v1399
      %v1408 = vmul.f32 %v1337, %v1399
      %v1409 = vmul.f32 %v1344, %v1399
      %v1410 = vmul.f32 %v1351, %v1399
      %v1411 = vmul.f32 %v1358, %v1399
      %v1412 = vmul.f32 %v1365, %v1399
      %v1413 = vmul.f32 %v1372, %v1399
      %v1414 = vmul.f32 %v1379, %v1399
      %v1415 = vmul.f32 %v1386, %v1399
      %v1416 = vmul.f32 %v1393, %v1399
      %v1417 = vld [vmem:[%s8] sm:$0x1]
      %v1419 = vlaneseq
      %v1420 = vshrl.u32 %v1419, 7
      %v1421 = vsub.s32 0, %v1420
      %v1422 = vrot.slane %v1417, %v1421
      %v1424 = vmul.f32 %v1266, %v1422
      %v1425 = vmul.f32 %v1267, %v1422
      %v1426 = vmul.f32 %v1268, %v1422
      %v1427 = vmul.f32 %v1269, %v1422
      %v1428 = vmul.f32 %v1270, %v1422
      %v1429 = vmul.f32 %v1271, %v1422
      %v1430 = vmul.f32 %v1272, %v1422
      %v1431 = vmul.f32 %v1273, %v1422
      %v1432 = vmul.f32 %v1274, %v1422
      %v1433 = vmul.f32 %v1275, %v1422
      %v1434 = vmul.f32 %v1276, %v1422
      %v1435 = vmul.f32 %v1277, %v1422
      %v1436 = vmul.f32 %v1278, %v1422
      %v1437 = vmul.f32 %v1279, %v1422
      %v1438 = vmul.f32 %v1280, %v1422
      %v1439 = vmul.f32 %v1281, %v1422
      %v1440 = vadd.f32 %v1401, %v1424
      %v1441 = vadd.f32 %v1402, %v1425
      %v1442 = vadd.f32 %v1403, %v1426
      %v1443 = vadd.f32 %v1404, %v1427
      %v1444 = vadd.f32 %v1405, %v1428
      %v1445 = vadd.f32 %v1406, %v1429
      %v1446 = vadd.f32 %v1407, %v1430
      %v1447 = vadd.f32 %v1408, %v1431
      %v1448 = vadd.f32 %v1409, %v1432
      %v1449 = vadd.f32 %v1410, %v1433
      %v1450 = vadd.f32 %v1411, %v1434
      %v1451 = vadd.f32 %v1412, %v1435
      %v1452 = vadd.f32 %v1413, %v1436
      %v1453 = vadd.f32 %v1414, %v1437
      %v1454 = vadd.f32 %v1415, %v1438
      %v1455 = vadd.f32 %v1416, %v1439
      %v1456 = vld [vmem:[%s9] sm:$0xff]
      %v1458 = vsel %vm1152, %v642, 0
      %v1461 = vsel %vm1152, %v643, 0
      %v1464 = vsel %vm1152, %v644, 0
      %v1467 = vsel %vm1152, %v645, 0
      %v1470 = vsel %vm1152, %v646, 0
      %v1473 = vsel %vm1152, %v647, 0
      %v1476 = vsel %vm1152, %v648, 0
      %v1479 = vsel %vm1152, %v649, 0
      %v1482 = vsel %vm1152, %v650, 0
      %v1485 = vsel %vm1152, %v651, 0
      %v1488 = vsel %vm1152, %v652, 0
      %v1491 = vsel %vm1152, %v653, 0
      %v1494 = vsel %vm1152, %v654, 0
      %v1497 = vsel %vm1152, %v655, 0
      %v1500 = vsel %vm1152, %v656, 0
      %v1503 = vsel %vm1152, %v657, 0
      %1505 = vmatprep.subr.mxu0 0.0
      %1506 = vmatpush1.msra.mxu0 0.0
      %1507 = vmatprep.subr.mxu0 0.0
      %1508 = vmatpush1.msra.mxu0 0.0
      %1509 = vmatprep.subr.mxu0 0.0
      %1510 = vmatpush1.msra.mxu0 0.0
      %1511 = vmatprep.subr.mxu0 0.0
      %1512 = vmatpush1.msra.mxu0 0.0
      %1513 = vmatprep.subr.mxu0 0.0
      %1514 = vmatpush1.msra.mxu0 0.0
      %1515 = vmatprep.subr.mxu0 0.0
      %1516 = vmatpush1.msra.mxu0 0.0
      %1517 = vmatprep.subr.mxu0 0.0
      %1518 = vmatpush1.msra.mxu0 0.0
      %1519 = vmatprep.subr.mxu0 0.0
      %1520 = vmatpush1.msra.mxu0 0.0
      %1521 = vmatprep.subr.mxu0 0.0
      %1522 = vmatpush1.msra.mxu0 0.0
      %1523 = vmatprep.subr.mxu0 0.0
      %1524 = vmatpush1.msra.mxu0 0.0
      %1525 = vmatprep.subr.mxu0 0.0
      %1526 = vmatpush1.msra.mxu0 0.0
      %1527 = vmatprep.subr.mxu0 0.0
      %1528 = vmatpush1.msra.mxu0 0.0
      %1529 = vmatprep.subr.mxu0 0.0
      %1530 = vmatpush1.msra.mxu0 0.0
      %1531 = vmatprep.subr.mxu0 0.0
      %1532 = vmatpush1.msra.mxu0 0.0
      %1533 = vmatprep.subr.mxu0 0.0
      %1534 = vmatpush1.msra.mxu0 0.0
      %1535 = vmatprep.subr.mxu0 0.0
      %1536 = vmatpush1.msra.mxu0 %v1456
      %1537 = vmatprep.subr.mxu0 0.0
      %1538 = vmatpush2.msra.mxu0 0.0
      %1539 = vmatprep.subr.mxu0 0.0
      %1540 = vmatpush2.msra.mxu0 0.0
      %1541 = vmatprep.subr.mxu0 0.0
      %1542 = vmatpush2.msra.mxu0 0.0
      %1543 = vmatprep.subr.mxu0 0.0
      %1544 = vmatpush2.msra.mxu0 0.0
      %1545 = vmatprep.subr.mxu0 0.0
      %1546 = vmatpush2.msra.mxu0 0.0
      %1547 = vmatprep.subr.mxu0 0.0
      %1548 = vmatpush2.msra.mxu0 0.0
      %1549 = vmatprep.subr.mxu0 0.0
      %1550 = vmatpush2.msra.mxu0 0.0
      %1551 = vmatprep.subr.mxu0 0.0
      %1552 = vmatpush2.msra.mxu0 0.0
      %1553 = vmatprep.subr.mxu0 0.0
      %1554 = vmatpush2.msra.mxu0 0.0
      %1555 = vmatprep.subr.mxu0 0.0
      %1556 = vmatpush2.msra.mxu0 0.0
      %1557 = vmatprep.subr.mxu0 0.0
      %1558 = vmatpush2.msra.mxu0 0.0
      %1559 = vmatprep.subr.mxu0 0.0
      %1560 = vmatpush2.msra.mxu0 0.0
      %1561 = vmatprep.subr.mxu0 0.0
      %1562 = vmatpush2.msra.mxu0 0.0
      %1563 = vmatprep.subr.mxu0 0.0
      %1564 = vmatpush2.msra.mxu0 0.0
      %1565 = vmatprep.subr.mxu0 0.0
      %1566 = vmatpush2.msra.mxu0 0.0
      %1567 = vmatprep.subr.mxu0 0.0
      %1568 = vmatpush2.msra.mxu0 0.0
      %1569 = vmatprep.mubr.f32.mxu0 0.0
      %1570 = vmatmul.mubr.f32.gmra.mxu0 %v1458
      %v1571 = vpop.f32.mrf.mxu0
      %v1572 = vadd.f32 0.0, %v1571
      %v1573 = vpop.f32.mrf.mxu0
      %1574 = vmatprep.mubr.f32.mxu0 0.0
      %1575 = vmatmul.mubr.f32.gmra.mxu0 %v1461
      %v1576 = vpop.f32.mrf.mxu0
      %v1577 = vadd.f32 0.0, %v1576
      %v1578 = vpop.f32.mrf.mxu0
      %1579 = vmatprep.mubr.f32.mxu0 0.0
      %1580 = vmatmul.mubr.f32.gmra.mxu0 %v1464
      %v1581 = vpop.f32.mrf.mxu0
      %v1582 = vadd.f32 0.0, %v1581
      %v1583 = vpop.f32.mrf.mxu0
      %1584 = vmatprep.mubr.f32.mxu0 0.0
      %1585 = vmatmul.mubr.f32.gmra.mxu0 %v1467
      %v1586 = vpop.f32.mrf.mxu0
      %v1587 = vadd.f32 0.0, %v1586
      %v1588 = vpop.f32.mrf.mxu0
      %1589 = vmatprep.mubr.f32.mxu0 0.0
      %1590 = vmatmul.mubr.f32.gmra.mxu0 %v1470
      %v1591 = vpop.f32.mrf.mxu0
      %v1592 = vadd.f32 0.0, %v1591
      %v1593 = vpop.f32.mrf.mxu0
      %1594 = vmatprep.mubr.f32.mxu0 0.0
      %1595 = vmatmul.mubr.f32.gmra.mxu0 %v1473
      %v1596 = vpop.f32.mrf.mxu0
      %v1597 = vadd.f32 0.0, %v1596
      %v1598 = vpop.f32.mrf.mxu0
      %1599 = vmatprep.mubr.f32.mxu0 0.0
      %1600 = vmatmul.mubr.f32.gmra.mxu0 %v1476
      %v1601 = vpop.f32.mrf.mxu0
      %v1602 = vadd.f32 0.0, %v1601
      %v1603 = vpop.f32.mrf.mxu0
      %1604 = vmatprep.mubr.f32.mxu0 0.0
      %1605 = vmatmul.mubr.f32.gmra.mxu0 %v1479
      %v1606 = vpop.f32.mrf.mxu0
      %v1607 = vadd.f32 0.0, %v1606
      %v1608 = vpop.f32.mrf.mxu0
      %1609 = vmatprep.mubr.f32.mxu0 0.0
      %1610 = vmatmul.mubr.f32.gmra.mxu0 %v1482
      %v1611 = vpop.f32.mrf.mxu0
      %v1612 = vadd.f32 0.0, %v1611
      %v1613 = vpop.f32.mrf.mxu0
      %1614 = vmatprep.mubr.f32.mxu0 0.0
      %1615 = vmatmul.mubr.f32.gmra.mxu0 %v1485
      %v1616 = vpop.f32.mrf.mxu0
      %v1617 = vadd.f32 0.0, %v1616
      %v1618 = vpop.f32.mrf.mxu0
      %1619 = vmatprep.mubr.f32.mxu0 0.0
      %1620 = vmatmul.mubr.f32.gmra.mxu0 %v1488
      %v1621 = vpop.f32.mrf.mxu0
      %v1622 = vadd.f32 0.0, %v1621
      %v1623 = vpop.f32.mrf.mxu0
      %1624 = vmatprep.mubr.f32.mxu0 0.0
      %1625 = vmatmul.mubr.f32.gmra.mxu0 %v1491
      %v1626 = vpop.f32.mrf.mxu0
      %v1627 = vadd.f32 0.0, %v1626
      %v1628 = vpop.f32.mrf.mxu0
      %1629 = vmatprep.mubr.f32.mxu0 0.0
      %1630 = vmatmul.mubr.f32.gmra.mxu0 %v1494
      %v1631 = vpop.f32.mrf.mxu0
      %v1632 = vadd.f32 0.0, %v1631
      %v1633 = vpop.f32.mrf.mxu0
      %1634 = vmatprep.mubr.f32.mxu0 0.0
      %1635 = vmatmul.mubr.f32.gmra.mxu0 %v1497
      %v1636 = vpop.f32.mrf.mxu0
      %v1637 = vadd.f32 0.0, %v1636
      %v1638 = vpop.f32.mrf.mxu0
      %1639 = vmatprep.mubr.f32.mxu0 0.0
      %1640 = vmatmul.mubr.f32.gmra.mxu0 %v1500
      %v1641 = vpop.f32.mrf.mxu0
      %v1642 = vadd.f32 0.0, %v1641
      %v1643 = vpop.f32.mrf.mxu0
      %1644 = vmatprep.mubr.f32.mxu0 0.0
      %1645 = vmatmul.mubr.f32.gmra.mxu0 %v1503
      %v1646 = vpop.f32.mrf.mxu0
      %v1647 = vadd.f32 0.0, %v1646
      %v1648 = vpop.f32.mrf.mxu0
      %1649 = vdwg.mxu0
      %v1650 = vadd.f32 %v1440, %v1572
      %v1651 = vadd.f32 %v1441, %v1577
      %v1652 = vadd.f32 %v1442, %v1582
      %v1653 = vadd.f32 %v1443, %v1587
      %v1654 = vadd.f32 %v1444, %v1592
      %v1655 = vadd.f32 %v1445, %v1597
      %v1656 = vadd.f32 %v1446, %v1602
      %v1657 = vadd.f32 %v1447, %v1607
      %v1658 = vadd.f32 %v1448, %v1612
      %v1659 = vadd.f32 %v1449, %v1617
      %v1660 = vadd.f32 %v1450, %v1622
      %v1661 = vadd.f32 %v1451, %v1627
      %v1662 = vadd.f32 %v1452, %v1632
      %v1663 = vadd.f32 %v1453, %v1637
      %v1664 = vadd.f32 %v1454, %v1642
      %v1665 = vadd.f32 %v1455, %v1647
      %v1666 = vld [vmem:[%s10] sm:$0xff]
      %v1668 = vsel %vm1152, %v924, 0
      %v1671 = vsel %vm1152, %v925, 0
      %v1674 = vsel %vm1152, %v926, 0
      %v1677 = vsel %vm1152, %v927, 0
      %v1680 = vsel %vm1152, %v928, 0
      %v1683 = vsel %vm1152, %v929, 0
      %v1686 = vsel %vm1152, %v930, 0
      %v1689 = vsel %vm1152, %v931, 0
      %v1692 = vsel %vm1152, %v932, 0
      %v1695 = vsel %vm1152, %v933, 0
      %v1698 = vsel %vm1152, %v934, 0
      %v1701 = vsel %vm1152, %v935, 0
      %v1704 = vsel %vm1152, %v936, 0
      %v1707 = vsel %vm1152, %v937, 0
      %v1710 = vsel %vm1152, %v938, 0
      %v1713 = vsel %vm1152, %v939, 0
      %1715 = vmatprep.subr.mxu0 0.0
      %1716 = vmatpush1.msra.mxu0 0.0
      %1717 = vmatprep.subr.mxu0 0.0
      %1718 = vmatpush1.msra.mxu0 0.0
      %1719 = vmatprep.subr.mxu0 0.0
      %1720 = vmatpush1.msra.mxu0 0.0
      %1721 = vmatprep.subr.mxu0 0.0
      %1722 = vmatpush1.msra.mxu0 0.0
      %1723 = vmatprep.subr.mxu0 0.0
      %1724 = vmatpush1.msra.mxu0 0.0
      %1725 = vmatprep.subr.mxu0 0.0
      %1726 = vmatpush1.msra.mxu0 0.0
      %1727 = vmatprep.subr.mxu0 0.0
      %1728 = vmatpush1.msra.mxu0 0.0
      %1729 = vmatprep.subr.mxu0 0.0
      %1730 = vmatpush1.msra.mxu0 0.0
      %1731 = vmatprep.subr.mxu0 0.0
      %1732 = vmatpush1.msra.mxu0 0.0
      %1733 = vmatprep.subr.mxu0 0.0
      %1734 = vmatpush1.msra.mxu0 0.0
      %1735 = vmatprep.subr.mxu0 0.0
      %1736 = vmatpush1.msra.mxu0 0.0
      %1737 = vmatprep.subr.mxu0 0.0
      %1738 = vmatpush1.msra.mxu0 0.0
      %1739 = vmatprep.subr.mxu0 0.0
      %1740 = vmatpush1.msra.mxu0 0.0
      %1741 = vmatprep.subr.mxu0 0.0
      %1742 = vmatpush1.msra.mxu0 0.0
      %1743 = vmatprep.subr.mxu0 0.0
      %1744 = vmatpush1.msra.mxu0 0.0
      %1745 = vmatprep.subr.mxu0 0.0
      %1746 = vmatpush1.msra.mxu0 %v1666
      %1747 = vmatprep.subr.mxu0 0.0
      %1748 = vmatpush2.msra.mxu0 0.0
      %1749 = vmatprep.subr.mxu0 0.0
      %1750 = vmatpush2.msra.mxu0 0.0
      %1751 = vmatprep.subr.mxu0 0.0
      %1752 = vmatpush2.msra.mxu0 0.0
      %1753 = vmatprep.subr.mxu0 0.0
      %1754 = vmatpush2.msra.mxu0 0.0
      %1755 = vmatprep.subr.mxu0 0.0
      %1756 = vmatpush2.msra.mxu0 0.0
      %1757 = vmatprep.subr.mxu0 0.0
      %1758 = vmatpush2.msra.mxu0 0.0
      %1759 = vmatprep.subr.mxu0 0.0
      %1760 = vmatpush2.msra.mxu0 0.0
      %1761 = vmatprep.subr.mxu0 0.0
      %1762 = vmatpush2.msra.mxu0 0.0
      %1763 = vmatprep.subr.mxu0 0.0
      %1764 = vmatpush2.msra.mxu0 0.0
      %1765 = vmatprep.subr.mxu0 0.0
      %1766 = vmatpush2.msra.mxu0 0.0
      %1767 = vmatprep.subr.mxu0 0.0
      %1768 = vmatpush2.msra.mxu0 0.0
      %1769 = vmatprep.subr.mxu0 0.0
      %1770 = vmatpush2.msra.mxu0 0.0
      %1771 = vmatprep.subr.mxu0 0.0
      %1772 = vmatpush2.msra.mxu0 0.0
      %1773 = vmatprep.subr.mxu0 0.0
      %1774 = vmatpush2.msra.mxu0 0.0
      %1775 = vmatprep.subr.mxu0 0.0
      %1776 = vmatpush2.msra.mxu0 0.0
      %1777 = vmatprep.subr.mxu0 0.0
      %1778 = vmatpush2.msra.mxu0 0.0
      %1779 = vmatprep.mubr.f32.mxu0 0.0
      %1780 = vmatmul.mubr.f32.gmra.mxu0 %v1668
      %v1781 = vpop.f32.mrf.mxu0
      %v1782 = vadd.f32 0.0, %v1781
      %v1783 = vpop.f32.mrf.mxu0
      %1784 = vmatprep.mubr.f32.mxu0 0.0
      %1785 = vmatmul.mubr.f32.gmra.mxu0 %v1671
      %v1786 = vpop.f32.mrf.mxu0
      %v1787 = vadd.f32 0.0, %v1786
      %v1788 = vpop.f32.mrf.mxu0
      %1789 = vmatprep.mubr.f32.mxu0 0.0
      %1790 = vmatmul.mubr.f32.gmra.mxu0 %v1674
      %v1791 = vpop.f32.mrf.mxu0
      %v1792 = vadd.f32 0.0, %v1791
      %v1793 = vpop.f32.mrf.mxu0
      %1794 = vmatprep.mubr.f32.mxu0 0.0
      %1795 = vmatmul.mubr.f32.gmra.mxu0 %v1677
      %v1796 = vpop.f32.mrf.mxu0
      %v1797 = vadd.f32 0.0, %v1796
      %v1798 = vpop.f32.mrf.mxu0
      %1799 = vmatprep.mubr.f32.mxu0 0.0
      %1800 = vmatmul.mubr.f32.gmra.mxu0 %v1680
      %v1801 = vpop.f32.mrf.mxu0
      %v1802 = vadd.f32 0.0, %v1801
      %v1803 = vpop.f32.mrf.mxu0
      %1804 = vmatprep.mubr.f32.mxu0 0.0
      %1805 = vmatmul.mubr.f32.gmra.mxu0 %v1683
      %v1806 = vpop.f32.mrf.mxu0
      %v1807 = vadd.f32 0.0, %v1806
      %v1808 = vpop.f32.mrf.mxu0
      %1809 = vmatprep.mubr.f32.mxu0 0.0
      %1810 = vmatmul.mubr.f32.gmra.mxu0 %v1686
      %v1811 = vpop.f32.mrf.mxu0
      %v1812 = vadd.f32 0.0, %v1811
      %v1813 = vpop.f32.mrf.mxu0
      %1814 = vmatprep.mubr.f32.mxu0 0.0
      %1815 = vmatmul.mubr.f32.gmra.mxu0 %v1689
      %v1816 = vpop.f32.mrf.mxu0
      %v1817 = vadd.f32 0.0, %v1816
      %v1818 = vpop.f32.mrf.mxu0
      %1819 = vmatprep.mubr.f32.mxu0 0.0
      %1820 = vmatmul.mubr.f32.gmra.mxu0 %v1692
      %v1821 = vpop.f32.mrf.mxu0
      %v1822 = vadd.f32 0.0, %v1821
      %v1823 = vpop.f32.mrf.mxu0
      %1824 = vmatprep.mubr.f32.mxu0 0.0
      %1825 = vmatmul.mubr.f32.gmra.mxu0 %v1695
      %v1826 = vpop.f32.mrf.mxu0
      %v1827 = vadd.f32 0.0, %v1826
      %v1828 = vpop.f32.mrf.mxu0
      %1829 = vmatprep.mubr.f32.mxu0 0.0
      %1830 = vmatmul.mubr.f32.gmra.mxu0 %v1698
      %v1831 = vpop.f32.mrf.mxu0
      %v1832 = vadd.f32 0.0, %v1831
      %v1833 = vpop.f32.mrf.mxu0
      %1834 = vmatprep.mubr.f32.mxu0 0.0
      %1835 = vmatmul.mubr.f32.gmra.mxu0 %v1701
      %v1836 = vpop.f32.mrf.mxu0
      %v1837 = vadd.f32 0.0, %v1836
      %v1838 = vpop.f32.mrf.mxu0
      %1839 = vmatprep.mubr.f32.mxu0 0.0
      %1840 = vmatmul.mubr.f32.gmra.mxu0 %v1704
      %v1841 = vpop.f32.mrf.mxu0
      %v1842 = vadd.f32 0.0, %v1841
      %v1843 = vpop.f32.mrf.mxu0
      %1844 = vmatprep.mubr.f32.mxu0 0.0
      %1845 = vmatmul.mubr.f32.gmra.mxu0 %v1707
      %v1846 = vpop.f32.mrf.mxu0
      %v1847 = vadd.f32 0.0, %v1846
      %v1848 = vpop.f32.mrf.mxu0
      %1849 = vmatprep.mubr.f32.mxu0 0.0
      %1850 = vmatmul.mubr.f32.gmra.mxu0 %v1710
      %v1851 = vpop.f32.mrf.mxu0
      %v1852 = vadd.f32 0.0, %v1851
      %v1853 = vpop.f32.mrf.mxu0
      %1854 = vmatprep.mubr.f32.mxu0 0.0
      %1855 = vmatmul.mubr.f32.gmra.mxu0 %v1713
      %v1856 = vpop.f32.mrf.mxu0
      %v1857 = vadd.f32 0.0, %v1856
      %v1858 = vpop.f32.mrf.mxu0
      %1859 = vdwg.mxu0
      %v1860 = vadd.f32 %v1650, %v1782
      %v1861 = vadd.f32 %v1651, %v1787
      %v1862 = vadd.f32 %v1652, %v1792
      %v1863 = vadd.f32 %v1653, %v1797
      %v1864 = vadd.f32 %v1654, %v1802
      %v1865 = vadd.f32 %v1655, %v1807
      %v1866 = vadd.f32 %v1656, %v1812
      %v1867 = vadd.f32 %v1657, %v1817
      %v1868 = vadd.f32 %v1658, %v1822
      %v1869 = vadd.f32 %v1659, %v1827
      %v1870 = vadd.f32 %v1660, %v1832
      %v1871 = vadd.f32 %v1661, %v1837
      %v1872 = vadd.f32 %v1662, %v1842
      %v1873 = vadd.f32 %v1663, %v1847
      %v1874 = vadd.f32 %v1664, %v1852
      %v1875 = vadd.f32 %v1665, %v1857
      %vm1876 = vcmask 130048
      %v1877 = vsel %vm1876, %v1860, -inf
      %v1878 = vrot.slane %v1877, 4
      %v1879 = vmax.f32 %v1877, %v1878
      %v1880 = vrot.slane %v1879, 2
      %v1881 = vmax.f32 %v1879, %v1880
      %v1882 = vrot.slane %v1881, 1
      %v1883 = vmax.f32 %v1881, %v1882
      %v1884 = vsel %vm1876, %v1861, -inf
      %v1885 = vrot.slane %v1884, 4
      %v1886 = vmax.f32 %v1884, %v1885
      %v1887 = vrot.slane %v1886, 2
      %v1888 = vmax.f32 %v1886, %v1887
      %v1889 = vrot.slane %v1888, 1
      %v1890 = vmax.f32 %v1888, %v1889
      %v1891 = vsel %vm1876, %v1862, -inf
      %v1892 = vrot.slane %v1891, 4
      %v1893 = vmax.f32 %v1891, %v1892
      %v1894 = vrot.slane %v1893, 2
      %v1895 = vmax.f32 %v1893, %v1894
      %v1896 = vrot.slane %v1895, 1
      %v1897 = vmax.f32 %v1895, %v1896
      %v1898 = vsel %vm1876, %v1863, -inf
      %v1899 = vrot.slane %v1898, 4
      %v1900 = vmax.f32 %v1898, %v1899
      %v1901 = vrot.slane %v1900, 2
      %v1902 = vmax.f32 %v1900, %v1901
      %v1903 = vrot.slane %v1902, 1
      %v1904 = vmax.f32 %v1902, %v1903
      %v1905 = vsel %vm1876, %v1864, -inf
      %v1906 = vrot.slane %v1905, 4
      %v1907 = vmax.f32 %v1905, %v1906
      %v1908 = vrot.slane %v1907, 2
      %v1909 = vmax.f32 %v1907, %v1908
      %v1910 = vrot.slane %v1909, 1
      %v1911 = vmax.f32 %v1909, %v1910
      %v1912 = vsel %vm1876, %v1865, -inf
      %v1913 = vrot.slane %v1912, 4
      %v1914 = vmax.f32 %v1912, %v1913
      %v1915 = vrot.slane %v1914, 2
      %v1916 = vmax.f32 %v1914, %v1915
      %v1917 = vrot.slane %v1916, 1
      %v1918 = vmax.f32 %v1916, %v1917
      %v1919 = vsel %vm1876, %v1866, -inf
      %v1920 = vrot.slane %v1919, 4
      %v1921 = vmax.f32 %v1919, %v1920
      %v1922 = vrot.slane %v1921, 2
      %v1923 = vmax.f32 %v1921, %v1922
      %v1924 = vrot.slane %v1923, 1
      %v1925 = vmax.f32 %v1923, %v1924
      %v1926 = vsel %vm1876, %v1867, -inf
      %v1927 = vrot.slane %v1926, 4
      %v1928 = vmax.f32 %v1926, %v1927
      %v1929 = vrot.slane %v1928, 2
      %v1930 = vmax.f32 %v1928, %v1929
      %v1931 = vrot.slane %v1930, 1
      %v1932 = vmax.f32 %v1930, %v1931
      %v1933 = vsel %vm1876, %v1868, -inf
      %v1934 = vrot.slane %v1933, 4
      %v1935 = vmax.f32 %v1933, %v1934
      %v1936 = vrot.slane %v1935, 2
      %v1937 = vmax.f32 %v1935, %v1936
      %v1938 = vrot.slane %v1937, 1
      %v1939 = vmax.f32 %v1937, %v1938
      %v1940 = vsel %vm1876, %v1869, -inf
      %v1941 = vrot.slane %v1940, 4
      %v1942 = vmax.f32 %v1940, %v1941
      %v1943 = vrot.slane %v1942, 2
      %v1944 = vmax.f32 %v1942, %v1943
      %v1945 = vrot.slane %v1944, 1
      %v1946 = vmax.f32 %v1944, %v1945
      %v1947 = vsel %vm1876, %v1870, -inf
      %v1948 = vrot.slane %v1947, 4
      %v1949 = vmax.f32 %v1947, %v1948
      %v1950 = vrot.slane %v1949, 2
      %v1951 = vmax.f32 %v1949, %v1950
      %v1952 = vrot.slane %v1951, 1
      %v1953 = vmax.f32 %v1951, %v1952
      %v1954 = vsel %vm1876, %v1871, -inf
      %v1955 = vrot.slane %v1954, 4
      %v1956 = vmax.f32 %v1954, %v1955
      %v1957 = vrot.slane %v1956, 2
      %v1958 = vmax.f32 %v1956, %v1957
      %v1959 = vrot.slane %v1958, 1
      %v1960 = vmax.f32 %v1958, %v1959
      %v1961 = vsel %vm1876, %v1872, -inf
      %v1962 = vrot.slane %v1961, 4
      %v1963 = vmax.f32 %v1961, %v1962
      %v1964 = vrot.slane %v1963, 2
      %v1965 = vmax.f32 %v1963, %v1964
      %v1966 = vrot.slane %v1965, 1
      %v1967 = vmax.f32 %v1965, %v1966
      %v1968 = vsel %vm1876, %v1873, -inf
      %v1969 = vrot.slane %v1968, 4
      %v1970 = vmax.f32 %v1968, %v1969
      %v1971 = vrot.slane %v1970, 2
      %v1972 = vmax.f32 %v1970, %v1971
      %v1973 = vrot.slane %v1972, 1
      %v1974 = vmax.f32 %v1972, %v1973
      %v1975 = vsel %vm1876, %v1874, -inf
      %v1976 = vrot.slane %v1975, 4
      %v1977 = vmax.f32 %v1975, %v1976
      %v1978 = vrot.slane %v1977, 2
      %v1979 = vmax.f32 %v1977, %v1978
      %v1980 = vrot.slane %v1979, 1
      %v1981 = vmax.f32 %v1979, %v1980
      %v1982 = vsel %vm1876, %v1875, -inf
      %v1983 = vrot.slane %v1982, 4
      %v1984 = vmax.f32 %v1982, %v1983
      %v1985 = vrot.slane %v1984, 2
      %v1986 = vmax.f32 %v1984, %v1985
      %v1987 = vrot.slane %v1986, 1
      %v1988 = vmax.f32 %v1986, %v1987
      %v1989 = vsub.f32 %v1860, %v1883
      %v1990 = vsub.f32 %v1861, %v1890
      %v1991 = vsub.f32 %v1862, %v1897
      %v1992 = vsub.f32 %v1863, %v1904
      %v1993 = vsub.f32 %v1864, %v1911
      %v1994 = vsub.f32 %v1865, %v1918
      %v1995 = vsub.f32 %v1866, %v1925
      %v1996 = vsub.f32 %v1867, %v1932
      %v1997 = vsub.f32 %v1868, %v1939
      %v1998 = vsub.f32 %v1869, %v1946
      %v1999 = vsub.f32 %v1870, %v1953
      %v2000 = vsub.f32 %v1871, %v1960
      %v2001 = vsub.f32 %v1872, %v1967
      %v2002 = vsub.f32 %v1873, %v1974
      %v2003 = vsub.f32 %v1874, %v1981
      %v2004 = vsub.f32 %v1875, %v1988
      %v2005 = vmul.f32 %v1989, 1.442695
      %v2006 = vpow.pop %v2005
      %v2007 = vmul.f32 %v1990, 1.442695
      %v2008 = vpow.pop %v2007
      %v2009 = vmul.f32 %v1991, 1.442695
      %v2010 = vpow.pop %v2009
      %v2011 = vmul.f32 %v1992, 1.442695
      %v2012 = vpow.pop %v2011
      %v2013 = vmul.f32 %v1993, 1.442695
      %v2014 = vpow.pop %v2013
      %v2015 = vmul.f32 %v1994, 1.442695
      %v2016 = vpow.pop %v2015
      %v2017 = vmul.f32 %v1995, 1.442695
      %v2018 = vpow.pop %v2017
      %v2019 = vmul.f32 %v1996, 1.442695
      %v2020 = vpow.pop %v2019
      %v2021 = vmul.f32 %v1997, 1.442695
      %v2022 = vpow.pop %v2021
      %v2023 = vmul.f32 %v1998, 1.442695
      %v2024 = vpow.pop %v2023
      %v2025 = vmul.f32 %v1999, 1.442695
      %v2026 = vpow.pop %v2025
      %v2027 = vmul.f32 %v2000, 1.442695
      %v2028 = vpow.pop %v2027
      %v2029 = vmul.f32 %v2001, 1.442695
      %v2030 = vpow.pop %v2029
      %v2031 = vmul.f32 %v2002, 1.442695
      %v2032 = vpow.pop %v2031
      %v2033 = vmul.f32 %v2003, 1.442695
      %v2034 = vpow.pop %v2033
      %v2035 = vmul.f32 %v2004, 1.442695
      %v2036 = vpow.pop %v2035
      %v2037 = vsel %vm1876, %v2006, 0.0
      %v2038 = vrot.slane %v2037, 4
      %v2039 = vadd.f32 %v2037, %v2038
      %v2040 = vrot.slane %v2039, 2
      %v2041 = vadd.f32 %v2039, %v2040
      %v2042 = vrot.slane %v2041, 1
      %v2043 = vadd.f32 %v2041, %v2042
      %v2044 = vsel %vm1876, %v2008, 0.0
      %v2045 = vrot.slane %v2044, 4
      %v2046 = vadd.f32 %v2044, %v2045
      %v2047 = vrot.slane %v2046, 2
      %v2048 = vadd.f32 %v2046, %v2047
      %v2049 = vrot.slane %v2048, 1
      %v2050 = vadd.f32 %v2048, %v2049
      %v2051 = vsel %vm1876, %v2010, 0.0
      %v2052 = vrot.slane %v2051, 4
      %v2053 = vadd.f32 %v2051, %v2052
      %v2054 = vrot.slane %v2053, 2
      %v2055 = vadd.f32 %v2053, %v2054
      %v2056 = vrot.slane %v2055, 1
      %v2057 = vadd.f32 %v2055, %v2056
      %v2058 = vsel %vm1876, %v2012, 0.0
      %v2059 = vrot.slane %v2058, 4
      %v2060 = vadd.f32 %v2058, %v2059
      %v2061 = vrot.slane %v2060, 2
      %v2062 = vadd.f32 %v2060, %v2061
      %v2063 = vrot.slane %v2062, 1
      %v2064 = vadd.f32 %v2062, %v2063
      %v2065 = vsel %vm1876, %v2014, 0.0
      %v2066 = vrot.slane %v2065, 4
      %v2067 = vadd.f32 %v2065, %v2066
      %v2068 = vrot.slane %v2067, 2
      %v2069 = vadd.f32 %v2067, %v2068
      %v2070 = vrot.slane %v2069, 1
      %v2071 = vadd.f32 %v2069, %v2070
      %v2072 = vsel %vm1876, %v2016, 0.0
      %v2073 = vrot.slane %v2072, 4
      %v2074 = vadd.f32 %v2072, %v2073
      %v2075 = vrot.slane %v2074, 2
      %v2076 = vadd.f32 %v2074, %v2075
      %v2077 = vrot.slane %v2076, 1
      %v2078 = vadd.f32 %v2076, %v2077
      %v2079 = vsel %vm1876, %v2018, 0.0
      %v2080 = vrot.slane %v2079, 4
      %v2081 = vadd.f32 %v2079, %v2080
      %v2082 = vrot.slane %v2081, 2
      %v2083 = vadd.f32 %v2081, %v2082
      %v2084 = vrot.slane %v2083, 1
      %v2085 = vadd.f32 %v2083, %v2084
      %v2086 = vsel %vm1876, %v2020, 0.0
      %v2087 = vrot.slane %v2086, 4
      %v2088 = vadd.f32 %v2086, %v2087
      %v2089 = vrot.slane %v2088, 2
      %v2090 = vadd.f32 %v2088, %v2089
      %v2091 = vrot.slane %v2090, 1
      %v2092 = vadd.f32 %v2090, %v2091
      %v2093 = vsel %vm1876, %v2022, 0.0
      %v2094 = vrot.slane %v2093, 4
      %v2095 = vadd.f32 %v2093, %v2094
      %v2096 = vrot.slane %v2095, 2
      %v2097 = vadd.f32 %v2095, %v2096
      %v2098 = vrot.slane %v2097, 1
      %v2099 = vadd.f32 %v2097, %v2098
      %v2100 = vsel %vm1876, %v2024, 0.0
      %v2101 = vrot.slane %v2100, 4
      %v2102 = vadd.f32 %v2100, %v2101
      %v2103 = vrot.slane %v2102, 2
      %v2104 = vadd.f32 %v2102, %v2103
      %v2105 = vrot.slane %v2104, 1
      %v2106 = vadd.f32 %v2104, %v2105
      %v2107 = vsel %vm1876, %v2026, 0.0
      %v2108 = vrot.slane %v2107, 4
      %v2109 = vadd.f32 %v2107, %v2108
      %v2110 = vrot.slane %v2109, 2
      %v2111 = vadd.f32 %v2109, %v2110
      %v2112 = vrot.slane %v2111, 1
      %v2113 = vadd.f32 %v2111, %v2112
      %v2114 = vsel %vm1876, %v2028, 0.0
      %v2115 = vrot.slane %v2114, 4
      %v2116 = vadd.f32 %v2114, %v2115
      %v2117 = vrot.slane %v2116, 2
      %v2118 = vadd.f32 %v2116, %v2117
      %v2119 = vrot.slane %v2118, 1
      %v2120 = vadd.f32 %v2118, %v2119
      %v2121 = vsel %vm1876, %v2030, 0.0
      %v2122 = vrot.slane %v2121, 4
      %v2123 = vadd.f32 %v2121, %v2122
      %v2124 = vrot.slane %v2123, 2
      %v2125 = vadd.f32 %v2123, %v2124
      %v2126 = vrot.slane %v2125, 1
      %v2127 = vadd.f32 %v2125, %v2126
      %v2128 = vsel %vm1876, %v2032, 0.0
      %v2129 = vrot.slane %v2128, 4
      %v2130 = vadd.f32 %v2128, %v2129
      %v2131 = vrot.slane %v2130, 2
      %v2132 = vadd.f32 %v2130, %v2131
      %v2133 = vrot.slane %v2132, 1
      %v2134 = vadd.f32 %v2132, %v2133
      %v2135 = vsel %vm1876, %v2034, 0.0
      %v2136 = vrot.slane %v2135, 4
      %v2137 = vadd.f32 %v2135, %v2136
      %v2138 = vrot.slane %v2137, 2
      %v2139 = vadd.f32 %v2137, %v2138
      %v2140 = vrot.slane %v2139, 1
      %v2141 = vadd.f32 %v2139, %v2140
      %v2142 = vsel %vm1876, %v2036, 0.0
      %v2143 = vrot.slane %v2142, 4
      %v2144 = vadd.f32 %v2142, %v2143
      %v2145 = vrot.slane %v2144, 2
      %v2146 = vadd.f32 %v2144, %v2145
      %v2147 = vrot.slane %v2146, 1
      %v2148 = vadd.f32 %v2146, %v2147
      %v2149 = vrcp.pop %v2043
      %v2150 = vmul.f32 %v2006, %v2149
      %v2151 = vrcp.pop %v2050
      %v2152 = vmul.f32 %v2008, %v2151
      %v2153 = vrcp.pop %v2057
      %v2154 = vmul.f32 %v2010, %v2153
      %v2155 = vrcp.pop %v2064
      %v2156 = vmul.f32 %v2012, %v2155
      %v2157 = vrcp.pop %v2071
      %v2158 = vmul.f32 %v2014, %v2157
      %v2159 = vrcp.pop %v2078
      %v2160 = vmul.f32 %v2016, %v2159
      %v2161 = vrcp.pop %v2085
      %v2162 = vmul.f32 %v2018, %v2161
      %v2163 = vrcp.pop %v2092
      %v2164 = vmul.f32 %v2020, %v2163
      %v2165 = vrcp.pop %v2099
      %v2166 = vmul.f32 %v2022, %v2165
      %v2167 = vrcp.pop %v2106
      %v2168 = vmul.f32 %v2024, %v2167
      %v2169 = vrcp.pop %v2113
      %v2170 = vmul.f32 %v2026, %v2169
      %v2171 = vrcp.pop %v2120
      %v2172 = vmul.f32 %v2028, %v2171
      %v2173 = vrcp.pop %v2127
      %v2174 = vmul.f32 %v2030, %v2173
      %v2175 = vrcp.pop %v2134
      %v2176 = vmul.f32 %v2032, %v2175
      %v2177 = vrcp.pop %v2141
      %v2178 = vmul.f32 %v2034, %v2177
      %v2179 = vrcp.pop %v2148
      %v2180 = vmul.f32 %v2036, %v2179
      %v2181 = vmul.f32 %v642, %v2150
      %v2182 = vmul.f32 %v643, %v2152
      %v2183 = vmul.f32 %v644, %v2154
      %v2184 = vmul.f32 %v645, %v2156
      %v2185 = vmul.f32 %v646, %v2158
      %v2186 = vmul.f32 %v647, %v2160
      %v2187 = vmul.f32 %v648, %v2162
      %v2188 = vmul.f32 %v649, %v2164
      %v2189 = vmul.f32 %v650, %v2166
      %v2190 = vmul.f32 %v651, %v2168
      %v2191 = vmul.f32 %v652, %v2170
      %v2192 = vmul.f32 %v653, %v2172
      %v2193 = vmul.f32 %v654, %v2174
      %v2194 = vmul.f32 %v655, %v2176
      %v2195 = vmul.f32 %v656, %v2178
      %v2196 = vmul.f32 %v657, %v2180
      %v2197 = vsel %vm1152, %v2181, 0.0
      %v2198 = vrot.slane %v2197, 4
      %v2199 = vadd.f32 %v2197, %v2198
      %v2200 = vrot.slane %v2199, 2
      %v2201 = vadd.f32 %v2199, %v2200
      %v2202 = vrot.slane %v2201, 1
      %v2203 = vadd.f32 %v2201, %v2202
      %v2204 = vsel %vm1152, %v2182, 0.0
      %v2205 = vrot.slane %v2204, 4
      %v2206 = vadd.f32 %v2204, %v2205
      %v2207 = vrot.slane %v2206, 2
      %v2208 = vadd.f32 %v2206, %v2207
      %v2209 = vrot.slane %v2208, 1
      %v2210 = vadd.f32 %v2208, %v2209
      %v2211 = vsel %vm1152, %v2183, 0.0
      %v2212 = vrot.slane %v2211, 4
      %v2213 = vadd.f32 %v2211, %v2212
      %v2214 = vrot.slane %v2213, 2
      %v2215 = vadd.f32 %v2213, %v2214
      %v2216 = vrot.slane %v2215, 1
      %v2217 = vadd.f32 %v2215, %v2216
      %v2218 = vsel %vm1152, %v2184, 0.0
      %v2219 = vrot.slane %v2218, 4
      %v2220 = vadd.f32 %v2218, %v2219
      %v2221 = vrot.slane %v2220, 2
      %v2222 = vadd.f32 %v2220, %v2221
      %v2223 = vrot.slane %v2222, 1
      %v2224 = vadd.f32 %v2222, %v2223
      %v2225 = vsel %vm1152, %v2185, 0.0
      %v2226 = vrot.slane %v2225, 4
      %v2227 = vadd.f32 %v2225, %v2226
      %v2228 = vrot.slane %v2227, 2
      %v2229 = vadd.f32 %v2227, %v2228
      %v2230 = vrot.slane %v2229, 1
      %v2231 = vadd.f32 %v2229, %v2230
      %v2232 = vsel %vm1152, %v2186, 0.0
      %v2233 = vrot.slane %v2232, 4
      %v2234 = vadd.f32 %v2232, %v2233
      %v2235 = vrot.slane %v2234, 2
      %v2236 = vadd.f32 %v2234, %v2235
      %v2237 = vrot.slane %v2236, 1
      %v2238 = vadd.f32 %v2236, %v2237
      %v2239 = vsel %vm1152, %v2187, 0.0
      %v2240 = vrot.slane %v2239, 4
      %v2241 = vadd.f32 %v2239, %v2240
      %v2242 = vrot.slane %v2241, 2
      %v2243 = vadd.f32 %v2241, %v2242
      %v2244 = vrot.slane %v2243, 1
      %v2245 = vadd.f32 %v2243, %v2244
      %v2246 = vsel %vm1152, %v2188, 0.0
      %v2247 = vrot.slane %v2246, 4
      %v2248 = vadd.f32 %v2246, %v2247
      %v2249 = vrot.slane %v2248, 2
      %v2250 = vadd.f32 %v2248, %v2249
      %v2251 = vrot.slane %v2250, 1
      %v2252 = vadd.f32 %v2250, %v2251
      %v2253 = vsel %vm1152, %v2189, 0.0
      %v2254 = vrot.slane %v2253, 4
      %v2255 = vadd.f32 %v2253, %v2254
      %v2256 = vrot.slane %v2255, 2
      %v2257 = vadd.f32 %v2255, %v2256
      %v2258 = vrot.slane %v2257, 1
      %v2259 = vadd.f32 %v2257, %v2258
      %v2260 = vsel %vm1152, %v2190, 0.0
      %v2261 = vrot.slane %v2260, 4
      %v2262 = vadd.f32 %v2260, %v2261
      %v2263 = vrot.slane %v2262, 2
      %v2264 = vadd.f32 %v2262, %v2263
      %v2265 = vrot.slane %v2264, 1
      %v2266 = vadd.f32 %v2264, %v2265
      %v2267 = vsel %vm1152, %v2191, 0.0
      %v2268 = vrot.slane %v2267, 4
      %v2269 = vadd.f32 %v2267, %v2268
      %v2270 = vrot.slane %v2269, 2
      %v2271 = vadd.f32 %v2269, %v2270
      %v2272 = vrot.slane %v2271, 1
      %v2273 = vadd.f32 %v2271, %v2272
      %v2274 = vsel %vm1152, %v2192, 0.0
      %v2275 = vrot.slane %v2274, 4
      %v2276 = vadd.f32 %v2274, %v2275
      %v2277 = vrot.slane %v2276, 2
      %v2278 = vadd.f32 %v2276, %v2277
      %v2279 = vrot.slane %v2278, 1
      %v2280 = vadd.f32 %v2278, %v2279
      %v2281 = vsel %vm1152, %v2193, 0.0
      %v2282 = vrot.slane %v2281, 4
      %v2283 = vadd.f32 %v2281, %v2282
      %v2284 = vrot.slane %v2283, 2
      %v2285 = vadd.f32 %v2283, %v2284
      %v2286 = vrot.slane %v2285, 1
      %v2287 = vadd.f32 %v2285, %v2286
      %v2288 = vsel %vm1152, %v2194, 0.0
      %v2289 = vrot.slane %v2288, 4
      %v2290 = vadd.f32 %v2288, %v2289
      %v2291 = vrot.slane %v2290, 2
      %v2292 = vadd.f32 %v2290, %v2291
      %v2293 = vrot.slane %v2292, 1
      %v2294 = vadd.f32 %v2292, %v2293
      %v2295 = vsel %vm1152, %v2195, 0.0
      %v2296 = vrot.slane %v2295, 4
      %v2297 = vadd.f32 %v2295, %v2296
      %v2298 = vrot.slane %v2297, 2
      %v2299 = vadd.f32 %v2297, %v2298
      %v2300 = vrot.slane %v2299, 1
      %v2301 = vadd.f32 %v2299, %v2300
      %v2302 = vsel %vm1152, %v2196, 0.0
      %v2303 = vrot.slane %v2302, 4
      %v2304 = vadd.f32 %v2302, %v2303
      %v2305 = vrot.slane %v2304, 2
      %v2306 = vadd.f32 %v2304, %v2305
      %v2307 = vrot.slane %v2306, 1
      %v2308 = vadd.f32 %v2306, %v2307
      %2325 = vrot.lane.b32.xlu0 %v2150, 120
      %v2326 = vpop.permute.xlu0 %2325
      %2327 = vrot.lane.b32.xlu0 %v2152, 120
      %v2328 = vpop.permute.xlu0 %2327
      %2329 = vrot.lane.b32.xlu0 %v2154, 120
      %v2330 = vpop.permute.xlu0 %2329
      %2331 = vrot.lane.b32.xlu0 %v2156, 120
      %v2332 = vpop.permute.xlu0 %2331
      %2333 = vrot.lane.b32.xlu0 %v2158, 120
      %v2334 = vpop.permute.xlu0 %2333
      %2335 = vrot.lane.b32.xlu0 %v2160, 120
      %v2336 = vpop.permute.xlu0 %2335
      %2337 = vrot.lane.b32.xlu0 %v2162, 120
      %v2338 = vpop.permute.xlu0 %2337
      %2339 = vrot.lane.b32.xlu0 %v2164, 120
      %v2340 = vpop.permute.xlu0 %2339
      %2341 = vrot.lane.b32.xlu0 %v2166, 120
      %v2342 = vpop.permute.xlu0 %2341
      %2343 = vrot.lane.b32.xlu0 %v2168, 120
      %v2344 = vpop.permute.xlu0 %2343
      %2345 = vrot.lane.b32.xlu0 %v2170, 120
      %v2346 = vpop.permute.xlu0 %2345
      %2347 = vrot.lane.b32.xlu0 %v2172, 120
      %v2348 = vpop.permute.xlu0 %2347
      %2349 = vrot.lane.b32.xlu0 %v2174, 120
      %v2350 = vpop.permute.xlu0 %2349
      %2351 = vrot.lane.b32.xlu0 %v2176, 120
      %v2352 = vpop.permute.xlu0 %2351
      %2353 = vrot.lane.b32.xlu0 %v2178, 120
      %v2354 = vpop.permute.xlu0 %2353
      %2355 = vrot.lane.b32.xlu0 %v2180, 120
      %v2356 = vpop.permute.xlu0 %2355
      %v2373 = vmul.f32 %v924, %v2326
      %v2374 = vmul.f32 %v925, %v2328
      %v2375 = vmul.f32 %v926, %v2330
      %v2376 = vmul.f32 %v927, %v2332
      %v2377 = vmul.f32 %v928, %v2334
      %v2378 = vmul.f32 %v929, %v2336
      %v2379 = vmul.f32 %v930, %v2338
      %v2380 = vmul.f32 %v931, %v2340
      %v2381 = vmul.f32 %v932, %v2342
      %v2382 = vmul.f32 %v933, %v2344
      %v2383 = vmul.f32 %v934, %v2346
      %v2384 = vmul.f32 %v935, %v2348
      %v2385 = vmul.f32 %v936, %v2350
      %v2386 = vmul.f32 %v937, %v2352
      %v2387 = vmul.f32 %v938, %v2354
      %v2388 = vmul.f32 %v939, %v2356
      %v2389 = vsel %vm1152, %v2373, 0.0
      %v2390 = vrot.slane %v2389, 4
      %v2391 = vadd.f32 %v2389, %v2390
      %v2392 = vrot.slane %v2391, 2
      %v2393 = vadd.f32 %v2391, %v2392
      %v2394 = vrot.slane %v2393, 1
      %v2395 = vadd.f32 %v2393, %v2394
      %v2396 = vsel %vm1152, %v2374, 0.0
      %v2397 = vrot.slane %v2396, 4
      %v2398 = vadd.f32 %v2396, %v2397
      %v2399 = vrot.slane %v2398, 2
      %v2400 = vadd.f32 %v2398, %v2399
      %v2401 = vrot.slane %v2400, 1
      %v2402 = vadd.f32 %v2400, %v2401
      %v2403 = vsel %vm1152, %v2375, 0.0
      %v2404 = vrot.slane %v2403, 4
      %v2405 = vadd.f32 %v2403, %v2404
      %v2406 = vrot.slane %v2405, 2
      %v2407 = vadd.f32 %v2405, %v2406
      %v2408 = vrot.slane %v2407, 1
      %v2409 = vadd.f32 %v2407, %v2408
      %v2410 = vsel %vm1152, %v2376, 0.0
      %v2411 = vrot.slane %v2410, 4
      %v2412 = vadd.f32 %v2410, %v2411
      %v2413 = vrot.slane %v2412, 2
      %v2414 = vadd.f32 %v2412, %v2413
      %v2415 = vrot.slane %v2414, 1
      %v2416 = vadd.f32 %v2414, %v2415
      %v2417 = vsel %vm1152, %v2377, 0.0
      %v2418 = vrot.slane %v2417, 4
      %v2419 = vadd.f32 %v2417, %v2418
      %v2420 = vrot.slane %v2419, 2
      %v2421 = vadd.f32 %v2419, %v2420
      %v2422 = vrot.slane %v2421, 1
      %v2423 = vadd.f32 %v2421, %v2422
      %v2424 = vsel %vm1152, %v2378, 0.0
      %v2425 = vrot.slane %v2424, 4
      %v2426 = vadd.f32 %v2424, %v2425
      %v2427 = vrot.slane %v2426, 2
      %v2428 = vadd.f32 %v2426, %v2427
      %v2429 = vrot.slane %v2428, 1
      %v2430 = vadd.f32 %v2428, %v2429
      %v2431 = vsel %vm1152, %v2379, 0.0
      %v2432 = vrot.slane %v2431, 4
      %v2433 = vadd.f32 %v2431, %v2432
      %v2434 = vrot.slane %v2433, 2
      %v2435 = vadd.f32 %v2433, %v2434
      %v2436 = vrot.slane %v2435, 1
      %v2437 = vadd.f32 %v2435, %v2436
      %v2438 = vsel %vm1152, %v2380, 0.0
      %v2439 = vrot.slane %v2438, 4
      %v2440 = vadd.f32 %v2438, %v2439
      %v2441 = vrot.slane %v2440, 2
      %v2442 = vadd.f32 %v2440, %v2441
      %v2443 = vrot.slane %v2442, 1
      %v2444 = vadd.f32 %v2442, %v2443
      %v2445 = vsel %vm1152, %v2381, 0.0
      %v2446 = vrot.slane %v2445, 4
      %v2447 = vadd.f32 %v2445, %v2446
      %v2448 = vrot.slane %v2447, 2
      %v2449 = vadd.f32 %v2447, %v2448
      %v2450 = vrot.slane %v2449, 1
      %v2451 = vadd.f32 %v2449, %v2450
      %v2452 = vsel %vm1152, %v2382, 0.0
      %v2453 = vrot.slane %v2452, 4
      %v2454 = vadd.f32 %v2452, %v2453
      %v2455 = vrot.slane %v2454, 2
      %v2456 = vadd.f32 %v2454, %v2455
      %v2457 = vrot.slane %v2456, 1
      %v2458 = vadd.f32 %v2456, %v2457
      %v2459 = vsel %vm1152, %v2383, 0.0
      %v2460 = vrot.slane %v2459, 4
      %v2461 = vadd.f32 %v2459, %v2460
      %v2462 = vrot.slane %v2461, 2
      %v2463 = vadd.f32 %v2461, %v2462
      %v2464 = vrot.slane %v2463, 1
      %v2465 = vadd.f32 %v2463, %v2464
      %v2466 = vsel %vm1152, %v2384, 0.0
      %v2467 = vrot.slane %v2466, 4
      %v2468 = vadd.f32 %v2466, %v2467
      %v2469 = vrot.slane %v2468, 2
      %v2470 = vadd.f32 %v2468, %v2469
      %v2471 = vrot.slane %v2470, 1
      %v2472 = vadd.f32 %v2470, %v2471
      %v2473 = vsel %vm1152, %v2385, 0.0
      %v2474 = vrot.slane %v2473, 4
      %v2475 = vadd.f32 %v2473, %v2474
      %v2476 = vrot.slane %v2475, 2
      %v2477 = vadd.f32 %v2475, %v2476
      %v2478 = vrot.slane %v2477, 1
      %v2479 = vadd.f32 %v2477, %v2478
      %v2480 = vsel %vm1152, %v2386, 0.0
      %v2481 = vrot.slane %v2480, 4
      %v2482 = vadd.f32 %v2480, %v2481
      %v2483 = vrot.slane %v2482, 2
      %v2484 = vadd.f32 %v2482, %v2483
      %v2485 = vrot.slane %v2484, 1
      %v2486 = vadd.f32 %v2484, %v2485
      %v2487 = vsel %vm1152, %v2387, 0.0
      %v2488 = vrot.slane %v2487, 4
      %v2489 = vadd.f32 %v2487, %v2488
      %v2490 = vrot.slane %v2489, 2
      %v2491 = vadd.f32 %v2489, %v2490
      %v2492 = vrot.slane %v2491, 1
      %v2493 = vadd.f32 %v2491, %v2492
      %v2494 = vsel %vm1152, %v2388, 0.0
      %v2495 = vrot.slane %v2494, 4
      %v2496 = vadd.f32 %v2494, %v2495
      %v2497 = vrot.slane %v2496, 2
      %v2498 = vadd.f32 %v2496, %v2497
      %v2499 = vrot.slane %v2498, 1
      %v2500 = vadd.f32 %v2498, %v2499
      %v2501 = vld [vmem:[%s11] sm:$0xff]
      %v2502 = vld [vmem:[%s12] sm:$0xff]
      %vm2519 = vcmask 1041409
      %v2520 = vsel %vm2519, %v2402, %v2395
      %vm2521 = vcmask 1042434
      %v2522 = vsel %vm2521, %v2409, %v2520
      %vm2523 = vcmask 1043459
      %v2524 = vsel %vm2523, %v2416, %v2522
      %vm2525 = vcmask 1044484
      %v2526 = vsel %vm2525, %v2423, %v2524
      %vm2527 = vcmask 1045509
      %v2528 = vsel %vm2527, %v2430, %v2526
      %vm2529 = vcmask 1046534
      %v2530 = vsel %vm2529, %v2437, %v2528
      %vm2531 = vcmask 1047559
      %v2532 = vsel %vm2531, %v2444, %v2530
      %v2533 = vsel %vm2519, %v2458, %v2451
      %v2534 = vsel %vm2521, %v2465, %v2533
      %v2535 = vsel %vm2523, %v2472, %v2534
      %v2536 = vsel %vm2525, %v2479, %v2535
      %v2537 = vsel %vm2527, %v2486, %v2536
      %v2538 = vsel %vm2529, %v2493, %v2537
      %v2539 = vsel %vm2531, %v2500, %v2538
      %v2540 = vsel %vm1152, %v2532, 0
      %v2542 = vsel %vm1152, %v2539, 0
      %2544 = vmatprep.subr.mxu0 0.0
      %2545 = vmatpush1.msra.mxu0 0.0
      %2546 = vmatprep.subr.mxu0 0.0
      %2547 = vmatpush1.msra.mxu0 0.0
      %2548 = vmatprep.subr.mxu0 0.0
      %2549 = vmatpush1.msra.mxu0 0.0
      %2550 = vmatprep.subr.mxu0 0.0
      %2551 = vmatpush1.msra.mxu0 0.0
      %2552 = vmatprep.subr.mxu0 0.0
      %2553 = vmatpush1.msra.mxu0 0.0
      %2554 = vmatprep.subr.mxu0 0.0
      %2555 = vmatpush1.msra.mxu0 0.0
      %2556 = vmatprep.subr.mxu0 0.0
      %2557 = vmatpush1.msra.mxu0 0.0
      %2558 = vmatprep.subr.mxu0 0.0
      %2559 = vmatpush1.msra.mxu0 0.0
      %2560 = vmatprep.subr.mxu0 0.0
      %2561 = vmatpush1.msra.mxu0 0.0
      %2562 = vmatprep.subr.mxu0 0.0
      %2563 = vmatpush1.msra.mxu0 0.0
      %2564 = vmatprep.subr.mxu0 0.0
      %2565 = vmatpush1.msra.mxu0 0.0
      %2566 = vmatprep.subr.mxu0 0.0
      %2567 = vmatpush1.msra.mxu0 0.0
      %2568 = vmatprep.subr.mxu0 0.0
      %2569 = vmatpush1.msra.mxu0 0.0
      %2570 = vmatprep.subr.mxu0 0.0
      %2571 = vmatpush1.msra.mxu0 0.0
      %2572 = vmatprep.subr.mxu0 0.0
      %2573 = vmatpush1.msra.mxu0 0.0
      %2574 = vmatprep.subr.mxu0 0.0
      %2575 = vmatpush1.msra.mxu0 %v2502
      %2576 = vmatprep.subr.mxu0 0.0
      %2577 = vmatpush2.msra.mxu0 0.0
      %2578 = vmatprep.subr.mxu0 0.0
      %2579 = vmatpush2.msra.mxu0 0.0
      %2580 = vmatprep.subr.mxu0 0.0
      %2581 = vmatpush2.msra.mxu0 0.0
      %2582 = vmatprep.subr.mxu0 0.0
      %2583 = vmatpush2.msra.mxu0 0.0
      %2584 = vmatprep.subr.mxu0 0.0
      %2585 = vmatpush2.msra.mxu0 0.0
      %2586 = vmatprep.subr.mxu0 0.0
      %2587 = vmatpush2.msra.mxu0 0.0
      %2588 = vmatprep.subr.mxu0 0.0
      %2589 = vmatpush2.msra.mxu0 0.0
      %2590 = vmatprep.subr.mxu0 0.0
      %2591 = vmatpush2.msra.mxu0 0.0
      %2592 = vmatprep.subr.mxu0 0.0
      %2593 = vmatpush2.msra.mxu0 0.0
      %2594 = vmatprep.subr.mxu0 0.0
      %2595 = vmatpush2.msra.mxu0 0.0
      %2596 = vmatprep.subr.mxu0 0.0
      %2597 = vmatpush2.msra.mxu0 0.0
      %2598 = vmatprep.subr.mxu0 0.0
      %2599 = vmatpush2.msra.mxu0 0.0
      %2600 = vmatprep.subr.mxu0 0.0
      %2601 = vmatpush2.msra.mxu0 0.0
      %2602 = vmatprep.subr.mxu0 0.0
      %2603 = vmatpush2.msra.mxu0 0.0
      %2604 = vmatprep.subr.mxu0 0.0
      %2605 = vmatpush2.msra.mxu0 0.0
      %2606 = vmatprep.subr.mxu0 0.0
      %2607 = vmatpush2.msra.mxu0 0.0
      %2608 = vmatprep.mubr.f32.mxu0 0.0
      %2609 = vmatmul.mubr.f32.gmra.mxu0 %v2540
      %v2610 = vpop.f32.mrf.mxu0
      %v2611 = vadd.f32 0.0, %v2610
      %v2612 = vpop.f32.mrf.mxu0
      %2613 = vmatprep.mubr.f32.mxu0 0.0
      %2614 = vmatmul.mubr.f32.gmra.mxu0 %v2542
      %v2615 = vpop.f32.mrf.mxu0
      %v2616 = vadd.f32 0.0, %v2615
      %v2617 = vpop.f32.mrf.mxu0
      %2618 = vdwg.mxu0
      %v2635 = vsel %vm2519, %v2210, %v2203
      %v2636 = vsel %vm2521, %v2217, %v2635
      %v2637 = vsel %vm2523, %v2224, %v2636
      %v2638 = vsel %vm2525, %v2231, %v2637
      %v2639 = vsel %vm2527, %v2238, %v2638
      %v2640 = vsel %vm2529, %v2245, %v2639
      %v2641 = vsel %vm2531, %v2252, %v2640
      %v2642 = vsel %vm2519, %v2266, %v2259
      %v2643 = vsel %vm2521, %v2273, %v2642
      %v2644 = vsel %vm2523, %v2280, %v2643
      %v2645 = vsel %vm2525, %v2287, %v2644
      %v2646 = vsel %vm2527, %v2294, %v2645
      %v2647 = vsel %vm2529, %v2301, %v2646
      %v2648 = vsel %vm2531, %v2308, %v2647
      %v2649 = vsel %vm1152, %v2641, 0
      %v2651 = vsel %vm1152, %v2648, 0
      %2653 = vmatprep.subr.mxu0 0.0
      %2654 = vmatpush1.msra.mxu0 0.0
      %2655 = vmatprep.subr.mxu0 0.0
      %2656 = vmatpush1.msra.mxu0 0.0
      %2657 = vmatprep.subr.mxu0 0.0
      %2658 = vmatpush1.msra.mxu0 0.0
      %2659 = vmatprep.subr.mxu0 0.0
      %2660 = vmatpush1.msra.mxu0 0.0
      %2661 = vmatprep.subr.mxu0 0.0
      %2662 = vmatpush1.msra.mxu0 0.0
      %2663 = vmatprep.subr.mxu0 0.0
      %2664 = vmatpush1.msra.mxu0 0.0
      %2665 = vmatprep.subr.mxu0 0.0
      %2666 = vmatpush1.msra.mxu0 0.0
      %2667 = vmatprep.subr.mxu0 0.0
      %2668 = vmatpush1.msra.mxu0 0.0
      %2669 = vmatprep.subr.mxu0 0.0
      %2670 = vmatpush1.msra.mxu0 0.0
      %2671 = vmatprep.subr.mxu0 0.0
      %2672 = vmatpush1.msra.mxu0 0.0
      %2673 = vmatprep.subr.mxu0 0.0
      %2674 = vmatpush1.msra.mxu0 0.0
      %2675 = vmatprep.subr.mxu0 0.0
      %2676 = vmatpush1.msra.mxu0 0.0
      %2677 = vmatprep.subr.mxu0 0.0
      %2678 = vmatpush1.msra.mxu0 0.0
      %2679 = vmatprep.subr.mxu0 0.0
      %2680 = vmatpush1.msra.mxu0 0.0
      %2681 = vmatprep.subr.mxu0 0.0
      %2682 = vmatpush1.msra.mxu0 0.0
      %2683 = vmatprep.subr.mxu0 0.0
      %2684 = vmatpush1.msra.mxu0 %v2501
      %2685 = vmatprep.subr.mxu0 0.0
      %2686 = vmatpush2.msra.mxu0 0.0
      %2687 = vmatprep.subr.mxu0 0.0
      %2688 = vmatpush2.msra.mxu0 0.0
      %2689 = vmatprep.subr.mxu0 0.0
      %2690 = vmatpush2.msra.mxu0 0.0
      %2691 = vmatprep.subr.mxu0 0.0
      %2692 = vmatpush2.msra.mxu0 0.0
      %2693 = vmatprep.subr.mxu0 0.0
      %2694 = vmatpush2.msra.mxu0 0.0
      %2695 = vmatprep.subr.mxu0 0.0
      %2696 = vmatpush2.msra.mxu0 0.0
      %2697 = vmatprep.subr.mxu0 0.0
      %2698 = vmatpush2.msra.mxu0 0.0
      %2699 = vmatprep.subr.mxu0 0.0
      %2700 = vmatpush2.msra.mxu0 0.0
      %2701 = vmatprep.subr.mxu0 0.0
      %2702 = vmatpush2.msra.mxu0 0.0
      %2703 = vmatprep.subr.mxu0 0.0
      %2704 = vmatpush2.msra.mxu0 0.0
      %2705 = vmatprep.subr.mxu0 0.0
      %2706 = vmatpush2.msra.mxu0 0.0
      %2707 = vmatprep.subr.mxu0 0.0
      %2708 = vmatpush2.msra.mxu0 0.0
      %2709 = vmatprep.subr.mxu0 0.0
      %2710 = vmatpush2.msra.mxu0 0.0
      %2711 = vmatprep.subr.mxu0 0.0
      %2712 = vmatpush2.msra.mxu0 0.0
      %2713 = vmatprep.subr.mxu0 0.0
      %2714 = vmatpush2.msra.mxu0 0.0
      %2715 = vmatprep.subr.mxu0 0.0
      %2716 = vmatpush2.msra.mxu0 0.0
      %2717 = vmatprep.mubr.f32.mxu0 0.0
      %2718 = vmatmul.mubr.f32.gmra.mxu0 %v2649
      %v2719 = vpop.f32.mrf.mxu0
      %v2720 = vadd.f32 %v2611, %v2719
      %v2721 = vpop.f32.mrf.mxu0
      %2722 = vmatprep.mubr.f32.mxu0 0.0
      %2723 = vmatmul.mubr.f32.gmra.mxu0 %v2651
      %v2724 = vpop.f32.mrf.mxu0
      %v2725 = vadd.f32 %v2616, %v2724
      %v2726 = vpop.f32.mrf.mxu0
      %2727 = vdwg.mxu0
      %v2728 = vld [vmem:[%s13] sm:$0x1]
      %v2730 = vlaneseq
      %v2731 = vshrl.u32 %v2730, 7
      %v2732 = vsub.s32 0, %v2731
      %v2733 = vrot.slane %v2728, %v2732
      %v2735 = vmul.f32 %v2720, %v2733
      %v2736 = vmul.f32 %v2725, %v2733
      %v2737 = vld [vmem:[%s14] sm:$0x1]
      %v2739 = vlaneseq
      %v2740 = vshrl.u32 %v2739, 7
      %v2741 = vsub.s32 0, %v2740
      %v2742 = vrot.slane %v2737, %v2741
      %v2744 = vadd.f32 %v2735, %v2742
      %v2745 = vadd.f32 %v2736, %v2742
      %v2746 = vmax.f32 %v2744, 0.0
      %v2747 = vmax.f32 %v2745, 0.0
      %2748 = vst.msk [vmem:[%s640] sm:$0xff] %vm1152, %v2746
      %2749 = vst.msk [vmem:[%s640 + $0x8] sm:$0xff] %vm1152, %v2747
      %s2750 = smul.u32 2, %s31
      %p2751 = scmp.lt.s32.totalorder %s30, 1
      %s2752 = scalar_select %p2751, %s30, 1
      %p2753 = scmp.lt.s32.totalorder %s2750, 1
      %s2754 = scalar_select %p2753, %s2750, 1
      %s2755 = smul.addr %s2752, 2
      %s2756 = sadd.s32 %s2754, %s2755
      %s2757 = smul.addr %s2756, 8
      %s2758 = scalar_lea.vmem %s15, %s2757
      // Predicated region
      $region81: #{_lambda_.2} parent=79 // pred_check
        %p2759 = pneg %p401
      $region82: #{_lambda_.2} parent=79 // pred_check_branch
        %2761 = sbr.rel (%p2759) target = $region84
      $region83: #{_lambda_.2} parent=79 // pred_region
        %s2762 = smul.u32 2, %s31
      $region84: #{_lambda_.2} parent=79 // pred_fallthru
        _
    $region80: #{_lambda_.2} parent=5 // pred_fallthru
      _
    %p2763 = scmp.le.s32.totalorder 2, %s21
    // Predicated region
    $region85: #{_lambda_.2} parent=5 // pred_check
      %p2764 = pneg %p2763
    $region86: #{_lambda_.2} parent=5 // pred_check_branch
      %2766 = sbr.rel (%p2764) target = $region88
    $region87: #{_lambda_.2} parent=5 // pred_region
      %s2767 = ssub.s32 %s21, 2
      // Predicated region
      $region89: #{_lambda_.2} parent=87 // pred_check
        %p2768 = pneg %p407
      $region90: #{_lambda_.2} parent=87 // pred_check_branch
        %2770 = sbr.rel (%p2768) target = $region92
      $region91: #{_lambda_.2} parent=87 // pred_region
        %s2771 = smul.u32 2, %s33
        %p2772 = scmp.lt.s32.totalorder %s32, 1
        %s2773 = scalar_select %p2772, %s32, 1
        %p2774 = scmp.lt.s32.totalorder %s2771, 1
        %s2775 = scalar_select %p2774, %s2771, 1
        %s2776 = smul.addr %s2773, 2
        %s2777 = sadd.s32 %s2775, %s2776
        %s2778 = smul.addr %s2777, 8
        %s2779 = scalar_lea.vmem %s15, %s2778
      $region92: #{_lambda_.2} parent=87 // pred_fallthru
        _
    $region88: #{_lambda_.2} parent=5 // pred_fallthru
      _
  $region6: #{_lambda_.2} parent=0 // loop_footer
    %s25 = sadd.s32 1, %s21
  $region7: #{_lambda_.2} parent=0 // loop_footer_branch
    %20 = sbr.rel target = $region3
  $region8: #{_lambda_.2} parent=0 // loop_exit
    _

// kernel: _lambda_.3
$region0: #{_lambda_.3}
  #allocation0 [shape = 'u32[]', space=smem, size = 0x4, offset = 0x4, fixed_abs, tag = 'smem constant byte address 0x4 - core index']
  #allocation1 [shape = 'u32[144,128]{1,0:T(1,128)}', space=vmem, size = 0x12000, scoped, tag = 'internal scratch']
  %s0 = inlined_call_operand.vmem [shape: f32[2,16,8,9], index: 0, kind: input, shape index: {}]
  %s1 = inlined_call_operand.vmem [shape: f32[2,16,8,8], index: 1, kind: input, shape index: {}]
  %s2 = inlined_call_operand.vmem [shape: f32[2,16,8], index: 2, kind: input, shape index: {}]
  %s3 = inlined_call_operand.vmem [shape: f32[2,16,8], index: 3, kind: input, shape index: {}]
  %s4 = inlined_call_operand.vmem [shape: f32[9,8], index: 4, kind: input, shape index: {}]
  %s5 = inlined_call_operand.vmem [shape: f32[1,8], index: 5, kind: input, shape index: {}, may-alias: {5,8}]
  %s6 = inlined_call_operand.vmem [shape: f32[1,8], index: 6, kind: input, shape index: {}, may-alias: {6,9}]
  %s7 = inlined_call_operand.vmem [shape: f32[8,8], index: 7, kind: input, shape index: {}]
  %s8 = inlined_call_operand.vmem [shape: f32[1,8], index: 8, kind: input, shape index: {}, may-alias: {5,8}]
  %s9 = inlined_call_operand.vmem [shape: f32[1,8], index: 9, kind: input, shape index: {}, may-alias: {6,9}]
  %s10 = inlined_call_operand.vmem [shape: f32[1,16], index: 10, kind: input, shape index: {}]
  %s11 = inlined_call_operand.vmem [shape: f32[1,16], index: 11, kind: input, shape index: {}]
  %s12 = inlined_call_operand.vmem [shape: f32[8,16], index: 12, kind: input, shape index: {}]
  %s13 = inlined_call_operand.vmem [shape: f32[8,16], index: 13, kind: input, shape index: {}]
  %s14 = inlined_call_operand.vmem [shape: f32[8,16], index: 14, kind: input, shape index: {}]
  %s15 = inlined_call_operand.vmem [shape: f32[8,16], index: 15, kind: input, shape index: {}]
  %s16 = inlined_call_operand.vmem [shape: f32[1,16], index: 16, kind: input, shape index: {}]
  %s17 = inlined_call_operand.vmem [shape: f32[1,16], index: 17, kind: input, shape index: {}]
  %s18 = inlined_call_operand.hbm [shape: f32[2,16,16], index: 18, kind: output, shape index: {}]
  %s19 = sld [smem:[#allocation0]]
  $region105: #{_lambda_.3} parent=0
    _
  %s21 = ssub.s32 1, %s19
  %s22 = scalar_select 0, %s21, %s19
  $region1: #{_lambda_.3} parent=0
    #allocation2 [shape = 'u8[16384]{0}', space=vmem, size = 0x4000, scoped, tag = 'output window, operand 0']
    #allocation3 [shape = 's32[2]{0}', space=sflag, size = 0x8, scoped, tag = 'scoped memory for _lambda_.3']
    %23 = vsyncpa [#allocation3], 0
    %s24 = scalar_lea.sflag [#allocation3], 1
    %25 = vsyncpa %s24, 0
    loop: start=0, step=1, limit=4
    $region2: #{_lambda_.3} parent=1 // loop_pre_header
      _
    $region3: #{_lambda_.3} parent=1 // loop_header
      %s27 = sphi 0, %s31
      %p28 = scmp.ge.s32.totalorder %s27, 4
      %s34 = sphi 0, %s46
      %s35 = sphi 0, %s42
      %s36 = sphi 0, %s34
      %s37 = sphi 0, %s35
      %s38 = sphi 0, %s36
      %s39 = sphi 0, %s37
      %s51 = sphi 0, %s53
      %s54 = sphi 0, %s51
      %s55 = sphi 0, %s54
      %s71 = sphi 0, %s55
      %s79 = sphi 0, %s81
      %s82 = sphi 0, %s79
      %s83 = sphi 0, %s82
      %s99 = sphi 0, %s83
      %s107 = sphi 0, %s109
      %s110 = sphi 0, %s107
      %s111 = sphi 0, %s110
      %s127 = sphi 0, %s111
      %s135 = sphi 0, %s137
      %s138 = sphi 0, %s135
      %s139 = sphi 0, %s138
      %s155 = sphi 0, %s139
      %s159 = sphi 0, %s159
      %s161 = sphi 0, %s159
      %s162 = sphi 0, %s161
      %s176 = sphi 0, %s162
      %s180 = sphi 0, %s180
      %s182 = sphi 0, %s180
      %s183 = sphi 0, %s182
      %s197 = sphi 0, %s183
      %s201 = sphi 0, %s201
      %s203 = sphi 0, %s201
      %s204 = sphi 0, %s203
      %s218 = sphi 0, %s204
      %s222 = sphi 0, %s222
      %s224 = sphi 0, %s222
      %s225 = sphi 0, %s224
      %s239 = sphi 0, %s225
      %s243 = sphi 0, %s243
      %s245 = sphi 0, %s243
      %s246 = sphi 0, %s245
      %s260 = sphi 0, %s246
      %s264 = sphi 0, %s264
      %s266 = sphi 0, %s264
      %s267 = sphi 0, %s266
      %s281 = sphi 0, %s267
      %s285 = sphi 0, %s285
      %s287 = sphi 0, %s285
      %s288 = sphi 0, %s287
      %s302 = sphi 0, %s288
      %s306 = sphi 0, %s306
      %s308 = sphi 0, %s306
      %s309 = sphi 0, %s308
      %s323 = sphi 0, %s309
      %s327 = sphi 0, %s327
      %s329 = sphi 0, %s327
      %s330 = sphi 0, %s329
      %s344 = sphi 0, %s330
      %s348 = sphi 0, %s348
      %s350 = sphi 0, %s348
      %s351 = sphi 0, %s350
      %s365 = sphi 0, %s351
      %s369 = sphi 0, %s369
      %s371 = sphi 0, %s369
      %s372 = sphi 0, %s371
      %s386 = sphi 0, %s372
      %s390 = sphi 0, %s390
      %s392 = sphi 0, %s390
      %s393 = sphi 0, %s392
      %s407 = sphi 0, %s393
      %s411 = sphi 0, %s411
      %s413 = sphi 0, %s411
      %s414 = sphi 0, %s413
      %s428 = sphi 0, %s414
      %s432 = sphi 0, %s432
      %s434 = sphi 0, %s432
      %s435 = sphi 0, %s434
      %s449 = sphi 0, %s435
      %s457 = sphi 0, %s459
      %s460 = sphi 0, %s457
      %s461 = sphi 0, %s460
      %s477 = sphi 0, %s461
    $region4: #{_lambda_.3} parent=1 // loop_header_branch
      %30 = sbr.rel (%p28) target = $region8
    $region5: #{_lambda_.3} parent=1 // loop_body
      %s32 = ssub.s32 %s27, 1
      %s33 = ssub.s32 %s27, 2
      %s40 = sadd.s32 1, %s35
      %p41 = scmp.ge.s32.totalorder %s40, 1
      %s42 = scalar_select %p41, 0, %s40
      %s43 = sadd.s32 1, %s34
      %s44 = scalar_select %p41, %s43, %s34
      %p45 = scmp.ge.s32.totalorder %s44, 2
      %s46 = scalar_select %p45, 0, %s44
      %s47 = ssub.s32 %s34, %s46
      %s48 = ssub.s32 %s35, %s42
      %s49 = sor.u32 %s47, %s48
      %p50 = scmp.eq.s32.totalorder %s49, 0
      %s52 = sadd.s32 %s51, 1
      %s53 = scalar_select %p50, %s51, %s52
      %p56 = pneg %p50
      %p57 = scmp.eq.s32.totalorder %s27, 1
      %p58 = por %p56, %p57
      %p59 = scmp.ne.s32.totalorder %s51, %s54
      %p60 = scmp.eq.s32.totalorder %s27, 0
      %p61 = por %p59, %p60
      %p62 = scmp.ne.s32.totalorder %s51, %s54
      %p63 = scmp.eq.s32.totalorder %s32, 1
      %p64 = por %p62, %p63
      %p65 = scmp.ne.s32.totalorder %s54, %s55
      %p66 = scmp.eq.s32.totalorder %s32, 0
      %p67 = por %p65, %p66
      %p68 = scmp.ne.s32.totalorder %s54, %s55
      %p69 = scmp.eq.s32.totalorder %s33, 1
      %p70 = por %p68, %p69
      %p72 = scmp.ne.s32.totalorder %s55, %s71
      %p73 = scmp.eq.s32.totalorder %s33, 0
      %p74 = por %p72, %p73
      %s75 = ssub.s32 %s34, %s46
      %s76 = ssub.s32 %s35, %s42
      %s77 = sor.u32 %s75, %s76
      %p78 = scmp.eq.s32.totalorder %s77, 0
      %s80 = sadd.s32 %s79, 1
      %s81 = scalar_select %p78, %s79, %s80
      %p84 = pneg %p78
      %p85 = scmp.eq.s32.totalorder %s27, 1
      %p86 = por %p84, %p85
      %p87 = scmp.ne.s32.totalorder %s79, %s82
      %p88 = scmp.eq.s32.totalorder %s27, 0
      %p89 = por %p87, %p88
      %p90 = scmp.ne.s32.totalorder %s79, %s82
      %p91 = scmp.eq.s32.totalorder %s32, 1
      %p92 = por %p90, %p91
      %p93 = scmp.ne.s32.totalorder %s82, %s83
      %p94 = scmp.eq.s32.totalorder %s32, 0
      %p95 = por %p93, %p94
      %p96 = scmp.ne.s32.totalorder %s82, %s83
      %p97 = scmp.eq.s32.totalorder %s33, 1
      %p98 = por %p96, %p97
      %p100 = scmp.ne.s32.totalorder %s83, %s99
      %p101 = scmp.eq.s32.totalorder %s33, 0
      %p102 = por %p100, %p101
      %s103 = ssub.s32 %s34, %s46
      %s104 = ssub.s32 %s35, %s42
      %s105 = sor.u32 %s103, %s104
      %p106 = scmp.eq.s32.totalorder %s105, 0
      %s108 = sadd.s32 %s107, 1
      %s109 = scalar_select %p106, %s107, %s108
      %p112 = pneg %p106
      %p113 = scmp.eq.s32.totalorder %s27, 1
      %p114 = por %p112, %p113
      %p115 = scmp.ne.s32.totalorder %s107, %s110
      %p116 = scmp.eq.s32.totalorder %s27, 0
      %p117 = por %p115, %p116
      %p118 = scmp.ne.s32.totalorder %s107, %s110
      %p119 = scmp.eq.s32.totalorder %s32, 1
      %p120 = por %p118, %p119
      %p121 = scmp.ne.s32.totalorder %s110, %s111
      %p122 = scmp.eq.s32.totalorder %s32, 0
      %p123 = por %p121, %p122
      %p124 = scmp.ne.s32.totalorder %s110, %s111
      %p125 = scmp.eq.s32.totalorder %s33, 1
      %p126 = por %p124, %p125
      %p128 = scmp.ne.s32.totalorder %s111, %s127
      %p129 = scmp.eq.s32.totalorder %s33, 0
      %p130 = por %p128, %p129
      %s131 = ssub.s32 %s34, %s46
      %s132 = ssub.s32 %s35, %s42
      %s133 = sor.u32 %s131, %s132
      %p134 = scmp.eq.s32.totalorder %s133, 0
      %s136 = sadd.s32 %s135, 1
      %s137 = scalar_select %p134, %s135, %s136
      %p140 = pneg %p134
      %p141 = scmp.eq.s32.totalorder %s27, 1
      %p142 = por %p140, %p141
      %p143 = scmp.ne.s32.totalorder %s135, %s138
      %p144 = scmp.eq.s32.totalorder %s27, 0
      %p145 = por %p143, %p144
      %p146 = scmp.ne.s32.totalorder %s135, %s138
      %p147 = scmp.eq.s32.totalorder %s32, 1
      %p148 = por %p146, %p147
      %p149 = scmp.ne.s32.totalorder %s138, %s139
      %p150 = scmp.eq.s32.totalorder %s32, 0
      %p151 = por %p149, %p150
      %p152 = scmp.ne.s32.totalorder %s138, %s139
      %p153 = scmp.eq.s32.totalorder %s33, 1
      %p154 = por %p152, %p153
      %p156 = scmp.ne.s32.totalorder %s139, %s155
      %p157 = scmp.eq.s32.totalorder %s33, 0
      %p158 = por %p156, %p157
      %s160 = sadd.s32 %s159, 1
      %p163 = scmp.eq.s32.totalorder %s27, 1
      %p164 = scmp.ne.s32.totalorder %s159, %s161
      %p165 = scmp.eq.s32.totalorder %s27, 0
      %p166 = por %p164, %p165
      %p167 = scmp.ne.s32.totalorder %s159, %s161
      %p168 = scmp.eq.s32.totalorder %s32, 1
      %p169 = por %p167, %p168
      %p170 = scmp.ne.s32.totalorder %s161, %s162
      %p171 = scmp.eq.s32.totalorder %s32, 0
      %p172 = por %p170, %p171
      %p173 = scmp.ne.s32.totalorder %s161, %s162
      %p174 = scmp.eq.s32.totalorder %s33, 1
      %p175 = por %p173, %p174
      %p177 = scmp.ne.s32.totalorder %s162, %s176
      %p178 = scmp.eq.s32.totalorder %s33, 0
      %p179 = por %p177, %p178
      %s181 = sadd.s32 %s180, 1
      %p184 = scmp.eq.s32.totalorder %s27, 1
      %p185 = scmp.ne.s32.totalorder %s180, %s182
      %p186 = scmp.eq.s32.totalorder %s27, 0
      %p187 = por %p185, %p186
      %p188 = scmp.ne.s32.totalorder %s180, %s182
      %p189 = scmp.eq.s32.totalorder %s32, 1
      %p190 = por %p188, %p189
      %p191 = scmp.ne.s32.totalorder %s182, %s183
      %p192 = scmp.eq.s32.totalorder %s32, 0
      %p193 = por %p191, %p192
      %p194 = scmp.ne.s32.totalorder %s182, %s183
      %p195 = scmp.eq.s32.totalorder %s33, 1
      %p196 = por %p194, %p195
      %p198 = scmp.ne.s32.totalorder %s183, %s197
      %p199 = scmp.eq.s32.totalorder %s33, 0
      %p200 = por %p198, %p199
      %s202 = sadd.s32 %s201, 1
      %p205 = scmp.eq.s32.totalorder %s27, 1
      %p206 = scmp.ne.s32.totalorder %s201, %s203
      %p207 = scmp.eq.s32.totalorder %s27, 0
      %p208 = por %p206, %p207
      %p209 = scmp.ne.s32.totalorder %s201, %s203
      %p210 = scmp.eq.s32.totalorder %s32, 1
      %p211 = por %p209, %p210
      %p212 = scmp.ne.s32.totalorder %s203, %s204
      %p213 = scmp.eq.s32.totalorder %s32, 0
      %p214 = por %p212, %p213
      %p215 = scmp.ne.s32.totalorder %s203, %s204
      %p216 = scmp.eq.s32.totalorder %s33, 1
      %p217 = por %p215, %p216
      %p219 = scmp.ne.s32.totalorder %s204, %s218
      %p220 = scmp.eq.s32.totalorder %s33, 0
      %p221 = por %p219, %p220
      %s223 = sadd.s32 %s222, 1
      %p226 = scmp.eq.s32.totalorder %s27, 1
      %p227 = scmp.ne.s32.totalorder %s222, %s224
      %p228 = scmp.eq.s32.totalorder %s27, 0
      %p229 = por %p227, %p228
      %p230 = scmp.ne.s32.totalorder %s222, %s224
      %p231 = scmp.eq.s32.totalorder %s32, 1
      %p232 = por %p230, %p231
      %p233 = scmp.ne.s32.totalorder %s224, %s225
      %p234 = scmp.eq.s32.totalorder %s32, 0
      %p235 = por %p233, %p234
      %p236 = scmp.ne.s32.totalorder %s224, %s225
      %p237 = scmp.eq.s32.totalorder %s33, 1
      %p238 = por %p236, %p237
      %p240 = scmp.ne.s32.totalorder %s225, %s239
      %p241 = scmp.eq.s32.totalorder %s33, 0
      %p242 = por %p240, %p241
      %s244 = sadd.s32 %s243, 1
      %p247 = scmp.eq.s32.totalorder %s27, 1
      %p248 = scmp.ne.s32.totalorder %s243, %s245
      %p249 = scmp.eq.s32.totalorder %s27, 0
      %p250 = por %p248, %p249
      %p251 = scmp.ne.s32.totalorder %s243, %s245
      %p252 = scmp.eq.s32.totalorder %s32, 1
      %p253 = por %p251, %p252
      %p254 = scmp.ne.s32.totalorder %s245, %s246
      %p255 = scmp.eq.s32.totalorder %s32, 0
      %p256 = por %p254, %p255
      %p257 = scmp.ne.s32.totalorder %s245, %s246
      %p258 = scmp.eq.s32.totalorder %s33, 1
      %p259 = por %p257, %p258
      %p261 = scmp.ne.s32.totalorder %s246, %s260
      %p262 = scmp.eq.s32.totalorder %s33, 0
      %p263 = por %p261, %p262
      %s265 = sadd.s32 %s264, 1
      %p268 = scmp.eq.s32.totalorder %s27, 1
      %p269 = scmp.ne.s32.totalorder %s264, %s266
      %p270 = scmp.eq.s32.totalorder %s27, 0
      %p271 = por %p269, %p270
      %p272 = scmp.ne.s32.totalorder %s264, %s266
      %p273 = scmp.eq.s32.totalorder %s32, 1
      %p274 = por %p272, %p273
      %p275 = scmp.ne.s32.totalorder %s266, %s267
      %p276 = scmp.eq.s32.totalorder %s32, 0
      %p277 = por %p275, %p276
      %p278 = scmp.ne.s32.totalorder %s266, %s267
      %p279 = scmp.eq.s32.totalorder %s33, 1
      %p280 = por %p278, %p279
      %p282 = scmp.ne.s32.totalorder %s267, %s281
      %p283 = scmp.eq.s32.totalorder %s33, 0
      %p284 = por %p282, %p283
      %s286 = sadd.s32 %s285, 1
      %p289 = scmp.eq.s32.totalorder %s27, 1
      %p290 = scmp.ne.s32.totalorder %s285, %s287
      %p291 = scmp.eq.s32.totalorder %s27, 0
      %p292 = por %p290, %p291
      %p293 = scmp.ne.s32.totalorder %s285, %s287
      %p294 = scmp.eq.s32.totalorder %s32, 1
      %p295 = por %p293, %p294
      %p296 = scmp.ne.s32.totalorder %s287, %s288
      %p297 = scmp.eq.s32.totalorder %s32, 0
      %p298 = por %p296, %p297
      %p299 = scmp.ne.s32.totalorder %s287, %s288
      %p300 = scmp.eq.s32.totalorder %s33, 1
      %p301 = por %p299, %p300
      %p303 = scmp.ne.s32.totalorder %s288, %s302
      %p304 = scmp.eq.s32.totalorder %s33, 0
      %p305 = por %p303, %p304
      %s307 = sadd.s32 %s306, 1
      %p310 = scmp.eq.s32.totalorder %s27, 1
      %p311 = scmp.ne.s32.totalorder %s306, %s308
      %p312 = scmp.eq.s32.totalorder %s27, 0
      %p313 = por %p311, %p312
      %p314 = scmp.ne.s32.totalorder %s306, %s308
      %p315 = scmp.eq.s32.totalorder %s32, 1
      %p316 = por %p314, %p315
      %p317 = scmp.ne.s32.totalorder %s308, %s309
      %p318 = scmp.eq.s32.totalorder %s32, 0
      %p319 = por %p317, %p318
      %p320 = scmp.ne.s32.totalorder %s308, %s309
      %p321 = scmp.eq.s32.totalorder %s33, 1
      %p322 = por %p320, %p321
      %p324 = scmp.ne.s32.totalorder %s309, %s323
      %p325 = scmp.eq.s32.totalorder %s33, 0
      %p326 = por %p324, %p325
      %s328 = sadd.s32 %s327, 1
      %p331 = scmp.eq.s32.totalorder %s27, 1
      %p332 = scmp.ne.s32.totalorder %s327, %s329
      %p333 = scmp.eq.s32.totalorder %s27, 0
      %p334 = por %p332, %p333
      %p335 = scmp.ne.s32.totalorder %s327, %s329
      %p336 = scmp.eq.s32.totalorder %s32, 1
      %p337 = por %p335, %p336
      %p338 = scmp.ne.s32.totalorder %s329, %s330
      %p339 = scmp.eq.s32.totalorder %s32, 0
      %p340 = por %p338, %p339
      %p341 = scmp.ne.s32.totalorder %s329, %s330
      %p342 = scmp.eq.s32.totalorder %s33, 1
      %p343 = por %p341, %p342
      %p345 = scmp.ne.s32.totalorder %s330, %s344
      %p346 = scmp.eq.s32.totalorder %s33, 0
      %p347 = por %p345, %p346
      %s349 = sadd.s32 %s348, 1
      %p352 = scmp.eq.s32.totalorder %s27, 1
      %p353 = scmp.ne.s32.totalorder %s348, %s350
      %p354 = scmp.eq.s32.totalorder %s27, 0
      %p355 = por %p353, %p354
      %p356 = scmp.ne.s32.totalorder %s348, %s350
      %p357 = scmp.eq.s32.totalorder %s32, 1
      %p358 = por %p356, %p357
      %p359 = scmp.ne.s32.totalorder %s350, %s351
      %p360 = scmp.eq.s32.totalorder %s32, 0
      %p361 = por %p359, %p360
      %p362 = scmp.ne.s32.totalorder %s350, %s351
      %p363 = scmp.eq.s32.totalorder %s33, 1
      %p364 = por %p362, %p363
      %p366 = scmp.ne.s32.totalorder %s351, %s365
      %p367 = scmp.eq.s32.totalorder %s33, 0
      %p368 = por %p366, %p367
      %s370 = sadd.s32 %s369, 1
      %p373 = scmp.eq.s32.totalorder %s27, 1
      %p374 = scmp.ne.s32.totalorder %s369, %s371
      %p375 = scmp.eq.s32.totalorder %s27, 0
      %p376 = por %p374, %p375
      %p377 = scmp.ne.s32.totalorder %s369, %s371
      %p378 = scmp.eq.s32.totalorder %s32, 1
      %p379 = por %p377, %p378
      %p380 = scmp.ne.s32.totalorder %s371, %s372
      %p381 = scmp.eq.s32.totalorder %s32, 0
      %p382 = por %p380, %p381
      %p383 = scmp.ne.s32.totalorder %s371, %s372
      %p384 = scmp.eq.s32.totalorder %s33, 1
      %p385 = por %p383, %p384
      %p387 = scmp.ne.s32.totalorder %s372, %s386
      %p388 = scmp.eq.s32.totalorder %s33, 0
      %p389 = por %p387, %p388
      %s391 = sadd.s32 %s390, 1
      %p394 = scmp.eq.s32.totalorder %s27, 1
      %p395 = scmp.ne.s32.totalorder %s390, %s392
      %p396 = scmp.eq.s32.totalorder %s27, 0
      %p397 = por %p395, %p396
      %p398 = scmp.ne.s32.totalorder %s390, %s392
      %p399 = scmp.eq.s32.totalorder %s32, 1
      %p400 = por %p398, %p399
      %p401 = scmp.ne.s32.totalorder %s392, %s393
      %p402 = scmp.eq.s32.totalorder %s32, 0
      %p403 = por %p401, %p402
      %p404 = scmp.ne.s32.totalorder %s392, %s393
      %p405 = scmp.eq.s32.totalorder %s33, 1
      %p406 = por %p404, %p405
      %p408 = scmp.ne.s32.totalorder %s393, %s407
      %p409 = scmp.eq.s32.totalorder %s33, 0
      %p410 = por %p408, %p409
      %s412 = sadd.s32 %s411, 1
      %p415 = scmp.eq.s32.totalorder %s27, 1
      %p416 = scmp.ne.s32.totalorder %s411, %s413
      %p417 = scmp.eq.s32.totalorder %s27, 0
      %p418 = por %p416, %p417
      %p419 = scmp.ne.s32.totalorder %s411, %s413
      %p420 = scmp.eq.s32.totalorder %s32, 1
      %p421 = por %p419, %p420
      %p422 = scmp.ne.s32.totalorder %s413, %s414
      %p423 = scmp.eq.s32.totalorder %s32, 0
      %p424 = por %p422, %p423
      %p425 = scmp.ne.s32.totalorder %s413, %s414
      %p426 = scmp.eq.s32.totalorder %s33, 1
      %p427 = por %p425, %p426
      %p429 = scmp.ne.s32.totalorder %s414, %s428
      %p430 = scmp.eq.s32.totalorder %s33, 0
      %p431 = por %p429, %p430
      %s433 = sadd.s32 %s432, 1
      %p436 = scmp.eq.s32.totalorder %s27, 1
      %p437 = scmp.ne.s32.totalorder %s432, %s434
      %p438 = scmp.eq.s32.totalorder %s27, 0
      %p439 = por %p437, %p438
      %p440 = scmp.ne.s32.totalorder %s432, %s434
      %p441 = scmp.eq.s32.totalorder %s32, 1
      %p442 = por %p440, %p441
      %p443 = scmp.ne.s32.totalorder %s434, %s435
      %p444 = scmp.eq.s32.totalorder %s32, 0
      %p445 = por %p443, %p444
      %p446 = scmp.ne.s32.totalorder %s434, %s435
      %p447 = scmp.eq.s32.totalorder %s33, 1
      %p448 = por %p446, %p447
      %p450 = scmp.ne.s32.totalorder %s435, %s449
      %p451 = scmp.eq.s32.totalorder %s33, 0
      %p452 = por %p450, %p451
      %s453 = ssub.s32 %s34, %s46
      %s454 = ssub.s32 %s35, %s42
      %s455 = sor.u32 %s453, %s454
      %p456 = scmp.eq.s32.totalorder %s455, 0
      %s458 = sadd.s32 %s457, 1
      %s459 = scalar_select %p456, %s457, %s458
      %p462 = pneg %p456
      %p463 = scmp.eq.s32.totalorder %s27, 1
      %p464 = por %p462, %p463
      %p465 = scmp.ne.s32.totalorder %s457, %s460
      %p466 = scmp.eq.s32.totalorder %s27, 0
      %p467 = por %p465, %p466
      %p468 = scmp.ne.s32.totalorder %s457, %s460
      %p469 = scmp.eq.s32.totalorder %s32, 1
      %p470 = por %p468, %p469
      %p471 = scmp.ne.s32.totalorder %s460, %s461
      %p472 = scmp.eq.s32.totalorder %s32, 0
      %p473 = por %p471, %p472
      %p474 = scmp.ne.s32.totalorder %s460, %s461
      %p475 = scmp.eq.s32.totalorder %s33, 1
      %p476 = por %p474, %p475
      %p478 = scmp.ne.s32.totalorder %s461, %s477
      %p479 = scmp.eq.s32.totalorder %s33, 0
      %p480 = por %p478, %p479
      %p481 = scmp.le.s32.totalorder 1, %s27
      %p482 = scmp.lt.s32.totalorder %s27, 3
      %p483 = pnand %p481, %p482
      %p484 = pneg %p483
      // Predicated region
      $region9: #{_lambda_.3} parent=5 // pred_check
        _
      $region10: #{_lambda_.3} parent=5 // pred_check_branch
        %486 = sbr.rel (%p483) target = $region12
      $region11: #{_lambda_.3} parent=5 // pred_region
        %s487 = ssub.s32 %s27, 1
        // Predicated region
        $region13: #{_lambda_.3} parent=11 // pred_check
          %p488 = pneg %p172
        $region14: #{_lambda_.3} parent=11 // pred_check_branch
          %490 = sbr.rel (%p488) target = $region16
        $region15: #{_lambda_.3} parent=11 // pred_region
          _
        $region16: #{_lambda_.3} parent=11 // pred_fallthru
          _
        // Predicated region
        $region17: #{_lambda_.3} parent=11 // pred_check
          %p491 = pneg %p193
        $region18: #{_lambda_.3} parent=11 // pred_check_branch
          %493 = sbr.rel (%p491) target = $region20
        $region19: #{_lambda_.3} parent=11 // pred_region
          _
        $region20: #{_lambda_.3} parent=11 // pred_fallthru
          _
        // Predicated region
        $region21: #{_lambda_.3} parent=11 // pred_check
          %p494 = pneg %p214
        $region22: #{_lambda_.3} parent=11 // pred_check_branch
          %496 = sbr.rel (%p494) target = $region24
        $region23: #{_lambda_.3} parent=11 // pred_region
          _
        $region24: #{_lambda_.3} parent=11 // pred_fallthru
          _
        // Predicated region
        $region25: #{_lambda_.3} parent=11 // pred_check
          %p497 = pneg %p235
        $region26: #{_lambda_.3} parent=11 // pred_check_branch
          %499 = sbr.rel (%p497) target = $region28
        $region27: #{_lambda_.3} parent=11 // pred_region
          _
        $region28: #{_lambda_.3} parent=11 // pred_fallthru
          _
        // Predicated region
        $region29: #{_lambda_.3} parent=11 // pred_check
          %p500 = pneg %p256
        $region30: #{_lambda_.3} parent=11 // pred_check_branch
          %502 = sbr.rel (%p500) target = $region32
        $region31: #{_lambda_.3} parent=11 // pred_region
          _
        $region32: #{_lambda_.3} parent=11 // pred_fallthru
          _
        // Predicated region
        $region33: #{_lambda_.3} parent=11 // pred_check
          %p503 = pneg %p277
        $region34: #{_lambda_.3} parent=11 // pred_check_branch
          %505 = sbr.rel (%p503) target = $region36
        $region35: #{_lambda_.3} parent=11 // pred_region
          _
        $region36: #{_lambda_.3} parent=11 // pred_fallthru
          _
        // Predicated region
        $region37: #{_lambda_.3} parent=11 // pred_check
          %p506 = pneg %p298
        $region38: #{_lambda_.3} parent=11 // pred_check_branch
          %508 = sbr.rel (%p506) target = $region40
        $region39: #{_lambda_.3} parent=11 // pred_region
          _
        $region40: #{_lambda_.3} parent=11 // pred_fallthru
          _
        // Predicated region
        $region41: #{_lambda_.3} parent=11 // pred_check
          %p509 = pneg %p319
        $region42: #{_lambda_.3} parent=11 // pred_check_branch
          %511 = sbr.rel (%p509) target = $region44
        $region43: #{_lambda_.3} parent=11 // pred_region
          _
        $region44: #{_lambda_.3} parent=11 // pred_fallthru
          _
        // Predicated region
        $region45: #{_lambda_.3} parent=11 // pred_check
          %p512 = pneg %p340
        $region46: #{_lambda_.3} parent=11 // pred_check_branch
          %514 = sbr.rel (%p512) target = $region48
        $region47: #{_lambda_.3} parent=11 // pred_region
          _
        $region48: #{_lambda_.3} parent=11 // pred_fallthru
          _
        // Predicated region
        $region49: #{_lambda_.3} parent=11 // pred_check
          %p515 = pneg %p361
        $region50: #{_lambda_.3} parent=11 // pred_check_branch
          %517 = sbr.rel (%p515) target = $region52
        $region51: #{_lambda_.3} parent=11 // pred_region
          _
        $region52: #{_lambda_.3} parent=11 // pred_fallthru
          _
        // Predicated region
        $region53: #{_lambda_.3} parent=11 // pred_check
          %p518 = pneg %p382
        $region54: #{_lambda_.3} parent=11 // pred_check_branch
          %520 = sbr.rel (%p518) target = $region56
        $region55: #{_lambda_.3} parent=11 // pred_region
          _
        $region56: #{_lambda_.3} parent=11 // pred_fallthru
          _
        // Predicated region
        $region57: #{_lambda_.3} parent=11 // pred_check
          %p521 = pneg %p403
        $region58: #{_lambda_.3} parent=11 // pred_check_branch
          %523 = sbr.rel (%p521) target = $region60
        $region59: #{_lambda_.3} parent=11 // pred_region
          _
        $region60: #{_lambda_.3} parent=11 // pred_fallthru
          _
        // Predicated region
        $region61: #{_lambda_.3} parent=11 // pred_check
          %p524 = pneg %p424
        $region62: #{_lambda_.3} parent=11 // pred_check_branch
          %526 = sbr.rel (%p524) target = $region64
        $region63: #{_lambda_.3} parent=11 // pred_region
          _
        $region64: #{_lambda_.3} parent=11 // pred_fallthru
          _
        // Predicated region
        $region65: #{_lambda_.3} parent=11 // pred_check
          %p527 = pneg %p445
        $region66: #{_lambda_.3} parent=11 // pred_check_branch
          %529 = sbr.rel (%p527) target = $region68
        $region67: #{_lambda_.3} parent=11 // pred_region
          _
        $region68: #{_lambda_.3} parent=11 // pred_fallthru
          _
      $region12: #{_lambda_.3} parent=5 // pred_fallthru
        _
      %p530 = scmp.lt.s32.totalorder %s27, 2
      // Predicated region
      $region69: #{_lambda_.3} parent=5 // pred_check
        %p531 = pneg %p530
      $region70: #{_lambda_.3} parent=5 // pred_check_branch
        %533 = sbr.rel (%p531) target = $region72
      $region71: #{_lambda_.3} parent=5 // pred_region
        // Predicated region
        $region73: #{_lambda_.3} parent=71 // pred_check
          %p534 = pneg %p61
        $region74: #{_lambda_.3} parent=71 // pred_check_branch
          %536 = sbr.rel (%p534) target = $region76
        $region75: #{_lambda_.3} parent=71 // pred_region
          %s537 = smul.u32 16, %s35
          %p538 = scmp.lt.s32.totalorder %s34, 1
          %s539 = scalar_select %p538, %s34, 1
          %p540 = scmp.lt.s32.totalorder %s537, 15
          %s541 = scalar_select %p540, %s537, 15
          %s542 = smul.addr %s539, 16
          %s543 = sadd.s32 %s541, %s542
          %s544 = smul.addr %s543, 8
          %s545 = scalar_lea.vmem %s0, %s544
          %s546 = smul.u32 16, %s35
        $region76: #{_lambda_.3} parent=71 // pred_fallthru
          _
        // Predicated region
        $region77: #{_lambda_.3} parent=71 // pred_check
          %p547 = pneg %p89
        $region78: #{_lambda_.3} parent=71 // pred_check_branch
          %549 = sbr.rel (%p547) target = $region80
        $region79: #{_lambda_.3} parent=71 // pred_region
          %s550 = smul.u32 16, %s35
          %p551 = scmp.lt.s32.totalorder %s34, 1
          %s552 = scalar_select %p551, %s34, 1
          %p553 = scmp.lt.s32.totalorder %s550, 15
          %s554 = scalar_select %p553, %s550, 15
          %s555 = smul.addr %s552, 16
          %s556 = sadd.s32 %s554, %s555
          %s557 = smul.addr %s556, 8
          %s558 = scalar_lea.vmem %s1, %s557
          %s559 = smul.u32 16, %s35
        $region80: #{_lambda_.3} parent=71 // pred_fallthru
          _
        // Predicated region
        $region81: #{_lambda_.3} parent=71 // pred_check
          %p560 = pneg %p117
        $region82: #{_lambda_.3} parent=71 // pred_check_branch
          %562 = sbr.rel (%p560) target = $region84
        $region83: #{_lambda_.3} parent=71 // pred_region
          %s563 = smul.u32 2, %s35
          %p564 = scmp.lt.s32.totalorder %s34, 1
          %s565 = scalar_select %p564, %s34, 1
          %p566 = scmp.lt.s32.totalorder %s563, 1
          %s567 = scalar_select %p566, %s563, 1
          %s568 = smul.addr %s565, 2
          %s569 = sadd.s32 %s567, %s568
          %s570 = smul.addr %s569, 8
          %s571 = scalar_lea.vmem %s2, %s570
          %s572 = smul.u32 2, %s35
        $region84: #{_lambda_.3} parent=71 // pred_fallthru
          _
        // Predicated region
        $region85: #{_lambda_.3} parent=71 // pred_check
          %p573 = pneg %p145
        $region86: #{_lambda_.3} parent=71 // pred_check_branch
          %575 = sbr.rel (%p573) target = $region88
        $region87: #{_lambda_.3} parent=71 // pred_region
          %s576 = smul.u32 2, %s35
          %p577 = scmp.lt.s32.totalorder %s34, 1
          %s578 = scalar_select %p577, %s34, 1
          %p579 = scmp.lt.s32.totalorder %s576, 1
          %s580 = scalar_select %p579, %s576, 1
          %s581 = smul.addr %s578, 2
          %s582 = sadd.s32 %s580, %s581
          %s583 = smul.addr %s582, 8
          %s584 = scalar_lea.vmem %s3, %s583
          %s585 = smul.u32 2, %s35
        $region88: #{_lambda_.3} parent=71 // pred_fallthru
          _
      $region72: #{_lambda_.3} parent=5 // pred_fallthru
        _
      %p586 = scmp.le.s32.totalorder 1, %s27
      %p587 = scmp.lt.s32.totalorder %s27, 3
      %p588 = pnand %p586, %p587
      %p589 = pneg %p588
      // Predicated region
      $region89: #{_lambda_.3} parent=5 // pred_check
        _
      $region90: #{_lambda_.3} parent=5 // pred_check_branch
        %591 = sbr.rel (%p588) target = $region92
      $region91: #{_lambda_.3} parent=5 // pred_region
        %s592 = ssub.s32 %s27, 1
        %s593 = smul.u32 16, %s37
        %p594 = scmp.lt.s32.totalorder %s36, 1
        %s595 = scalar_select %p594, %s36, 1
        %p596 = scmp.lt.s32.totalorder %s593, 15
        %s597 = scalar_select %p596, %s593, 15
        %s598 = smul.addr %s595, 16
        %s599 = sadd.s32 %s597, %s598
        %s600 = smul.addr %s599, 8
        %s601 = scalar_lea.vmem %s0, %s600
        %p602 = pneg %p67
        %p603 = pneg %p64
        %s604 = smul.u32 16, %s37
        %p605 = scmp.lt.s32.totalorder %s36, 1
        %s606 = scalar_select %p605, %s36, 1
        %p607 = scmp.lt.s32.totalorder %s604, 15
        %s608 = scalar_select %p607, %s604, 15
        %s609 = smul.addr %s606, 16
        %s610 = sadd.s32 %s608, %s609
        %s611 = smul.addr %s610, 8
        %s612 = scalar_lea.vmem %s1, %s611
        %p613 = pneg %p95
        %p614 = pneg %p92
        %s615 = smul.u32 2, %s37
        %p616 = scmp.lt.s32.totalorder %s36, 1
        %s617 = scalar_select %p616, %s36, 1
        %p618 = scmp.lt.s32.totalorder %s615, 1
        %s619 = scalar_select %p618, %s615, 1
        %s620 = smul.addr %s617, 2
        %s621 = sadd.s32 %s619, %s620
        %s622 = smul.addr %s621, 8
        %s623 = scalar_lea.vmem %s2, %s622
        %p624 = pneg %p123
        %p625 = pneg %p120
        %s626 = smul.u32 2, %s37
        %p627 = scmp.lt.s32.totalorder %s36, 1
        %s628 = scalar_select %p627, %s36, 1
        %p629 = scmp.lt.s32.totalorder %s626, 1
        %s630 = scalar_select %p629, %s626, 1
        %s631 = smul.addr %s628, 2
        %s632 = sadd.s32 %s630, %s631
        %s633 = smul.addr %s632, 8
        %s634 = scalar_lea.vmem %s3, %s633
        %p635 = pneg %p151
        %p636 = pneg %p148
        %p637 = pneg %p172
        %p638 = pneg %p169
        %p639 = pneg %p193
        %p640 = pneg %p190
        %p641 = pneg %p214
        %p642 = pneg %p211
        %p643 = pneg %p235
        %p644 = pneg %p232
        %p645 = pneg %p256
        %p646 = pneg %p253
        %p647 = pneg %p277
        %p648 = pneg %p274
        %p649 = pneg %p298
        %p650 = pneg %p295
        %p651 = pneg %p319
        %p652 = pneg %p316
        %p653 = pneg %p340
        %p654 = pneg %p337
        %p655 = pneg %p361
        %p656 = pneg %p358
        %p657 = pneg %p382
        %p658 = pneg %p379
        %p659 = pneg %p403
        %p660 = pneg %p400
        %p661 = pneg %p424
        %p662 = pneg %p421
        %p663 = pneg %p445
        %p664 = pneg %p442
        %p665 = pneg %p473
        %p666 = pneg %p470
        %s667 = sand.u32 %s460, 1
        %s668 = scalar_lea.sflag [#allocation3], %s667
        %s669 = sand.u32 %s460, 1
        %s670 = smul.addr %s669, 16
        %s671 = scalar_lea.vmem [#allocation2], %s670
        %s672 = smul.u32 16, %s37
        %p673 = scmp.lt.s32.totalorder %s36, 1
        %s674 = scalar_select %p673, %s36, 1
        %p675 = scmp.lt.s32.totalorder %s672, 15
        %s676 = scalar_select %p675, %s672, 15
        %s677 = smul.addr %s674, 16
        %s678 = sadd.s32 %s676, %s677
        %s679 = smul.addr %s678, 8
        %s680 = scalar_lea.vmem %s0, %s679
        %s681 = smul.u32 16, %s37
        %s682 = smul.u32 16, %s37
        %p683 = scmp.lt.s32.totalorder %s36, 1
        %s684 = scalar_select %p683, %s36, 1
        %p685 = scmp.lt.s32.totalorder %s682, 15
        %s686 = scalar_select %p685, %s682, 15
        %s687 = smul.addr %s684, 16
        %s688 = sadd.s32 %s686, %s687
        %s689 = smul.addr %s688, 8
        %s690 = scalar_lea.vmem %s1, %s689
        %s691 = smul.u32 16, %s37
        %s692 = smul.u32 2, %s37
        %p693 = scmp.lt.s32.totalorder %s36, 1
        %s694 = scalar_select %p693, %s36, 1
        %p695 = scmp.lt.s32.totalorder %s692, 1
        %s696 = scalar_select %p695, %s692, 1
        %s697 = smul.addr %s694, 2
        %s698 = sadd.s32 %s696, %s697
        %s699 = smul.addr %s698, 8
        %s700 = scalar_lea.vmem %s2, %s699
        %s701 = smul.u32 2, %s37
        %s702 = smul.u32 2, %s37
        %p703 = scmp.lt.s32.totalorder %s36, 1
        %s704 = scalar_select %p703, %s36, 1
        %p705 = scmp.lt.s32.totalorder %s702, 1
        %s706 = scalar_select %p705, %s702, 1
        %s707 = smul.addr %s704, 2
        %s708 = sadd.s32 %s706, %s707
        %s709 = smul.addr %s708, 8
        %s710 = scalar_lea.vmem %s3, %s709
        %s711 = smul.u32 2, %s37
        %s712 = smul.u32 2, %s37
        %v713 = vld [vmem:[%s690] sm:$0xff]
        %v714 = vld [vmem:[%s690 + $0x8] sm:$0xff]
        %v715 = vld [vmem:[%s690 + $0x10] sm:$0xff]
        %v716 = vld [vmem:[%s690 + $0x18] sm:$0xff]
        %v717 = vld [vmem:[%s690 + $0x20] sm:$0xff]
        %v718 = vld [vmem:[%s690 + $0x28] sm:$0xff]
        %v719 = vld [vmem:[%s690 + $0x30] sm:$0xff]
        %v720 = vld [vmem:[%s690 + $0x38] sm:$0xff]
        %v721 = vld [vmem:[%s690 + $0x40] sm:$0xff]
        %v722 = vld [vmem:[%s690 + $0x48] sm:$0xff]
        %v723 = vld [vmem:[%s690 + $0x50] sm:$0xff]
        %v724 = vld [vmem:[%s690 + $0x58] sm:$0xff]
        %v725 = vld [vmem:[%s690 + $0x60] sm:$0xff]
        %v726 = vld [vmem:[%s690 + $0x68] sm:$0xff]
        %v727 = vld [vmem:[%s690 + $0x70] sm:$0xff]
        %v728 = vld [vmem:[%s690 + $0x78] sm:$0xff]
        %v729 = vld [vmem:[%s700] sm:$0xff]
        %v730 = vld [vmem:[%s700 + $0x8] sm:$0xff]
        %v731 = vld [vmem:[%s710] sm:$0xff]
        %v732 = vld [vmem:[%s710 + $0x8] sm:$0xff]
        %v733 = vld [vmem:[%s680] sm:$0xff]
        %v734 = vld [vmem:[%s680 + $0x8] sm:$0xff]
        %v735 = vld [vmem:[%s680 + $0x10] sm:$0xff]
        %v736 = vld [vmem:[%s680 + $0x18] sm:$0xff]
        %v737 = vld [vmem:[%s680 + $0x20] sm:$0xff]
        %v738 = vld [vmem:[%s680 + $0x28] sm:$0xff]
        %v739 = vld [vmem:[%s680 + $0x30] sm:$0xff]
        %v740 = vld [vmem:[%s680 + $0x38] sm:$0xff]
        %v741 = vld [vmem:[%s680 + $0x40] sm:$0xff]
        %v742 = vld [vmem:[%s680 + $0x48] sm:$0xff]
        %v743 = vld [vmem:[%s680 + $0x50] sm:$0xff]
        %v744 = vld [vmem:[%s680 + $0x58] sm:$0xff]
        %v745 = vld [vmem:[%s680 + $0x60] sm:$0xff]
        %v746 = vld [vmem:[%s680 + $0x68] sm:$0xff]
        %v747 = vld [vmem:[%s680 + $0x70] sm:$0xff]
        %v748 = vld [vmem:[%s680 + $0x78] sm:$0xff]
        %v749 = vld [vmem:[%s4] sm:$0xff]
        %v750 = vld [vmem:[%s4 + $0x8] sm:$0x1]
        %v751 = vld [vmem:[%s5] sm:$0x1]
        %v752 = vld [vmem:[%s6] sm:$0x1]
        %vm753 = vcmask 72704
        %v755 = vsel %vm753, %v733, 0
        %v758 = vsel %vm753, %v734, 0
        %v761 = vsel %vm753, %v735, 0
        %v764 = vsel %vm753, %v736, 0
        %v767 = vsel %vm753, %v737, 0
        %v770 = vsel %vm753, %v738, 0
        %v773 = vsel %vm753, %v739, 0
        %v776 = vsel %vm753, %v740, 0
        %v779 = vsel %vm753, %v741, 0
        %v782 = vsel %vm753, %v742, 0
        %v785 = vsel %vm753, %v743, 0
        %v788 = vsel %vm753, %v744, 0
        %v791 = vsel %vm753, %v745, 0
        %v794 = vsel %vm753, %v746, 0
        %v797 = vsel %vm753, %v747, 0
        %v800 = vsel %vm753, %v748, 0
        %vm802 = vcmask 1040384
        %v804 = vsel %vm802, %v750, 0
        %806 = vmatprep.subr.mxu0 0.0
        %807 = vmatpush1.msra.mxu0 0.0
        %808 = vmatprep.subr.mxu0 0.0
        %809 = vmatpush1.msra.mxu0 0.0
        %810 = vmatprep.subr.mxu0 0.0
        %811 = vmatpush1.msra.mxu0 0.0
        %812 = vmatprep.subr.mxu0 0.0
        %813 = vmatpush1.msra.mxu0 0.0
        %814 = vmatprep.subr.mxu0 0.0
        %815 = vmatpush1.msra.mxu0 0.0
        %816 = vmatprep.subr.mxu0 0.0
        %817 = vmatpush1.msra.mxu0 0.0
        %818 = vmatprep.subr.mxu0 0.0
        %819 = vmatpush1.msra.mxu0 0.0
        %820 = vmatprep.subr.mxu0 0.0
        %821 = vmatpush1.msra.mxu0 0.0
        %822 = vmatprep.subr.mxu0 0.0
        %823 = vmatpush1.msra.mxu0 0.0
        %824 = vmatprep.subr.mxu0 0.0
        %825 = vmatpush1.msra.mxu0 0.0
        %826 = vmatprep.subr.mxu0 0.0
        %827 = vmatpush1.msra.mxu0 0.0
        %828 = vmatprep.subr.mxu0 0.0
        %829 = vmatpush1.msra.mxu0 0.0
        %830 = vmatprep.subr.mxu0 0.0
        %831 = vmatpush1.msra.mxu0 0.0
        %832 = vmatprep.subr.mxu0 0.0
        %833 = vmatpush1.msra.mxu0 0.0
        %834 = vmatprep.subr.mxu0 0.0
        %835 = vmatpush1.msra.mxu0 %v804
        %836 = vmatprep.subr.mxu0 0.0
        %837 = vmatpush1.msra.mxu0 %v749
        %838 = vmatprep.subr.mxu0 0.0
        %839 = vmatpush2.msra.mxu0 0.0
        %840 = vmatprep.subr.mxu0 0.0
        %841 = vmatpush2.msra.mxu0 0.0
        %842 = vmatprep.subr.mxu0 0.0
        %843 = vmatpush2.msra.mxu0 0.0
        %844 = vmatprep.subr.mxu0 0.0
        %845 = vmatpush2.msra.mxu0 0.0
        %846 = vmatprep.subr.mxu0 0.0
        %847 = vmatpush2.msra.mxu0 0.0
        %848 = vmatprep.subr.mxu0 0.0
        %849 = vmatpush2.msra.mxu0 0.0
        %850 = vmatprep.subr.mxu0 0.0
        %851 = vmatpush2.msra.mxu0 0.0
        %852 = vmatprep.subr.mxu0 0.0
        %853 = vmatpush2.msra.mxu0 0.0
        %854 = vmatprep.subr.mxu0 0.0
        %855 = vmatpush2.msra.mxu0 0.0
        %856 = vmatprep.subr.mxu0 0.0
        %857 = vmatpush2.msra.mxu0 0.0
        %858 = vmatprep.subr.mxu0 0.0
        %859 = vmatpush2.msra.mxu0 0.0
        %860 = vmatprep.subr.mxu0 0.0
        %861 = vmatpush2.msra.mxu0 0.0
        %862 = vmatprep.subr.mxu0 0.0
        %863 = vmatpush2.msra.mxu0 0.0
        %864 = vmatprep.subr.mxu0 0.0
        %865 = vmatpush2.msra.mxu0 0.0
        %866 = vmatprep.subr.mxu0 0.0
        %867 = vmatpush2.msra.mxu0 0.0
        %868 = vmatprep.subr.mxu0 0.0
        %869 = vmatpush2.msra.mxu0 0.0
        %870 = vmatprep.mubr.f32.mxu0 0.0
        %871 = vmatmul.mubr.f32.gmra.mxu0 %v755
        %v872 = vpop.f32.mrf.mxu0
        %v873 = vadd.f32 0.0, %v872
        %v874 = vpop.f32.mrf.mxu0
        %875 = vmatprep.mubr.f32.mxu0 0.0
        %876 = vmatmul.mubr.f32.gmra.mxu0 %v758
        %v877 = vpop.f32.mrf.mxu0
        %v878 = vadd.f32 0.0, %v877
        %v879 = vpop.f32.mrf.mxu0
        %880 = vmatprep.mubr.f32.mxu0 0.0
        %881 = vmatmul.mubr.f32.gmra.mxu0 %v761
        %v882 = vpop.f32.mrf.mxu0
        %v883 = vadd.f32 0.0, %v882
        %v884 = vpop.f32.mrf.mxu0
        %885 = vmatprep.mubr.f32.mxu0 0.0
        %886 = vmatmul.mubr.f32.gmra.mxu0 %v764
        %v887 = vpop.f32.mrf.mxu0
        %v888 = vadd.f32 0.0, %v887
        %v889 = vpop.f32.mrf.mxu0
        %890 = vmatprep.mubr.f32.mxu0 0.0
        %891 = vmatmul.mubr.f32.gmra.mxu0 %v767
        %v892 = vpop.f32.mrf.mxu0
        %v893 = vadd.f32 0.0, %v892
        %v894 = vpop.f32.mrf.mxu0
        %895 = vmatprep.mubr.f32.mxu0 0.0
        %896 = vmatmul.mubr.f32.gmra.mxu0 %v770
        %v897 = vpop.f32.mrf.mxu0
        %v898 = vadd.f32 0.0, %v897
        %v899 = vpop.f32.mrf.mxu0
        %900 = vmatprep.mubr.f32.mxu0 0.0
        %901 = vmatmul.mubr.f32.gmra.mxu0 %v773
        %v902 = vpop.f32.mrf.mxu0
        %v903 = vadd.f32 0.0, %v902
        %v904 = vpop.f32.mrf.mxu0
        %905 = vmatprep.mubr.f32.mxu0 0.0
        %906 = vmatmul.mubr.f32.gmra.mxu0 %v776
        %v907 = vpop.f32.mrf.mxu0
        %v908 = vadd.f32 0.0, %v907
        %v909 = vpop.f32.mrf.mxu0
        %910 = vmatprep.mubr.f32.mxu0 0.0
        %911 = vmatmul.mubr.f32.gmra.mxu0 %v779
        %v912 = vpop.f32.mrf.mxu0
        %v913 = vadd.f32 0.0, %v912
        %v914 = vpop.f32.mrf.mxu0
        %915 = vmatprep.mubr.f32.mxu0 0.0
        %916 = vmatmul.mubr.f32.gmra.mxu0 %v782
        %v917 = vpop.f32.mrf.mxu0
        %v918 = vadd.f32 0.0, %v917
        %v919 = vpop.f32.mrf.mxu0
        %920 = vmatprep.mubr.f32.mxu0 0.0
        %921 = vmatmul.mubr.f32.gmra.mxu0 %v785
        %v922 = vpop.f32.mrf.mxu0
        %v923 = vadd.f32 0.0, %v922
        %v924 = vpop.f32.mrf.mxu0
        %925 = vmatprep.mubr.f32.mxu0 0.0
        %926 = vmatmul.mubr.f32.gmra.mxu0 %v788
        %v927 = vpop.f32.mrf.mxu0
        %v928 = vadd.f32 0.0, %v927
        %v929 = vpop.f32.mrf.mxu0
        %930 = vmatprep.mubr.f32.mxu0 0.0
        %931 = vmatmul.mubr.f32.gmra.mxu0 %v791
        %v932 = vpop.f32.mrf.mxu0
        %v933 = vadd.f32 0.0, %v932
        %v934 = vpop.f32.mrf.mxu0
        %935 = vmatprep.mubr.f32.mxu0 0.0
        %936 = vmatmul.mubr.f32.gmra.mxu0 %v794
        %v937 = vpop.f32.mrf.mxu0
        %v938 = vadd.f32 0.0, %v937
        %v939 = vpop.f32.mrf.mxu0
        %940 = vmatprep.mubr.f32.mxu0 0.0
        %941 = vmatmul.mubr.f32.gmra.mxu0 %v797
        %v942 = vpop.f32.mrf.mxu0
        %v943 = vadd.f32 0.0, %v942
        %v944 = vpop.f32.mrf.mxu0
        %945 = vmatprep.mubr.f32.mxu0 0.0
        %946 = vmatmul.mubr.f32.gmra.mxu0 %v800
        %v947 = vpop.f32.mrf.mxu0
        %v948 = vadd.f32 0.0, %v947
        %v949 = vpop.f32.mrf.mxu0
        %950 = vdwg.mxu0
        %v952 = vlaneseq
        %v953 = vshrl.u32 %v952, 7
        %v954 = vsub.s32 0, %v953
        %v955 = vrot.slane %v751, %v954
        %v957 = vmul.f32 %v873, %v955
        %v958 = vmul.f32 %v878, %v955
        %v959 = vmul.f32 %v883, %v955
        %v960 = vmul.f32 %v888, %v955
        %v961 = vmul.f32 %v893, %v955
        %v962 = vmul.f32 %v898, %v955
        %v963 = vmul.f32 %v903, %v955
        %v964 = vmul.f32 %v908, %v955
        %v965 = vmul.f32 %v913, %v955
        %v966 = vmul.f32 %v918, %v955
        %v967 = vmul.f32 %v923, %v955
        %v968 = vmul.f32 %v928, %v955
        %v969 = vmul.f32 %v933, %v955
        %v970 = vmul.f32 %v938, %v955
        %v971 = vmul.f32 %v943, %v955
        %v972 = vmul.f32 %v948, %v955
        %v974 = vlaneseq
        %v975 = vshrl.u32 %v974, 7
        %v976 = vsub.s32 0, %v975
        %v977 = vrot.slane %v752, %v976
        %v979 = vadd.f32 %v957, %v977
        %v980 = vadd.f32 %v958, %v977
        %v981 = vadd.f32 %v959, %v977
        %v982 = vadd.f32 %v960, %v977
        %v983 = vadd.f32 %v961, %v977
        %v984 = vadd.f32 %v962, %v977
        %v985 = vadd.f32 %v963, %v977
        %v986 = vadd.f32 %v964, %v977
        %v987 = vadd.f32 %v965, %v977
        %v988 = vadd.f32 %v966, %v977
        %v989 = vadd.f32 %v967, %v977
        %v990 = vadd.f32 %v968, %v977
        %v991 = vadd.f32 %v969, %v977
        %v992 = vadd.f32 %v970, %v977
        %v993 = vadd.f32 %v971, %v977
        %v994 = vadd.f32 %v972, %v977
        %v995 = vmax.f32 %v979, 0.0
        %v996 = vmax.f32 %v980, 0.0
        %v997 = vmax.f32 %v981, 0.0
        %v998 = vmax.f32 %v982, 0.0
        %v999 = vmax.f32 %v983, 0.0
        %v1000 = vmax.f32 %v984, 0.0
        %v1001 = vmax.f32 %v985, 0.0
        %v1002 = vmax.f32 %v986, 0.0
        %v1003 = vmax.f32 %v987, 0.0
        %v1004 = vmax.f32 %v988, 0.0
        %v1005 = vmax.f32 %v989, 0.0
        %v1006 = vmax.f32 %v990, 0.0
        %v1007 = vmax.f32 %v991, 0.0
        %v1008 = vmax.f32 %v992, 0.0
        %v1009 = vmax.f32 %v993, 0.0
        %v1010 = vmax.f32 %v994, 0.0
        %v1011 = vld [vmem:[%s7] sm:$0xff]
        %v1012 = vld [vmem:[%s8] sm:$0x1]
        %v1013 = vld [vmem:[%s9] sm:$0x1]
        %vm1014 = vcmask 64512
        %v1016 = vsel %vm1014, %v995, 0
        %v1019 = vsel %vm1014, %v996, 0
        %v1022 = vsel %vm1014, %v997, 0
        %v1025 = vsel %vm1014, %v998, 0
        %v1028 = vsel %vm1014, %v999, 0
        %v1031 = vsel %vm1014, %v1000, 0
        %v1034 = vsel %vm1014, %v1001, 0
        %v1037 = vsel %vm1014, %v1002, 0
        %v1040 = vsel %vm1014, %v1003, 0
        %v1043 = vsel %vm1014, %v1004, 0
        %v1046 = vsel %vm1014, %v1005, 0
        %v1049 = vsel %vm1014, %v1006, 0
        %v1052 = vsel %vm1014, %v1007, 0
        %v1055 = vsel %vm1014, %v1008, 0
        %v1058 = vsel %vm1014, %v1009, 0
        %v1061 = vsel %vm1014, %v1010, 0
        %1063 = vmatprep.subr.mxu0 0.0
        %1064 = vmatpush1.msra.mxu0 0.0
        %1065 = vmatprep.subr.mxu0 0.0
        %1066 = vmatpush1.msra.mxu0 0.0
        %1067 = vmatprep.subr.mxu0 0.0
        %1068 = vmatpush1.msra.mxu0 0.0
        %1069 = vmatprep.subr.mxu0 0.0
        %1070 = vmatpush1.msra.mxu0 0.0
        %1071 = vmatprep.subr.mxu0 0.0
        %1072 = vmatpush1.msra.mxu0 0.0
        %1073 = vmatprep.subr.mxu0 0.0
        %1074 = vmatpush1.msra.mxu0 0.0
        %1075 = vmatprep.subr.mxu0 0.0
        %1076 = vmatpush1.msra.mxu0 0.0
        %1077 = vmatprep.subr.mxu0 0.0
        %1078 = vmatpush1.msra.mxu0 0.0
        %1079 = vmatprep.subr.mxu0 0.0
        %1080 = vmatpush1.msra.mxu0 0.0
        %1081 = vmatprep.subr.mxu0 0.0
        %1082 = vmatpush1.msra.mxu0 0.0
        %1083 = vmatprep.subr.mxu0 0.0
        %1084 = vmatpush1.msra.mxu0 0.0
        %1085 = vmatprep.subr.mxu0 0.0
        %1086 = vmatpush1.msra.mxu0 0.0
        %1087 = vmatprep.subr.mxu0 0.0
        %1088 = vmatpush1.msra.mxu0 0.0
        %1089 = vmatprep.subr.mxu0 0.0
        %1090 = vmatpush1.msra.mxu0 0.0
        %1091 = vmatprep.subr.mxu0 0.0
        %1092 = vmatpush1.msra.mxu0 0.0
        %1093 = vmatprep.subr.mxu0 0.0
        %1094 = vmatpush1.msra.mxu0 %v1011
        %1095 = vmatprep.subr.mxu0 0.0
        %1096 = vmatpush2.msra.mxu0 0.0
        %1097 = vmatprep.subr.mxu0 0.0
        %1098 = vmatpush2.msra.mxu0 0.0
        %1099 = vmatprep.subr.mxu0 0.0
        %1100 = vmatpush2.msra.mxu0 0.0
        %1101 = vmatprep.subr.mxu0 0.0
        %1102 = vmatpush2.msra.mxu0 0.0
        %1103 = vmatprep.subr.mxu0 0.0
        %1104 = vmatpush2.msra.mxu0 0.0
        %1105 = vmatprep.subr.mxu0 0.0
        %1106 = vmatpush2.msra.mxu0 0.0
        %1107 = vmatprep.subr.mxu0 0.0
        %1108 = vmatpush2.msra.mxu0 0.0
        %1109 = vmatprep.subr.mxu0 0.0
        %1110 = vmatpush2.msra.mxu0 0.0
        %1111 = vmatprep.subr.mxu0 0.0
        %1112 = vmatpush2.msra.mxu0 0.0
        %1113 = vmatprep.subr.mxu0 0.0
        %1114 = vmatpush2.msra.mxu0 0.0
        %1115 = vmatprep.subr.mxu0 0.0
        %1116 = vmatpush2.msra.mxu0 0.0
        %1117 = vmatprep.subr.mxu0 0.0
        %1118 = vmatpush2.msra.mxu0 0.0
        %1119 = vmatprep.subr.mxu0 0.0
        %1120 = vmatpush2.msra.mxu0 0.0
        %1121 = vmatprep.subr.mxu0 0.0
        %1122 = vmatpush2.msra.mxu0 0.0
        %1123 = vmatprep.subr.mxu0 0.0
        %1124 = vmatpush2.msra.mxu0 0.0
        %1125 = vmatprep.subr.mxu0 0.0
        %1126 = vmatpush2.msra.mxu0 0.0
        %1127 = vmatprep.mubr.f32.mxu0 0.0
        %1128 = vmatmul.mubr.f32.gmra.mxu0 %v1016
        %v1129 = vpop.f32.mrf.mxu0
        %v1130 = vadd.f32 0.0, %v1129
        %v1131 = vpop.f32.mrf.mxu0
        %1132 = vmatprep.mubr.f32.mxu0 0.0
        %1133 = vmatmul.mubr.f32.gmra.mxu0 %v1019
        %v1134 = vpop.f32.mrf.mxu0
        %v1135 = vadd.f32 0.0, %v1134
        %v1136 = vpop.f32.mrf.mxu0
        %1137 = vmatprep.mubr.f32.mxu0 0.0
        %1138 = vmatmul.mubr.f32.gmra.mxu0 %v1022
        %v1139 = vpop.f32.mrf.mxu0
        %v1140 = vadd.f32 0.0, %v1139
        %v1141 = vpop.f32.mrf.mxu0
        %1142 = vmatprep.mubr.f32.mxu0 0.0
        %1143 = vmatmul.mubr.f32.gmra.mxu0 %v1025
        %v1144 = vpop.f32.mrf.mxu0
        %v1145 = vadd.f32 0.0, %v1144
        %v1146 = vpop.f32.mrf.mxu0
        %1147 = vmatprep.mubr.f32.mxu0 0.0
        %1148 = vmatmul.mubr.f32.gmra.mxu0 %v1028
        %v1149 = vpop.f32.mrf.mxu0
        %v1150 = vadd.f32 0.0, %v1149
        %v1151 = vpop.f32.mrf.mxu0
        %1152 = vmatprep.mubr.f32.mxu0 0.0
        %1153 = vmatmul.mubr.f32.gmra.mxu0 %v1031
        %v1154 = vpop.f32.mrf.mxu0
        %v1155 = vadd.f32 0.0, %v1154
        %v1156 = vpop.f32.mrf.mxu0
        %1157 = vmatprep.mubr.f32.mxu0 0.0
        %1158 = vmatmul.mubr.f32.gmra.mxu0 %v1034
        %v1159 = vpop.f32.mrf.mxu0
        %v1160 = vadd.f32 0.0, %v1159
        %v1161 = vpop.f32.mrf.mxu0
        %1162 = vmatprep.mubr.f32.mxu0 0.0
        %1163 = vmatmul.mubr.f32.gmra.mxu0 %v1037
        %v1164 = vpop.f32.mrf.mxu0
        %v1165 = vadd.f32 0.0, %v1164
        %v1166 = vpop.f32.mrf.mxu0
        %1167 = vmatprep.mubr.f32.mxu0 0.0
        %1168 = vmatmul.mubr.f32.gmra.mxu0 %v1040
        %v1169 = vpop.f32.mrf.mxu0
        %v1170 = vadd.f32 0.0, %v1169
        %v1171 = vpop.f32.mrf.mxu0
        %1172 = vmatprep.mubr.f32.mxu0 0.0
        %1173 = vmatmul.mubr.f32.gmra.mxu0 %v1043
        %v1174 = vpop.f32.mrf.mxu0
        %v1175 = vadd.f32 0.0, %v1174
        %v1176 = vpop.f32.mrf.mxu0
        %1177 = vmatprep.mubr.f32.mxu0 0.0
        %1178 = vmatmul.mubr.f32.gmra.mxu0 %v1046
        %v1179 = vpop.f32.mrf.mxu0
        %v1180 = vadd.f32 0.0, %v1179
        %v1181 = vpop.f32.mrf.mxu0
        %1182 = vmatprep.mubr.f32.mxu0 0.0
        %1183 = vmatmul.mubr.f32.gmra.mxu0 %v1049
        %v1184 = vpop.f32.mrf.mxu0
        %v1185 = vadd.f32 0.0, %v1184
        %v1186 = vpop.f32.mrf.mxu0
        %1187 = vmatprep.mubr.f32.mxu0 0.0
        %1188 = vmatmul.mubr.f32.gmra.mxu0 %v1052
        %v1189 = vpop.f32.mrf.mxu0
        %v1190 = vadd.f32 0.0, %v1189
        %v1191 = vpop.f32.mrf.mxu0
        %1192 = vmatprep.mubr.f32.mxu0 0.0
        %1193 = vmatmul.mubr.f32.gmra.mxu0 %v1055
        %v1194 = vpop.f32.mrf.mxu0
        %v1195 = vadd.f32 0.0, %v1194
        %v1196 = vpop.f32.mrf.mxu0
        %1197 = vmatprep.mubr.f32.mxu0 0.0
        %1198 = vmatmul.mubr.f32.gmra.mxu0 %v1058
        %v1199 = vpop.f32.mrf.mxu0
        %v1200 = vadd.f32 0.0, %v1199
        %v1201 = vpop.f32.mrf.mxu0
        %1202 = vmatprep.mubr.f32.mxu0 0.0
        %1203 = vmatmul.mubr.f32.gmra.mxu0 %v1061
        %v1204 = vpop.f32.mrf.mxu0
        %v1205 = vadd.f32 0.0, %v1204
        %v1206 = vpop.f32.mrf.mxu0
        %1207 = vdwg.mxu0
        %v1209 = vlaneseq
        %v1210 = vshrl.u32 %v1209, 7
        %v1211 = vsub.s32 0, %v1210
        %v1212 = vrot.slane %v1012, %v1211
        %v1214 = vmul.f32 %v1130, %v1212
        %v1215 = vmul.f32 %v1135, %v1212
        %v1216 = vmul.f32 %v1140, %v1212
        %v1217 = vmul.f32 %v1145, %v1212
        %v1218 = vmul.f32 %v1150, %v1212
        %v1219 = vmul.f32 %v1155, %v1212
        %v1220 = vmul.f32 %v1160, %v1212
        %v1221 = vmul.f32 %v1165, %v1212
        %v1222 = vmul.f32 %v1170, %v1212
        %v1223 = vmul.f32 %v1175, %v1212
        %v1224 = vmul.f32 %v1180, %v1212
        %v1225 = vmul.f32 %v1185, %v1212
        %v1226 = vmul.f32 %v1190, %v1212
        %v1227 = vmul.f32 %v1195, %v1212
        %v1228 = vmul.f32 %v1200, %v1212
        %v1229 = vmul.f32 %v1205, %v1212
        %v1231 = vlaneseq
        %v1232 = vshrl.u32 %v1231, 7
        %v1233 = vsub.s32 0, %v1232
        %v1234 = vrot.slane %v1013, %v1233
        %v1236 = vadd.f32 %v1214, %v1234
        %v1237 = vadd.f32 %v1215, %v1234
        %v1238 = vadd.f32 %v1216, %v1234
        %v1239 = vadd.f32 %v1217, %v1234
        %v1240 = vadd.f32 %v1218, %v1234
        %v1241 = vadd.f32 %v1219, %v1234
        %v1242 = vadd.f32 %v1220, %v1234
        %v1243 = vadd.f32 %v1221, %v1234
        %v1244 = vadd.f32 %v1222, %v1234
        %v1245 = vadd.f32 %v1223, %v1234
        %v1246 = vadd.f32 %v1224, %v1234
        %v1247 = vadd.f32 %v1225, %v1234
        %v1248 = vadd.f32 %v1226, %v1234
        %v1249 = vadd.f32 %v1227, %v1234
        %v1250 = vadd.f32 %v1228, %v1234
        %v1251 = vadd.f32 %v1229, %v1234
        %v1252 = vmax.f32 %v1236, 0.0
        %v1253 = vmax.f32 %v1237, 0.0
        %v1254 = vmax.f32 %v1238, 0.0
        %v1255 = vmax.f32 %v1239, 0.0
        %v1256 = vmax.f32 %v1240, 0.0
        %v1257 = vmax.f32 %v1241, 0.0
        %v1258 = vmax.f32 %v1242, 0.0
        %v1259 = vmax.f32 %v1243, 0.0
        %v1260 = vmax.f32 %v1244, 0.0
        %v1261 = vmax.f32 %v1245, 0.0
        %v1262 = vmax.f32 %v1246, 0.0
        %v1263 = vmax.f32 %v1247, 0.0
        %v1264 = vmax.f32 %v1248, 0.0
        %v1265 = vmax.f32 %v1249, 0.0
        %v1266 = vmax.f32 %v1250, 0.0
        %v1267 = vmax.f32 %v1251, 0.0
        %v1270 = vcombine.high %v729, %v729
        %v1272 = vunpack.c.l.s4 1966171168
        %v1273 = vunpack.c.0.s8 %v1272
        %v1274 = vlaneseq
        %v1275 = vshrl.u32 %v1274, 7
        %v1276 = vsub.s32 %v1273, %v1275
        %v1277 = vrot.slane %v729, %v1276
        %v1279 = vunpack.c.l.s4 1966171168
        %v1280 = vunpack.c.0.s8 %v1279
        %v1281 = vlaneseq
        %v1282 = vshrl.u32 %v1281, 7
        %v1283 = vsub.s32 %v1280, %v1282
        %v1284 = vrot.slane %v1270, %v1283
        %v1285 = vcombine.high %v1277, %v1277
        %v1286 = vcombine.high %v1284, %v1284
        %v1288 = vunpack.c.l.s4 1966171168
        %v1289 = vunpack.c.0.s8 %v1288
        %v1290 = vlaneseq
        %v1291 = vshrl.u32 %v1290, 7
        %v1292 = vsub.s32 %v1289, %v1291
        %v1293 = vrot.slane %v1277, %v1292
        %v1295 = vunpack.c.l.s4 1966171168
        %v1296 = vunpack.c.0.s8 %v1295
        %v1297 = vlaneseq
        %v1298 = vshrl.u32 %v1297, 7
        %v1299 = vsub.s32 %v1296, %v1298
        %v1300 = vrot.slane %v1284, %v1299
        %v1302 = vunpack.c.l.s4 1966171168
        %v1303 = vunpack.c.0.s8 %v1302
        %v1304 = vlaneseq
        %v1305 = vshrl.u32 %v1304, 7
        %v1306 = vsub.s32 %v1303, %v1305
        %v1307 = vrot.slane %v1285, %v1306
        %v1309 = vunpack.c.l.s4 1966171168
        %v1310 = vunpack.c.0.s8 %v1309
        %v1311 = vlaneseq
        %v1312 = vshrl.u32 %v1311, 7
        %v1313 = vsub.s32 %v1310, %v1312
        %v1314 = vrot.slane %v1286, %v1313
        %v1315 = vcombine.high %v1293, %v1293
        %v1316 = vcombine.high %v1300, %v1300
        %v1317 = vcombine.high %v1307, %v1307
        %v1318 = vcombine.high %v1314, %v1314
        %v1319 = vcombine.high %v730, %v730
        %v1321 = vunpack.c.l.s4 1966171168
        %v1322 = vunpack.c.0.s8 %v1321
        %v1323 = vlaneseq
        %v1324 = vshrl.u32 %v1323, 7
        %v1325 = vsub.s32 %v1322, %v1324
        %v1326 = vrot.slane %v730, %v1325
        %v1328 = vunpack.c.l.s4 1966171168
        %v1329 = vunpack.c.0.s8 %v1328
        %v1330 = vlaneseq
        %v1331 = vshrl.u32 %v1330, 7
        %v1332 = vsub.s32 %v1329, %v1331
        %v1333 = vrot.slane %v1319, %v1332
        %v1334 = vcombine.high %v1326, %v1326
        %v1335 = vcombine.high %v1333, %v1333
        %v1337 = vunpack.c.l.s4 1966171168
        %v1338 = vunpack.c.0.s8 %v1337
        %v1339 = vlaneseq
        %v1340 = vshrl.u32 %v1339, 7
        %v1341 = vsub.s32 %v1338, %v1340
        %v1342 = vrot.slane %v1326, %v1341
        %v1344 = vunpack.c.l.s4 1966171168
        %v1345 = vunpack.c.0.s8 %v1344
        %v1346 = vlaneseq
        %v1347 = vshrl.u32 %v1346, 7
        %v1348 = vsub.s32 %v1345, %v1347
        %v1349 = vrot.slane %v1333, %v1348
        %v1351 = vunpack.c.l.s4 1966171168
        %v1352 = vunpack.c.0.s8 %v1351
        %v1353 = vlaneseq
        %v1354 = vshrl.u32 %v1353, 7
        %v1355 = vsub.s32 %v1352, %v1354
        %v1356 = vrot.slane %v1334, %v1355
        %v1358 = vunpack.c.l.s4 1966171168
        %v1359 = vunpack.c.0.s8 %v1358
        %v1360 = vlaneseq
        %v1361 = vshrl.u32 %v1360, 7
        %v1362 = vsub.s32 %v1359, %v1361
        %v1363 = vrot.slane %v1335, %v1362
        %v1364 = vcombine.high %v1342, %v1342
        %v1365 = vcombine.high %v1349, %v1349
        %v1366 = vcombine.high %v1356, %v1356
        %v1367 = vcombine.high %v1363, %v1363
        %v1368 = vlaneseq
        %v1369 = vshrl.u32 %v1368, 7
        %v1370 = vsub.s32 0, %v1369
        %v1371 = vrot.slane %v1293, %v1370
        %v1372 = vlaneseq
        %v1373 = vshrl.u32 %v1372, 7
        %v1374 = vsub.s32 0, %v1373
        %v1375 = vrot.slane %v1307, %v1374
        %v1376 = vlaneseq
        %v1377 = vshrl.u32 %v1376, 7
        %v1378 = vsub.s32 0, %v1377
        %v1379 = vrot.slane %v1315, %v1378
        %v1380 = vlaneseq
        %v1381 = vshrl.u32 %v1380, 7
        %v1382 = vsub.s32 0, %v1381
        %v1383 = vrot.slane %v1317, %v1382
        %v1384 = vlaneseq
        %v1385 = vshrl.u32 %v1384, 7
        %v1386 = vsub.s32 0, %v1385
        %v1387 = vrot.slane %v1300, %v1386
        %v1388 = vlaneseq
        %v1389 = vshrl.u32 %v1388, 7
        %v1390 = vsub.s32 0, %v1389
        %v1391 = vrot.slane %v1314, %v1390
        %v1392 = vlaneseq
        %v1393 = vshrl.u32 %v1392, 7
        %v1394 = vsub.s32 0, %v1393
        %v1395 = vrot.slane %v1316, %v1394
        %v1396 = vlaneseq
        %v1397 = vshrl.u32 %v1396, 7
        %v1398 = vsub.s32 0, %v1397
        %v1399 = vrot.slane %v1318, %v1398
        %v1400 = vlaneseq
        %v1401 = vshrl.u32 %v1400, 7
        %v1402 = vsub.s32 0, %v1401
        %v1403 = vrot.slane %v1342, %v1402
        %v1404 = vlaneseq
        %v1405 = vshrl.u32 %v1404, 7
        %v1406 = vsub.s32 0, %v1405
        %v1407 = vrot.slane %v1356, %v1406
        %v1408 = vlaneseq
        %v1409 = vshrl.u32 %v1408, 7
        %v1410 = vsub.s32 0, %v1409
        %v1411 = vrot.slane %v1364, %v1410
        %v1412 = vlaneseq
        %v1413 = vshrl.u32 %v1412, 7
        %v1414 = vsub.s32 0, %v1413
        %v1415 = vrot.slane %v1366, %v1414
        %v1416 = vlaneseq
        %v1417 = vshrl.u32 %v1416, 7
        %v1418 = vsub.s32 0, %v1417
        %v1419 = vrot.slane %v1349, %v1418
        %v1420 = vlaneseq
        %v1421 = vshrl.u32 %v1420, 7
        %v1422 = vsub.s32 0, %v1421
        %v1423 = vrot.slane %v1363, %v1422
        %v1424 = vlaneseq
        %v1425 = vshrl.u32 %v1424, 7
        %v1426 = vsub.s32 0, %v1425
        %v1427 = vrot.slane %v1365, %v1426
        %v1428 = vlaneseq
        %v1429 = vshrl.u32 %v1428, 7
        %v1430 = vsub.s32 0, %v1429
        %v1431 = vrot.slane %v1367, %v1430
        %v1448 = vsub.f32 %v1371, %v713
        %v1449 = vsub.f32 %v1375, %v714
        %v1450 = vsub.f32 %v1379, %v715
        %v1451 = vsub.f32 %v1383, %v716
        %v1452 = vsub.f32 %v1387, %v717
        %v1453 = vsub.f32 %v1391, %v718
        %v1454 = vsub.f32 %v1395, %v719
        %v1455 = vsub.f32 %v1399, %v720
        %v1456 = vsub.f32 %v1403, %v721
        %v1457 = vsub.f32 %v1407, %v722
        %v1458 = vsub.f32 %v1411, %v723
        %v1459 = vsub.f32 %v1415, %v724
        %v1460 = vsub.f32 %v1419, %v725
        %v1461 = vsub.f32 %v1423, %v726
        %v1462 = vsub.f32 %v1427, %v727
        %v1463 = vsub.f32 %v1431, %v728
        %v1464 = vand.u32 2147483647, %v1448
        %v1465 = vand.u32 2147483647, %v1449
        %v1466 = vand.u32 2147483647, %v1450
        %v1467 = vand.u32 2147483647, %v1451
        %v1468 = vand.u32 2147483647, %v1452
        %v1469 = vand.u32 2147483647, %v1453
        %v1470 = vand.u32 2147483647, %v1454
        %v1471 = vand.u32 2147483647, %v1455
        %v1472 = vand.u32 2147483647, %v1456
        %v1473 = vand.u32 2147483647, %v1457
        %v1474 = vand.u32 2147483647, %v1458
        %v1475 = vand.u32 2147483647, %v1459
        %v1476 = vand.u32 2147483647, %v1460
        %v1477 = vand.u32 2147483647, %v1461
        %v1478 = vand.u32 2147483647, %v1462
        %v1479 = vand.u32 2147483647, %v1463
        %v1480 = vsel %vm1014, %v1464, 0.0
        %1481 = vadd.xlane.f32.xlu0 %v1480
        %v1482 = vpop.xlane.xlu0 %1481
        %v1483 = vsel %vm1014, %v1465, 0.0
        %1484 = vadd.xlane.f32.xlu0 %v1483
        %v1485 = vpop.xlane.xlu0 %1484
        %v1486 = vsel %vm1014, %v1466, 0.0
        %1487 = vadd.xlane.f32.xlu0 %v1486
        %v1488 = vpop.xlane.xlu0 %1487
        %v1489 = vsel %vm1014, %v1467, 0.0
        %1490 = vadd.xlane.f32.xlu0 %v1489
        %v1491 = vpop.xlane.xlu0 %1490
        %v1492 = vsel %vm1014, %v1468, 0.0
        %1493 = vadd.xlane.f32.xlu0 %v1492
        %v1494 = vpop.xlane.xlu0 %1493
        %v1495 = vsel %vm1014, %v1469, 0.0
        %1496 = vadd.xlane.f32.xlu0 %v1495
        %v1497 = vpop.xlane.xlu0 %1496
        %v1498 = vsel %vm1014, %v1470, 0.0
        %1499 = vadd.xlane.f32.xlu0 %v1498
        %v1500 = vpop.xlane.xlu0 %1499
        %v1501 = vsel %vm1014, %v1471, 0.0
        %1502 = vadd.xlane.f32.xlu0 %v1501
        %v1503 = vpop.xlane.xlu0 %1502
        %v1504 = vsel %vm1014, %v1472, 0.0
        %1505 = vadd.xlane.f32.xlu0 %v1504
        %v1506 = vpop.xlane.xlu0 %1505
        %v1507 = vsel %vm1014, %v1473, 0.0
        %1508 = vadd.xlane.f32.xlu0 %v1507
        %v1509 = vpop.xlane.xlu0 %1508
        %v1510 = vsel %vm1014, %v1474, 0.0
        %1511 = vadd.xlane.f32.xlu0 %v1510
        %v1512 = vpop.xlane.xlu0 %1511
        %v1513 = vsel %vm1014, %v1475, 0.0
        %1514 = vadd.xlane.f32.xlu0 %v1513
        %v1515 = vpop.xlane.xlu0 %1514
        %v1516 = vsel %vm1014, %v1476, 0.0
        %1517 = vadd.xlane.f32.xlu0 %v1516
        %v1518 = vpop.xlane.xlu0 %1517
        %v1519 = vsel %vm1014, %v1477, 0.0
        %1520 = vadd.xlane.f32.xlu0 %v1519
        %v1521 = vpop.xlane.xlu0 %1520
        %v1522 = vsel %vm1014, %v1478, 0.0
        %1523 = vadd.xlane.f32.xlu0 %v1522
        %v1524 = vpop.xlane.xlu0 %1523
        %v1525 = vsel %vm1014, %v1479, 0.0
        %1526 = vadd.xlane.f32.xlu0 %v1525
        %v1527 = vpop.xlane.xlu0 %1526
        %v1528 = vrcp.pop 8.0
        %v1529 = vmul.f32 %v1482, %v1528
        %v1530 = vmul.f32 %v1485, %v1528
        %v1531 = vmul.f32 %v1488, %v1528
        %v1532 = vmul.f32 %v1491, %v1528
        %v1533 = vmul.f32 %v1494, %v1528
        %v1534 = vmul.f32 %v1497, %v1528
        %v1535 = vmul.f32 %v1500, %v1528
        %v1536 = vmul.f32 %v1503, %v1528
        %v1537 = vmul.f32 %v1506, %v1528
        %v1538 = vmul.f32 %v1509, %v1528
        %v1539 = vmul.f32 %v1512, %v1528
        %v1540 = vmul.f32 %v1515, %v1528
        %v1541 = vmul.f32 %v1518, %v1528
        %v1542 = vmul.f32 %v1521, %v1528
        %v1543 = vmul.f32 %v1524, %v1528
        %v1544 = vmul.f32 %v1527, %v1528
        %v1545 = vsub.f32 0.0, %v1529
        %v1546 = vsub.f32 0.0, %v1530
        %v1547 = vsub.f32 0.0, %v1531
        %v1548 = vsub.f32 0.0, %v1532
        %v1549 = vsub.f32 0.0, %v1533
        %v1550 = vsub.f32 0.0, %v1534
        %v1551 = vsub.f32 0.0, %v1535
        %v1552 = vsub.f32 0.0, %v1536
        %v1553 = vsub.f32 0.0, %v1537
        %v1554 = vsub.f32 0.0, %v1538
        %v1555 = vsub.f32 0.0, %v1539
        %v1556 = vsub.f32 0.0, %v1540
        %v1557 = vsub.f32 0.0, %v1541
        %v1558 = vsub.f32 0.0, %v1542
        %v1559 = vsub.f32 0.0, %v1543
        %v1560 = vsub.f32 0.0, %v1544
        %v1561 = vmul.f32 %v1545, 1.442695
        %v1562 = vpow.pop %v1561
        %v1563 = vmul.f32 %v1546, 1.442695
        %v1564 = vpow.pop %v1563
        %v1565 = vmul.f32 %v1547, 1.442695
        %v1566 = vpow.pop %v1565
        %v1567 = vmul.f32 %v1548, 1.442695
        %v1568 = vpow.pop %v1567
        %v1569 = vmul.f32 %v1549, 1.442695
        %v1570 = vpow.pop %v1569
        %v1571 = vmul.f32 %v1550, 1.442695
        %v1572 = vpow.pop %v1571
        %v1573 = vmul.f32 %v1551, 1.442695
        %v1574 = vpow.pop %v1573
        %v1575 = vmul.f32 %v1552, 1.442695
        %v1576 = vpow.pop %v1575
        %v1577 = vmul.f32 %v1553, 1.442695
        %v1578 = vpow.pop %v1577
        %v1579 = vmul.f32 %v1554, 1.442695
        %v1580 = vpow.pop %v1579
        %v1581 = vmul.f32 %v1555, 1.442695
        %v1582 = vpow.pop %v1581
        %v1583 = vmul.f32 %v1556, 1.442695
        %v1584 = vpow.pop %v1583
        %v1585 = vmul.f32 %v1557, 1.442695
        %v1586 = vpow.pop %v1585
        %v1587 = vmul.f32 %v1558, 1.442695
        %v1588 = vpow.pop %v1587
        %v1589 = vmul.f32 %v1559, 1.442695
        %v1590 = vpow.pop %v1589
        %v1591 = vmul.f32 %v1560, 1.442695
        %v1592 = vpow.pop %v1591
        %v1593 = vmul.f32 %v1562, 0.5
        %v1594 = vmul.f32 %v1564, 0.5
        %v1595 = vmul.f32 %v1566, 0.5
        %v1596 = vmul.f32 %v1568, 0.5
        %v1597 = vmul.f32 %v1570, 0.5
        %v1598 = vmul.f32 %v1572, 0.5
        %v1599 = vmul.f32 %v1574, 0.5
        %v1600 = vmul.f32 %v1576, 0.5
        %v1601 = vmul.f32 %v1578, 0.5
        %v1602 = vmul.f32 %v1580, 0.5
        %v1603 = vmul.f32 %v1582, 0.5
        %v1604 = vmul.f32 %v1584, 0.5
        %v1605 = vmul.f32 %v1586, 0.5
        %v1606 = vmul.f32 %v1588, 0.5
        %v1607 = vmul.f32 %v1590, 0.5
        %v1608 = vmul.f32 %v1592, 0.5
        %v1609 = vlaneseq
        %v1610 = vshrl.u32 %v1609, 7
        %v1611 = vsub.s32 0, %v1610
        %v1612 = vrot.slane %v731, %v1611
        %1614 = vbcast.lane.b32.xlu0 %v1612, 256
        %v1615 = vpop.permute.xlu0 %1614
        %v1616 = vlaneseq
        %v1617 = vshrl.u32 %v1616, 7
        %v1618 = vsub.s32 1, %v1617
        %v1619 = vrot.slane %v731, %v1618
        %1621 = vbcast.lane.b32.xlu0 %v1619, 256
        %v1622 = vpop.permute.xlu0 %1621
        %v1623 = vlaneseq
        %v1624 = vshrl.u32 %v1623, 7
        %v1625 = vsub.s32 2, %v1624
        %v1626 = vrot.slane %v731, %v1625
        %1628 = vbcast.lane.b32.xlu0 %v1626, 256
        %v1629 = vpop.permute.xlu0 %1628
        %v1630 = vlaneseq
        %v1631 = vshrl.u32 %v1630, 7
        %v1632 = vsub.s32 3, %v1631
        %v1633 = vrot.slane %v731, %v1632
        %1635 = vbcast.lane.b32.xlu0 %v1633, 256
        %v1636 = vpop.permute.xlu0 %1635
        %v1637 = vlaneseq
        %v1638 = vshrl.u32 %v1637, 7
        %v1639 = vsub.s32 4, %v1638
        %v1640 = vrot.slane %v731, %v1639
        %1642 = vbcast.lane.b32.xlu0 %v1640, 256
        %v1643 = vpop.permute.xlu0 %1642
        %v1644 = vlaneseq
        %v1645 = vshrl.u32 %v1644, 7
        %v1646 = vsub.s32 5, %v1645
        %v1647 = vrot.slane %v731, %v1646
        %1649 = vbcast.lane.b32.xlu0 %v1647, 256
        %v1650 = vpop.permute.xlu0 %1649
        %v1651 = vlaneseq
        %v1652 = vshrl.u32 %v1651, 7
        %v1653 = vsub.s32 6, %v1652
        %v1654 = vrot.slane %v731, %v1653
        %1656 = vbcast.lane.b32.xlu0 %v1654, 256
        %v1657 = vpop.permute.xlu0 %1656
        %v1658 = vlaneseq
        %v1659 = vshrl.u32 %v1658, 7
        %v1660 = vsub.s32 7, %v1659
        %v1661 = vrot.slane %v731, %v1660
        %1663 = vbcast.lane.b32.xlu0 %v1661, 256
        %v1664 = vpop.permute.xlu0 %1663
        %v1665 = vlaneseq
        %v1666 = vshrl.u32 %v1665, 7
        %v1667 = vsub.s32 0, %v1666
        %v1668 = vrot.slane %v732, %v1667
        %1670 = vbcast.lane.b32.xlu0 %v1668, 256
        %v1671 = vpop.permute.xlu0 %1670
        %v1672 = vlaneseq
        %v1673 = vshrl.u32 %v1672, 7
        %v1674 = vsub.s32 1, %v1673
        %v1675 = vrot.slane %v732, %v1674
        %1677 = vbcast.lane.b32.xlu0 %v1675, 256
        %v1678 = vpop.permute.xlu0 %1677
        %v1679 = vlaneseq
        %v1680 = vshrl.u32 %v1679, 7
        %v1681 = vsub.s32 2, %v1680
        %v1682 = vrot.slane %v732, %v1681
        %1684 = vbcast.lane.b32.xlu0 %v1682, 256
        %v1685 = vpop.permute.xlu0 %1684
        %v1686 = vlaneseq
        %v1687 = vshrl.u32 %v1686, 7
        %v1688 = vsub.s32 3, %v1687
        %v1689 = vrot.slane %v732, %v1688
        %1691 = vbcast.lane.b32.xlu0 %v1689, 256
        %v1692 = vpop.permute.xlu0 %1691
        %v1693 = vlaneseq
        %v1694 = vshrl.u32 %v1693, 7
        %v1695 = vsub.s32 4, %v1694
        %v1696 = vrot.slane %v732, %v1695
        %1698 = vbcast.lane.b32.xlu0 %v1696, 256
        %v1699 = vpop.permute.xlu0 %1698
        %v1700 = vlaneseq
        %v1701 = vshrl.u32 %v1700, 7
        %v1702 = vsub.s32 5, %v1701
        %v1703 = vrot.slane %v732, %v1702
        %1705 = vbcast.lane.b32.xlu0 %v1703, 256
        %v1706 = vpop.permute.xlu0 %1705
        %v1707 = vlaneseq
        %v1708 = vshrl.u32 %v1707, 7
        %v1709 = vsub.s32 6, %v1708
        %v1710 = vrot.slane %v732, %v1709
        %1712 = vbcast.lane.b32.xlu0 %v1710, 256
        %v1713 = vpop.permute.xlu0 %1712
        %v1714 = vlaneseq
        %v1715 = vshrl.u32 %v1714, 7
        %v1716 = vsub.s32 7, %v1715
        %v1717 = vrot.slane %v732, %v1716
        %1719 = vbcast.lane.b32.xlu0 %v1717, 256
        %v1720 = vpop.permute.xlu0 %1719
        %v1721 = vld [vmem:[%s10] sm:$0x1]
        %v1723 = vlaneseq
        %v1724 = vshrl.u32 %v1723, 7
        %v1725 = vsub.s32 0, %v1724
        %v1726 = vrot.slane %v1721, %v1725
        %v1728 = vmul.f32 %v1615, %v1726
        %v1729 = vmul.f32 %v1622, %v1726
        %v1730 = vmul.f32 %v1629, %v1726
        %v1731 = vmul.f32 %v1636, %v1726
        %v1732 = vmul.f32 %v1643, %v1726
        %v1733 = vmul.f32 %v1650, %v1726
        %v1734 = vmul.f32 %v1657, %v1726
        %v1735 = vmul.f32 %v1664, %v1726
        %v1736 = vmul.f32 %v1671, %v1726
        %v1737 = vmul.f32 %v1678, %v1726
        %v1738 = vmul.f32 %v1685, %v1726
        %v1739 = vmul.f32 %v1692, %v1726
        %v1740 = vmul.f32 %v1699, %v1726
        %v1741 = vmul.f32 %v1706, %v1726
        %v1742 = vmul.f32 %v1713, %v1726
        %v1743 = vmul.f32 %v1720, %v1726
        %v1744 = vld [vmem:[%s11] sm:$0x1]
        %v1746 = vlaneseq
        %v1747 = vshrl.u32 %v1746, 7
        %v1748 = vsub.s32 0, %v1747
        %v1749 = vrot.slane %v1744, %v1748
        %v1751 = vmul.f32 %v1593, %v1749
        %v1752 = vmul.f32 %v1594, %v1749
        %v1753 = vmul.f32 %v1595, %v1749
        %v1754 = vmul.f32 %v1596, %v1749
        %v1755 = vmul.f32 %v1597, %v1749
        %v1756 = vmul.f32 %v1598, %v1749
        %v1757 = vmul.f32 %v1599, %v1749
        %v1758 = vmul.f32 %v1600, %v1749
        %v1759 = vmul.f32 %v1601, %v1749
        %v1760 = vmul.f32 %v1602, %v1749
        %v1761 = vmul.f32 %v1603, %v1749
        %v1762 = vmul.f32 %v1604, %v1749
        %v1763 = vmul.f32 %v1605, %v1749
        %v1764 = vmul.f32 %v1606, %v1749
        %v1765 = vmul.f32 %v1607, %v1749
        %v1766 = vmul.f32 %v1608, %v1749
        %v1767 = vadd.f32 %v1728, %v1751
        %v1768 = vadd.f32 %v1729, %v1752
        %v1769 = vadd.f32 %v1730, %v1753
        %v1770 = vadd.f32 %v1731, %v1754
        %v1771 = vadd.f32 %v1732, %v1755
        %v1772 = vadd.f32 %v1733, %v1756
        %v1773 = vadd.f32 %v1734, %v1757
        %v1774 = vadd.f32 %v1735, %v1758
        %v1775 = vadd.f32 %v1736, %v1759
        %v1776 = vadd.f32 %v1737, %v1760
        %v1777 = vadd.f32 %v1738, %v1761
        %v1778 = vadd.f32 %v1739, %v1762
        %v1779 = vadd.f32 %v1740, %v1763
        %v1780 = vadd.f32 %v1741, %v1764
        %v1781 = vadd.f32 %v1742, %v1765
        %v1782 = vadd.f32 %v1743, %v1766
        %v1783 = vld [vmem:[%s12] sm:$0xff]
        %v1785 = vsel %vm1014, %v713, 0
        %v1788 = vsel %vm1014, %v714, 0
        %v1791 = vsel %vm1014, %v715, 0
        %v1794 = vsel %vm1014, %v716, 0
        %v1797 = vsel %vm1014, %v717, 0
        %v1800 = vsel %vm1014, %v718, 0
        %v1803 = vsel %vm1014, %v719, 0
        %v1806 = vsel %vm1014, %v720, 0
        %v1809 = vsel %vm1014, %v721, 0
        %v1812 = vsel %vm1014, %v722, 0
        %v1815 = vsel %vm1014, %v723, 0
        %v1818 = vsel %vm1014, %v724, 0
        %v1821 = vsel %vm1014, %v725, 0
        %v1824 = vsel %vm1014, %v726, 0
        %v1827 = vsel %vm1014, %v727, 0
        %v1830 = vsel %vm1014, %v728, 0
        %1832 = vmatprep.subr.mxu0 0.0
        %1833 = vmatpush1.msra.mxu0 0.0
        %1834 = vmatprep.subr.mxu0 0.0
        %1835 = vmatpush1.msra.mxu0 0.0
        %1836 = vmatprep.subr.mxu0 0.0
        %1837 = vmatpush1.msra.mxu0 0.0
        %1838 = vmatprep.subr.mxu0 0.0
        %1839 = vmatpush1.msra.mxu0 0.0
        %1840 = vmatprep.subr.mxu0 0.0
        %1841 = vmatpush1.msra.mxu0 0.0
        %1842 = vmatprep.subr.mxu0 0.0
        %1843 = vmatpush1.msra.mxu0 0.0
        %1844 = vmatprep.subr.mxu0 0.0
        %1845 = vmatpush1.msra.mxu0 0.0
        %1846 = vmatprep.subr.mxu0 0.0
        %1847 = vmatpush1.msra.mxu0 0.0
        %1848 = vmatprep.subr.mxu0 0.0
        %1849 = vmatpush1.msra.mxu0 0.0
        %1850 = vmatprep.subr.mxu0 0.0
        %1851 = vmatpush1.msra.mxu0 0.0
        %1852 = vmatprep.subr.mxu0 0.0
        %1853 = vmatpush1.msra.mxu0 0.0
        %1854 = vmatprep.subr.mxu0 0.0
        %1855 = vmatpush1.msra.mxu0 0.0
        %1856 = vmatprep.subr.mxu0 0.0
        %1857 = vmatpush1.msra.mxu0 0.0
        %1858 = vmatprep.subr.mxu0 0.0
        %1859 = vmatpush1.msra.mxu0 0.0
        %1860 = vmatprep.subr.mxu0 0.0
        %1861 = vmatpush1.msra.mxu0 0.0
        %1862 = vmatprep.subr.mxu0 0.0
        %1863 = vmatpush1.msra.mxu0 %v1783
        %1864 = vmatprep.subr.mxu0 0.0
        %1865 = vmatpush2.msra.mxu0 0.0
        %1866 = vmatprep.subr.mxu0 0.0
        %1867 = vmatpush2.msra.mxu0 0.0
        %1868 = vmatprep.subr.mxu0 0.0
        %1869 = vmatpush2.msra.mxu0 0.0
        %1870 = vmatprep.subr.mxu0 0.0
        %1871 = vmatpush2.msra.mxu0 0.0
        %1872 = vmatprep.subr.mxu0 0.0
        %1873 = vmatpush2.msra.mxu0 0.0
        %1874 = vmatprep.subr.mxu0 0.0
        %1875 = vmatpush2.msra.mxu0 0.0
        %1876 = vmatprep.subr.mxu0 0.0
        %1877 = vmatpush2.msra.mxu0 0.0
        %1878 = vmatprep.subr.mxu0 0.0
        %1879 = vmatpush2.msra.mxu0 0.0
        %1880 = vmatprep.subr.mxu0 0.0
        %1881 = vmatpush2.msra.mxu0 0.0
        %1882 = vmatprep.subr.mxu0 0.0
        %1883 = vmatpush2.msra.mxu0 0.0
        %1884 = vmatprep.subr.mxu0 0.0
        %1885 = vmatpush2.msra.mxu0 0.0
        %1886 = vmatprep.subr.mxu0 0.0
        %1887 = vmatpush2.msra.mxu0 0.0
        %1888 = vmatprep.subr.mxu0 0.0
        %1889 = vmatpush2.msra.mxu0 0.0
        %1890 = vmatprep.subr.mxu0 0.0
        %1891 = vmatpush2.msra.mxu0 0.0
        %1892 = vmatprep.subr.mxu0 0.0
        %1893 = vmatpush2.msra.mxu0 0.0
        %1894 = vmatprep.subr.mxu0 0.0
        %1895 = vmatpush2.msra.mxu0 0.0
        %1896 = vmatprep.mubr.f32.mxu0 0.0
        %1897 = vmatmul.mubr.f32.gmra.mxu0 %v1785
        %v1898 = vpop.f32.mrf.mxu0
        %v1899 = vadd.f32 0.0, %v1898
        %v1900 = vpop.f32.mrf.mxu0
        %1901 = vmatprep.mubr.f32.mxu0 0.0
        %1902 = vmatmul.mubr.f32.gmra.mxu0 %v1788
        %v1903 = vpop.f32.mrf.mxu0
        %v1904 = vadd.f32 0.0, %v1903
        %v1905 = vpop.f32.mrf.mxu0
        %1906 = vmatprep.mubr.f32.mxu0 0.0
        %1907 = vmatmul.mubr.f32.gmra.mxu0 %v1791
        %v1908 = vpop.f32.mrf.mxu0
        %v1909 = vadd.f32 0.0, %v1908
        %v1910 = vpop.f32.mrf.mxu0
        %1911 = vmatprep.mubr.f32.mxu0 0.0
        %1912 = vmatmul.mubr.f32.gmra.mxu0 %v1794
        %v1913 = vpop.f32.mrf.mxu0
        %v1914 = vadd.f32 0.0, %v1913
        %v1915 = vpop.f32.mrf.mxu0
        %1916 = vmatprep.mubr.f32.mxu0 0.0
        %1917 = vmatmul.mubr.f32.gmra.mxu0 %v1797
        %v1918 = vpop.f32.mrf.mxu0
        %v1919 = vadd.f32 0.0, %v1918
        %v1920 = vpop.f32.mrf.mxu0
        %1921 = vmatprep.mubr.f32.mxu0 0.0
        %1922 = vmatmul.mubr.f32.gmra.mxu0 %v1800
        %v1923 = vpop.f32.mrf.mxu0
        %v1924 = vadd.f32 0.0, %v1923
        %v1925 = vpop.f32.mrf.mxu0
        %1926 = vmatprep.mubr.f32.mxu0 0.0
        %1927 = vmatmul.mubr.f32.gmra.mxu0 %v1803
        %v1928 = vpop.f32.mrf.mxu0
        %v1929 = vadd.f32 0.0, %v1928
        %v1930 = vpop.f32.mrf.mxu0
        %1931 = vmatprep.mubr.f32.mxu0 0.0
        %1932 = vmatmul.mubr.f32.gmra.mxu0 %v1806
        %v1933 = vpop.f32.mrf.mxu0
        %v1934 = vadd.f32 0.0, %v1933
        %v1935 = vpop.f32.mrf.mxu0
        %1936 = vmatprep.mubr.f32.mxu0 0.0
        %1937 = vmatmul.mubr.f32.gmra.mxu0 %v1809
        %v1938 = vpop.f32.mrf.mxu0
        %v1939 = vadd.f32 0.0, %v1938
        %v1940 = vpop.f32.mrf.mxu0
        %1941 = vmatprep.mubr.f32.mxu0 0.0
        %1942 = vmatmul.mubr.f32.gmra.mxu0 %v1812
        %v1943 = vpop.f32.mrf.mxu0
        %v1944 = vadd.f32 0.0, %v1943
        %v1945 = vpop.f32.mrf.mxu0
        %1946 = vmatprep.mubr.f32.mxu0 0.0
        %1947 = vmatmul.mubr.f32.gmra.mxu0 %v1815
        %v1948 = vpop.f32.mrf.mxu0
        %v1949 = vadd.f32 0.0, %v1948
        %v1950 = vpop.f32.mrf.mxu0
        %1951 = vmatprep.mubr.f32.mxu0 0.0
        %1952 = vmatmul.mubr.f32.gmra.mxu0 %v1818
        %v1953 = vpop.f32.mrf.mxu0
        %v1954 = vadd.f32 0.0, %v1953
        %v1955 = vpop.f32.mrf.mxu0
        %1956 = vmatprep.mubr.f32.mxu0 0.0
        %1957 = vmatmul.mubr.f32.gmra.mxu0 %v1821
        %v1958 = vpop.f32.mrf.mxu0
        %v1959 = vadd.f32 0.0, %v1958
        %v1960 = vpop.f32.mrf.mxu0
        %1961 = vmatprep.mubr.f32.mxu0 0.0
        %1962 = vmatmul.mubr.f32.gmra.mxu0 %v1824
        %v1963 = vpop.f32.mrf.mxu0
        %v1964 = vadd.f32 0.0, %v1963
        %v1965 = vpop.f32.mrf.mxu0
        %1966 = vmatprep.mubr.f32.mxu0 0.0
        %1967 = vmatmul.mubr.f32.gmra.mxu0 %v1827
        %v1968 = vpop.f32.mrf.mxu0
        %v1969 = vadd.f32 0.0, %v1968
        %v1970 = vpop.f32.mrf.mxu0
        %1971 = vmatprep.mubr.f32.mxu0 0.0
        %1972 = vmatmul.mubr.f32.gmra.mxu0 %v1830
        %v1973 = vpop.f32.mrf.mxu0
        %v1974 = vadd.f32 0.0, %v1973
        %v1975 = vpop.f32.mrf.mxu0
        %1976 = vdwg.mxu0
        %v1977 = vadd.f32 %v1767, %v1899
        %v1978 = vadd.f32 %v1768, %v1904
        %v1979 = vadd.f32 %v1769, %v1909
        %v1980 = vadd.f32 %v1770, %v1914
        %v1981 = vadd.f32 %v1771, %v1919
        %v1982 = vadd.f32 %v1772, %v1924
        %v1983 = vadd.f32 %v1773, %v1929
        %v1984 = vadd.f32 %v1774, %v1934
        %v1985 = vadd.f32 %v1775, %v1939
        %v1986 = vadd.f32 %v1776, %v1944
        %v1987 = vadd.f32 %v1777, %v1949
        %v1988 = vadd.f32 %v1778, %v1954
        %v1989 = vadd.f32 %v1779, %v1959
        %v1990 = vadd.f32 %v1780, %v1964
        %v1991 = vadd.f32 %v1781, %v1969
        %v1992 = vadd.f32 %v1782, %v1974
        %v1993 = vld [vmem:[%s13] sm:$0xff]
        %v1995 = vsel %vm1014, %v1252, 0
        %v1998 = vsel %vm1014, %v1253, 0
        %v2001 = vsel %vm1014, %v1254, 0
        %v2004 = vsel %vm1014, %v1255, 0
        %v2007 = vsel %vm1014, %v1256, 0
        %v2010 = vsel %vm1014, %v1257, 0
        %v2013 = vsel %vm1014, %v1258, 0
        %v2016 = vsel %vm1014, %v1259, 0
        %v2019 = vsel %vm1014, %v1260, 0
        %v2022 = vsel %vm1014, %v1261, 0
        %v2025 = vsel %vm1014, %v1262, 0
        %v2028 = vsel %vm1014, %v1263, 0
        %v2031 = vsel %vm1014, %v1264, 0
        %v2034 = vsel %vm1014, %v1265, 0
        %v2037 = vsel %vm1014, %v1266, 0
        %v2040 = vsel %vm1014, %v1267, 0
        %2042 = vmatprep.subr.mxu0 0.0
        %2043 = vmatpush1.msra.mxu0 0.0
        %2044 = vmatprep.subr.mxu0 0.0
        %2045 = vmatpush1.msra.mxu0 0.0
        %2046 = vmatprep.subr.mxu0 0.0
        %2047 = vmatpush1.msra.mxu0 0.0
        %2048 = vmatprep.subr.mxu0 0.0
        %2049 = vmatpush1.msra.mxu0 0.0
        %2050 = vmatprep.subr.mxu0 0.0
        %2051 = vmatpush1.msra.mxu0 0.0
        %2052 = vmatprep.subr.mxu0 0.0
        %2053 = vmatpush1.msra.mxu0 0.0
        %2054 = vmatprep.subr.mxu0 0.0
        %2055 = vmatpush1.msra.mxu0 0.0
        %2056 = vmatprep.subr.mxu0 0.0
        %2057 = vmatpush1.msra.mxu0 0.0
        %2058 = vmatprep.subr.mxu0 0.0
        %2059 = vmatpush1.msra.mxu0 0.0
        %2060 = vmatprep.subr.mxu0 0.0
        %2061 = vmatpush1.msra.mxu0 0.0
        %2062 = vmatprep.subr.mxu0 0.0
        %2063 = vmatpush1.msra.mxu0 0.0
        %2064 = vmatprep.subr.mxu0 0.0
        %2065 = vmatpush1.msra.mxu0 0.0
        %2066 = vmatprep.subr.mxu0 0.0
        %2067 = vmatpush1.msra.mxu0 0.0
        %2068 = vmatprep.subr.mxu0 0.0
        %2069 = vmatpush1.msra.mxu0 0.0
        %2070 = vmatprep.subr.mxu0 0.0
        %2071 = vmatpush1.msra.mxu0 0.0
        %2072 = vmatprep.subr.mxu0 0.0
        %2073 = vmatpush1.msra.mxu0 %v1993
        %2074 = vmatprep.subr.mxu0 0.0
        %2075 = vmatpush2.msra.mxu0 0.0
        %2076 = vmatprep.subr.mxu0 0.0
        %2077 = vmatpush2.msra.mxu0 0.0
        %2078 = vmatprep.subr.mxu0 0.0
        %2079 = vmatpush2.msra.mxu0 0.0
        %2080 = vmatprep.subr.mxu0 0.0
        %2081 = vmatpush2.msra.mxu0 0.0
        %2082 = vmatprep.subr.mxu0 0.0
        %2083 = vmatpush2.msra.mxu0 0.0
        %2084 = vmatprep.subr.mxu0 0.0
        %2085 = vmatpush2.msra.mxu0 0.0
        %2086 = vmatprep.subr.mxu0 0.0
        %2087 = vmatpush2.msra.mxu0 0.0
        %2088 = vmatprep.subr.mxu0 0.0
        %2089 = vmatpush2.msra.mxu0 0.0
        %2090 = vmatprep.subr.mxu0 0.0
        %2091 = vmatpush2.msra.mxu0 0.0
        %2092 = vmatprep.subr.mxu0 0.0
        %2093 = vmatpush2.msra.mxu0 0.0
        %2094 = vmatprep.subr.mxu0 0.0
        %2095 = vmatpush2.msra.mxu0 0.0
        %2096 = vmatprep.subr.mxu0 0.0
        %2097 = vmatpush2.msra.mxu0 0.0
        %2098 = vmatprep.subr.mxu0 0.0
        %2099 = vmatpush2.msra.mxu0 0.0
        %2100 = vmatprep.subr.mxu0 0.0
        %2101 = vmatpush2.msra.mxu0 0.0
        %2102 = vmatprep.subr.mxu0 0.0
        %2103 = vmatpush2.msra.mxu0 0.0
        %2104 = vmatprep.subr.mxu0 0.0
        %2105 = vmatpush2.msra.mxu0 0.0
        %2106 = vmatprep.mubr.f32.mxu0 0.0
        %2107 = vmatmul.mubr.f32.gmra.mxu0 %v1995
        %v2108 = vpop.f32.mrf.mxu0
        %v2109 = vadd.f32 0.0, %v2108
        %v2110 = vpop.f32.mrf.mxu0
        %2111 = vmatprep.mubr.f32.mxu0 0.0
        %2112 = vmatmul.mubr.f32.gmra.mxu0 %v1998
        %v2113 = vpop.f32.mrf.mxu0
        %v2114 = vadd.f32 0.0, %v2113
        %v2115 = vpop.f32.mrf.mxu0
        %2116 = vmatprep.mubr.f32.mxu0 0.0
        %2117 = vmatmul.mubr.f32.gmra.mxu0 %v2001
        %v2118 = vpop.f32.mrf.mxu0
        %v2119 = vadd.f32 0.0, %v2118
        %v2120 = vpop.f32.mrf.mxu0
        %2121 = vmatprep.mubr.f32.mxu0 0.0
        %2122 = vmatmul.mubr.f32.gmra.mxu0 %v2004
        %v2123 = vpop.f32.mrf.mxu0
        %v2124 = vadd.f32 0.0, %v2123
        %v2125 = vpop.f32.mrf.mxu0
        %2126 = vmatprep.mubr.f32.mxu0 0.0
        %2127 = vmatmul.mubr.f32.gmra.mxu0 %v2007
        %v2128 = vpop.f32.mrf.mxu0
        %v2129 = vadd.f32 0.0, %v2128
        %v2130 = vpop.f32.mrf.mxu0
        %2131 = vmatprep.mubr.f32.mxu0 0.0
        %2132 = vmatmul.mubr.f32.gmra.mxu0 %v2010
        %v2133 = vpop.f32.mrf.mxu0
        %v2134 = vadd.f32 0.0, %v2133
        %v2135 = vpop.f32.mrf.mxu0
        %2136 = vmatprep.mubr.f32.mxu0 0.0
        %2137 = vmatmul.mubr.f32.gmra.mxu0 %v2013
        %v2138 = vpop.f32.mrf.mxu0
        %v2139 = vadd.f32 0.0, %v2138
        %v2140 = vpop.f32.mrf.mxu0
        %2141 = vmatprep.mubr.f32.mxu0 0.0
        %2142 = vmatmul.mubr.f32.gmra.mxu0 %v2016
        %v2143 = vpop.f32.mrf.mxu0
        %v2144 = vadd.f32 0.0, %v2143
        %v2145 = vpop.f32.mrf.mxu0
        %2146 = vmatprep.mubr.f32.mxu0 0.0
        %2147 = vmatmul.mubr.f32.gmra.mxu0 %v2019
        %v2148 = vpop.f32.mrf.mxu0
        %v2149 = vadd.f32 0.0, %v2148
        %v2150 = vpop.f32.mrf.mxu0
        %2151 = vmatprep.mubr.f32.mxu0 0.0
        %2152 = vmatmul.mubr.f32.gmra.mxu0 %v2022
        %v2153 = vpop.f32.mrf.mxu0
        %v2154 = vadd.f32 0.0, %v2153
        %v2155 = vpop.f32.mrf.mxu0
        %2156 = vmatprep.mubr.f32.mxu0 0.0
        %2157 = vmatmul.mubr.f32.gmra.mxu0 %v2025
        %v2158 = vpop.f32.mrf.mxu0
        %v2159 = vadd.f32 0.0, %v2158
        %v2160 = vpop.f32.mrf.mxu0
        %2161 = vmatprep.mubr.f32.mxu0 0.0
        %2162 = vmatmul.mubr.f32.gmra.mxu0 %v2028
        %v2163 = vpop.f32.mrf.mxu0
        %v2164 = vadd.f32 0.0, %v2163
        %v2165 = vpop.f32.mrf.mxu0
        %2166 = vmatprep.mubr.f32.mxu0 0.0
        %2167 = vmatmul.mubr.f32.gmra.mxu0 %v2031
        %v2168 = vpop.f32.mrf.mxu0
        %v2169 = vadd.f32 0.0, %v2168
        %v2170 = vpop.f32.mrf.mxu0
        %2171 = vmatprep.mubr.f32.mxu0 0.0
        %2172 = vmatmul.mubr.f32.gmra.mxu0 %v2034
        %v2173 = vpop.f32.mrf.mxu0
        %v2174 = vadd.f32 0.0, %v2173
        %v2175 = vpop.f32.mrf.mxu0
        %2176 = vmatprep.mubr.f32.mxu0 0.0
        %2177 = vmatmul.mubr.f32.gmra.mxu0 %v2037
        %v2178 = vpop.f32.mrf.mxu0
        %v2179 = vadd.f32 0.0, %v2178
        %v2180 = vpop.f32.mrf.mxu0
        %2181 = vmatprep.mubr.f32.mxu0 0.0
        %2182 = vmatmul.mubr.f32.gmra.mxu0 %v2040
        %v2183 = vpop.f32.mrf.mxu0
        %v2184 = vadd.f32 0.0, %v2183
        %v2185 = vpop.f32.mrf.mxu0
        %2186 = vdwg.mxu0
        %v2187 = vadd.f32 %v1977, %v2109
        %v2188 = vadd.f32 %v1978, %v2114
        %v2189 = vadd.f32 %v1979, %v2119
        %v2190 = vadd.f32 %v1980, %v2124
        %v2191 = vadd.f32 %v1981, %v2129
        %v2192 = vadd.f32 %v1982, %v2134
        %v2193 = vadd.f32 %v1983, %v2139
        %v2194 = vadd.f32 %v1984, %v2144
        %v2195 = vadd.f32 %v1985, %v2149
        %v2196 = vadd.f32 %v1986, %v2154
        %v2197 = vadd.f32 %v1987, %v2159
        %v2198 = vadd.f32 %v1988, %v2164
        %v2199 = vadd.f32 %v1989, %v2169
        %v2200 = vadd.f32 %v1990, %v2174
        %v2201 = vadd.f32 %v1991, %v2179
        %v2202 = vadd.f32 %v1992, %v2184
        %vm2203 = vcmask 130048
        %v2204 = vsel %vm2203, %v2187, -inf
        %v2205 = vrot.slane %v2204, 4
        %v2206 = vmax.f32 %v2204, %v2205
        %v2207 = vrot.slane %v2206, 2
        %v2208 = vmax.f32 %v2206, %v2207
        %v2209 = vrot.slane %v2208, 1
        %v2210 = vmax.f32 %v2208, %v2209
        %v2211 = vsel %vm2203, %v2188, -inf
        %v2212 = vrot.slane %v2211, 4
        %v2213 = vmax.f32 %v2211, %v2212
        %v2214 = vrot.slane %v2213, 2
        %v2215 = vmax.f32 %v2213, %v2214
        %v2216 = vrot.slane %v2215, 1
        %v2217 = vmax.f32 %v2215, %v2216
        %v2218 = vsel %vm2203, %v2189, -inf
        %v2219 = vrot.slane %v2218, 4
        %v2220 = vmax.f32 %v2218, %v2219
        %v2221 = vrot.slane %v2220, 2
        %v2222 = vmax.f32 %v2220, %v2221
        %v2223 = vrot.slane %v2222, 1
        %v2224 = vmax.f32 %v2222, %v2223
        %v2225 = vsel %vm2203, %v2190, -inf
        %v2226 = vrot.slane %v2225, 4
        %v2227 = vmax.f32 %v2225, %v2226
        %v2228 = vrot.slane %v2227, 2
        %v2229 = vmax.f32 %v2227, %v2228
        %v2230 = vrot.slane %v2229, 1
        %v2231 = vmax.f32 %v2229, %v2230
        %v2232 = vsel %vm2203, %v2191, -inf
        %v2233 = vrot.slane %v2232, 4
        %v2234 = vmax.f32 %v2232, %v2233
        %v2235 = vrot.slane %v2234, 2
        %v2236 = vmax.f32 %v2234, %v2235
        %v2237 = vrot.slane %v2236, 1
        %v2238 = vmax.f32 %v2236, %v2237
        %v2239 = vsel %vm2203, %v2192, -inf
        %v2240 = vrot.slane %v2239, 4
        %v2241 = vmax.f32 %v2239, %v2240
        %v2242 = vrot.slane %v2241, 2
        %v2243 = vmax.f32 %v2241, %v2242
        %v2244 = vrot.slane %v2243, 1
        %v2245 = vmax.f32 %v2243, %v2244
        %v2246 = vsel %vm2203, %v2193, -inf
        %v2247 = vrot.slane %v2246, 4
        %v2248 = vmax.f32 %v2246, %v2247
        %v2249 = vrot.slane %v2248, 2
        %v2250 = vmax.f32 %v2248, %v2249
        %v2251 = vrot.slane %v2250, 1
        %v2252 = vmax.f32 %v2250, %v2251
        %v2253 = vsel %vm2203, %v2194, -inf
        %v2254 = vrot.slane %v2253, 4
        %v2255 = vmax.f32 %v2253, %v2254
        %v2256 = vrot.slane %v2255, 2
        %v2257 = vmax.f32 %v2255, %v2256
        %v2258 = vrot.slane %v2257, 1
        %v2259 = vmax.f32 %v2257, %v2258
        %v2260 = vsel %vm2203, %v2195, -inf
        %v2261 = vrot.slane %v2260, 4
        %v2262 = vmax.f32 %v2260, %v2261
        %v2263 = vrot.slane %v2262, 2
        %v2264 = vmax.f32 %v2262, %v2263
        %v2265 = vrot.slane %v2264, 1
        %v2266 = vmax.f32 %v2264, %v2265
        %v2267 = vsel %vm2203, %v2196, -inf
        %v2268 = vrot.slane %v2267, 4
        %v2269 = vmax.f32 %v2267, %v2268
        %v2270 = vrot.slane %v2269, 2
        %v2271 = vmax.f32 %v2269, %v2270
        %v2272 = vrot.slane %v2271, 1
        %v2273 = vmax.f32 %v2271, %v2272
        %v2274 = vsel %vm2203, %v2197, -inf
        %v2275 = vrot.slane %v2274, 4
        %v2276 = vmax.f32 %v2274, %v2275
        %v2277 = vrot.slane %v2276, 2
        %v2278 = vmax.f32 %v2276, %v2277
        %v2279 = vrot.slane %v2278, 1
        %v2280 = vmax.f32 %v2278, %v2279
        %v2281 = vsel %vm2203, %v2198, -inf
        %v2282 = vrot.slane %v2281, 4
        %v2283 = vmax.f32 %v2281, %v2282
        %v2284 = vrot.slane %v2283, 2
        %v2285 = vmax.f32 %v2283, %v2284
        %v2286 = vrot.slane %v2285, 1
        %v2287 = vmax.f32 %v2285, %v2286
        %v2288 = vsel %vm2203, %v2199, -inf
        %v2289 = vrot.slane %v2288, 4
        %v2290 = vmax.f32 %v2288, %v2289
        %v2291 = vrot.slane %v2290, 2
        %v2292 = vmax.f32 %v2290, %v2291
        %v2293 = vrot.slane %v2292, 1
        %v2294 = vmax.f32 %v2292, %v2293
        %v2295 = vsel %vm2203, %v2200, -inf
        %v2296 = vrot.slane %v2295, 4
        %v2297 = vmax.f32 %v2295, %v2296
        %v2298 = vrot.slane %v2297, 2
        %v2299 = vmax.f32 %v2297, %v2298
        %v2300 = vrot.slane %v2299, 1
        %v2301 = vmax.f32 %v2299, %v2300
        %v2302 = vsel %vm2203, %v2201, -inf
        %v2303 = vrot.slane %v2302, 4
        %v2304 = vmax.f32 %v2302, %v2303
        %v2305 = vrot.slane %v2304, 2
        %v2306 = vmax.f32 %v2304, %v2305
        %v2307 = vrot.slane %v2306, 1
        %v2308 = vmax.f32 %v2306, %v2307
        %v2309 = vsel %vm2203, %v2202, -inf
        %v2310 = vrot.slane %v2309, 4
        %v2311 = vmax.f32 %v2309, %v2310
        %v2312 = vrot.slane %v2311, 2
        %v2313 = vmax.f32 %v2311, %v2312
        %v2314 = vrot.slane %v2313, 1
        %v2315 = vmax.f32 %v2313, %v2314
        %v2316 = vsub.f32 %v2187, %v2210
        %v2317 = vsub.f32 %v2188, %v2217
        %v2318 = vsub.f32 %v2189, %v2224
        %v2319 = vsub.f32 %v2190, %v2231
        %v2320 = vsub.f32 %v2191, %v2238
        %v2321 = vsub.f32 %v2192, %v2245
        %v2322 = vsub.f32 %v2193, %v2252
        %v2323 = vsub.f32 %v2194, %v2259
        %v2324 = vsub.f32 %v2195, %v2266
        %v2325 = vsub.f32 %v2196, %v2273
        %v2326 = vsub.f32 %v2197, %v2280
        %v2327 = vsub.f32 %v2198, %v2287
        %v2328 = vsub.f32 %v2199, %v2294
        %v2329 = vsub.f32 %v2200, %v2301
        %v2330 = vsub.f32 %v2201, %v2308
        %v2331 = vsub.f32 %v2202, %v2315
        %v2332 = vmul.f32 %v2316, 1.442695
        %v2333 = vpow.pop %v2332
        %v2334 = vmul.f32 %v2317, 1.442695
        %v2335 = vpow.pop %v2334
        %v2336 = vmul.f32 %v2318, 1.442695
        %v2337 = vpow.pop %v2336
        %v2338 = vmul.f32 %v2319, 1.442695
        %v2339 = vpow.pop %v2338
        %v2340 = vmul.f32 %v2320, 1.442695
        %v2341 = vpow.pop %v2340
        %v2342 = vmul.f32 %v2321, 1.442695
        %v2343 = vpow.pop %v2342
        %v2344 = vmul.f32 %v2322, 1.442695
        %v2345 = vpow.pop %v2344
        %v2346 = vmul.f32 %v2323, 1.442695
        %v2347 = vpow.pop %v2346
        %v2348 = vmul.f32 %v2324, 1.442695
        %v2349 = vpow.pop %v2348
        %v2350 = vmul.f32 %v2325, 1.442695
        %v2351 = vpow.pop %v2350
        %v2352 = vmul.f32 %v2326, 1.442695
        %v2353 = vpow.pop %v2352
        %v2354 = vmul.f32 %v2327, 1.442695
        %v2355 = vpow.pop %v2354
        %v2356 = vmul.f32 %v2328, 1.442695
        %v2357 = vpow.pop %v2356
        %v2358 = vmul.f32 %v2329, 1.442695
        %v2359 = vpow.pop %v2358
        %v2360 = vmul.f32 %v2330, 1.442695
        %v2361 = vpow.pop %v2360
        %v2362 = vmul.f32 %v2331, 1.442695
        %v2363 = vpow.pop %v2362
        %v2364 = vsel %vm2203, %v2333, 0.0
        %v2365 = vrot.slane %v2364, 4
        %v2366 = vadd.f32 %v2364, %v2365
        %v2367 = vrot.slane %v2366, 2
        %v2368 = vadd.f32 %v2366, %v2367
        %v2369 = vrot.slane %v2368, 1
        %v2370 = vadd.f32 %v2368, %v2369
        %v2371 = vsel %vm2203, %v2335, 0.0
        %v2372 = vrot.slane %v2371, 4
        %v2373 = vadd.f32 %v2371, %v2372
        %v2374 = vrot.slane %v2373, 2
        %v2375 = vadd.f32 %v2373, %v2374
        %v2376 = vrot.slane %v2375, 1
        %v2377 = vadd.f32 %v2375, %v2376
        %v2378 = vsel %vm2203, %v2337, 0.0
        %v2379 = vrot.slane %v2378, 4
        %v2380 = vadd.f32 %v2378, %v2379
        %v2381 = vrot.slane %v2380, 2
        %v2382 = vadd.f32 %v2380, %v2381
        %v2383 = vrot.slane %v2382, 1
        %v2384 = vadd.f32 %v2382, %v2383
        %v2385 = vsel %vm2203, %v2339, 0.0
        %v2386 = vrot.slane %v2385, 4
        %v2387 = vadd.f32 %v2385, %v2386
        %v2388 = vrot.slane %v2387, 2
        %v2389 = vadd.f32 %v2387, %v2388
        %v2390 = vrot.slane %v2389, 1
        %v2391 = vadd.f32 %v2389, %v2390
        %v2392 = vsel %vm2203, %v2341, 0.0
        %v2393 = vrot.slane %v2392, 4
        %v2394 = vadd.f32 %v2392, %v2393
        %v2395 = vrot.slane %v2394, 2
        %v2396 = vadd.f32 %v2394, %v2395
        %v2397 = vrot.slane %v2396, 1
        %v2398 = vadd.f32 %v2396, %v2397
        %v2399 = vsel %vm2203, %v2343, 0.0
        %v2400 = vrot.slane %v2399, 4
        %v2401 = vadd.f32 %v2399, %v2400
        %v2402 = vrot.slane %v2401, 2
        %v2403 = vadd.f32 %v2401, %v2402
        %v2404 = vrot.slane %v2403, 1
        %v2405 = vadd.f32 %v2403, %v2404
        %v2406 = vsel %vm2203, %v2345, 0.0
        %v2407 = vrot.slane %v2406, 4
        %v2408 = vadd.f32 %v2406, %v2407
        %v2409 = vrot.slane %v2408, 2
        %v2410 = vadd.f32 %v2408, %v2409
        %v2411 = vrot.slane %v2410, 1
        %v2412 = vadd.f32 %v2410, %v2411
        %v2413 = vsel %vm2203, %v2347, 0.0
        %v2414 = vrot.slane %v2413, 4
        %v2415 = vadd.f32 %v2413, %v2414
        %v2416 = vrot.slane %v2415, 2
        %v2417 = vadd.f32 %v2415, %v2416
        %v2418 = vrot.slane %v2417, 1
        %v2419 = vadd.f32 %v2417, %v2418
        %v2420 = vsel %vm2203, %v2349, 0.0
        %v2421 = vrot.slane %v2420, 4
        %v2422 = vadd.f32 %v2420, %v2421
        %v2423 = vrot.slane %v2422, 2
        %v2424 = vadd.f32 %v2422, %v2423
        %v2425 = vrot.slane %v2424, 1
        %v2426 = vadd.f32 %v2424, %v2425
        %v2427 = vsel %vm2203, %v2351, 0.0
        %v2428 = vrot.slane %v2427, 4
        %v2429 = vadd.f32 %v2427, %v2428
        %v2430 = vrot.slane %v2429, 2
        %v2431 = vadd.f32 %v2429, %v2430
        %v2432 = vrot.slane %v2431, 1
        %v2433 = vadd.f32 %v2431, %v2432
        %v2434 = vsel %vm2203, %v2353, 0.0
        %v2435 = vrot.slane %v2434, 4
        %v2436 = vadd.f32 %v2434, %v2435
        %v2437 = vrot.slane %v2436, 2
        %v2438 = vadd.f32 %v2436, %v2437
        %v2439 = vrot.slane %v2438, 1
        %v2440 = vadd.f32 %v2438, %v2439
        %v2441 = vsel %vm2203, %v2355, 0.0
        %v2442 = vrot.slane %v2441, 4
        %v2443 = vadd.f32 %v2441, %v2442
        %v2444 = vrot.slane %v2443, 2
        %v2445 = vadd.f32 %v2443, %v2444
        %v2446 = vrot.slane %v2445, 1
        %v2447 = vadd.f32 %v2445, %v2446
        %v2448 = vsel %vm2203, %v2357, 0.0
        %v2449 = vrot.slane %v2448, 4
        %v2450 = vadd.f32 %v2448, %v2449
        %v2451 = vrot.slane %v2450, 2
        %v2452 = vadd.f32 %v2450, %v2451
        %v2453 = vrot.slane %v2452, 1
        %v2454 = vadd.f32 %v2452, %v2453
        %v2455 = vsel %vm2203, %v2359, 0.0
        %v2456 = vrot.slane %v2455, 4
        %v2457 = vadd.f32 %v2455, %v2456
        %v2458 = vrot.slane %v2457, 2
        %v2459 = vadd.f32 %v2457, %v2458
        %v2460 = vrot.slane %v2459, 1
        %v2461 = vadd.f32 %v2459, %v2460
        %v2462 = vsel %vm2203, %v2361, 0.0
        %v2463 = vrot.slane %v2462, 4
        %v2464 = vadd.f32 %v2462, %v2463
        %v2465 = vrot.slane %v2464, 2
        %v2466 = vadd.f32 %v2464, %v2465
        %v2467 = vrot.slane %v2466, 1
        %v2468 = vadd.f32 %v2466, %v2467
        %v2469 = vsel %vm2203, %v2363, 0.0
        %v2470 = vrot.slane %v2469, 4
        %v2471 = vadd.f32 %v2469, %v2470
        %v2472 = vrot.slane %v2471, 2
        %v2473 = vadd.f32 %v2471, %v2472
        %v2474 = vrot.slane %v2473, 1
        %v2475 = vadd.f32 %v2473, %v2474
        %v2476 = vrcp.pop %v2370
        %v2477 = vmul.f32 %v2333, %v2476
        %v2478 = vrcp.pop %v2377
        %v2479 = vmul.f32 %v2335, %v2478
        %v2480 = vrcp.pop %v2384
        %v2481 = vmul.f32 %v2337, %v2480
        %v2482 = vrcp.pop %v2391
        %v2483 = vmul.f32 %v2339, %v2482
        %v2484 = vrcp.pop %v2398
        %v2485 = vmul.f32 %v2341, %v2484
        %v2486 = vrcp.pop %v2405
        %v2487 = vmul.f32 %v2343, %v2486
        %v2488 = vrcp.pop %v2412
        %v2489 = vmul.f32 %v2345, %v2488
        %v2490 = vrcp.pop %v2419
        %v2491 = vmul.f32 %v2347, %v2490
        %v2492 = vrcp.pop %v2426
        %v2493 = vmul.f32 %v2349, %v2492
        %v2494 = vrcp.pop %v2433
        %v2495 = vmul.f32 %v2351, %v2494
        %v2496 = vrcp.pop %v2440
        %v2497 = vmul.f32 %v2353, %v2496
        %v2498 = vrcp.pop %v2447
        %v2499 = vmul.f32 %v2355, %v2498
        %v2500 = vrcp.pop %v2454
        %v2501 = vmul.f32 %v2357, %v2500
        %v2502 = vrcp.pop %v2461
        %v2503 = vmul.f32 %v2359, %v2502
        %v2504 = vrcp.pop %v2468
        %v2505 = vmul.f32 %v2361, %v2504
        %v2506 = vrcp.pop %v2475
        %v2507 = vmul.f32 %v2363, %v2506
        %v2508 = vmul.f32 %v713, %v2477
        %v2509 = vmul.f32 %v714, %v2479
        %v2510 = vmul.f32 %v715, %v2481
        %v2511 = vmul.f32 %v716, %v2483
        %v2512 = vmul.f32 %v717, %v2485
        %v2513 = vmul.f32 %v718, %v2487
        %v2514 = vmul.f32 %v719, %v2489
        %v2515 = vmul.f32 %v720, %v2491
        %v2516 = vmul.f32 %v721, %v2493
        %v2517 = vmul.f32 %v722, %v2495
        %v2518 = vmul.f32 %v723, %v2497
        %v2519 = vmul.f32 %v724, %v2499
        %v2520 = vmul.f32 %v725, %v2501
        %v2521 = vmul.f32 %v726, %v2503
        %v2522 = vmul.f32 %v727, %v2505
        %v2523 = vmul.f32 %v728, %v2507
        %v2524 = vsel %vm1014, %v2508, 0.0
        %v2525 = vrot.slane %v2524, 4
        %v2526 = vadd.f32 %v2524, %v2525
        %v2527 = vrot.slane %v2526, 2
        %v2528 = vadd.f32 %v2526, %v2527
        %v2529 = vrot.slane %v2528, 1
        %v2530 = vadd.f32 %v2528, %v2529
        %v2531 = vsel %vm1014, %v2509, 0.0
        %v2532 = vrot.slane %v2531, 4
        %v2533 = vadd.f32 %v2531, %v2532
        %v2534 = vrot.slane %v2533, 2
        %v2535 = vadd.f32 %v2533, %v2534
        %v2536 = vrot.slane %v2535, 1
        %v2537 = vadd.f32 %v2535, %v2536
        %v2538 = vsel %vm1014, %v2510, 0.0
        %v2539 = vrot.slane %v2538, 4
        %v2540 = vadd.f32 %v2538, %v2539
        %v2541 = vrot.slane %v2540, 2
        %v2542 = vadd.f32 %v2540, %v2541
        %v2543 = vrot.slane %v2542, 1
        %v2544 = vadd.f32 %v2542, %v2543
        %v2545 = vsel %vm1014, %v2511, 0.0
        %v2546 = vrot.slane %v2545, 4
        %v2547 = vadd.f32 %v2545, %v2546
        %v2548 = vrot.slane %v2547, 2
        %v2549 = vadd.f32 %v2547, %v2548
        %v2550 = vrot.slane %v2549, 1
        %v2551 = vadd.f32 %v2549, %v2550
        %v2552 = vsel %vm1014, %v2512, 0.0
        %v2553 = vrot.slane %v2552, 4
        %v2554 = vadd.f32 %v2552, %v2553
        %v2555 = vrot.slane %v2554, 2
        %v2556 = vadd.f32 %v2554, %v2555
        %v2557 = vrot.slane %v2556, 1
        %v2558 = vadd.f32 %v2556, %v2557
        %v2559 = vsel %vm1014, %v2513, 0.0
        %v2560 = vrot.slane %v2559, 4
        %v2561 = vadd.f32 %v2559, %v2560
        %v2562 = vrot.slane %v2561, 2
        %v2563 = vadd.f32 %v2561, %v2562
        %v2564 = vrot.slane %v2563, 1
        %v2565 = vadd.f32 %v2563, %v2564
        %v2566 = vsel %vm1014, %v2514, 0.0
        %v2567 = vrot.slane %v2566, 4
        %v2568 = vadd.f32 %v2566, %v2567
        %v2569 = vrot.slane %v2568, 2
        %v2570 = vadd.f32 %v2568, %v2569
        %v2571 = vrot.slane %v2570, 1
        %v2572 = vadd.f32 %v2570, %v2571
        %v2573 = vsel %vm1014, %v2515, 0.0
        %v2574 = vrot.slane %v2573, 4
        %v2575 = vadd.f32 %v2573, %v2574
        %v2576 = vrot.slane %v2575, 2
        %v2577 = vadd.f32 %v2575, %v2576
        %v2578 = vrot.slane %v2577, 1
        %v2579 = vadd.f32 %v2577, %v2578
        %v2580 = vsel %vm1014, %v2516, 0.0
        %v2581 = vrot.slane %v2580, 4
        %v2582 = vadd.f32 %v2580, %v2581
        %v2583 = vrot.slane %v2582, 2
        %v2584 = vadd.f32 %v2582, %v2583
        %v2585 = vrot.slane %v2584, 1
        %v2586 = vadd.f32 %v2584, %v2585
        %v2587 = vsel %vm1014, %v2517, 0.0
        %v2588 = vrot.slane %v2587, 4
        %v2589 = vadd.f32 %v2587, %v2588
        %v2590 = vrot.slane %v2589, 2
        %v2591 = vadd.f32 %v2589, %v2590
        %v2592 = vrot.slane %v2591, 1
        %v2593 = vadd.f32 %v2591, %v2592
        %v2594 = vsel %vm1014, %v2518, 0.0
        %v2595 = vrot.slane %v2594, 4
        %v2596 = vadd.f32 %v2594, %v2595
        %v2597 = vrot.slane %v2596, 2
        %v2598 = vadd.f32 %v2596, %v2597
        %v2599 = vrot.slane %v2598, 1
        %v2600 = vadd.f32 %v2598, %v2599
        %v2601 = vsel %vm1014, %v2519, 0.0
        %v2602 = vrot.slane %v2601, 4
        %v2603 = vadd.f32 %v2601, %v2602
        %v2604 = vrot.slane %v2603, 2
        %v2605 = vadd.f32 %v2603, %v2604
        %v2606 = vrot.slane %v2605, 1
        %v2607 = vadd.f32 %v2605, %v2606
        %v2608 = vsel %vm1014, %v2520, 0.0
        %v2609 = vrot.slane %v2608, 4
        %v2610 = vadd.f32 %v2608, %v2609
        %v2611 = vrot.slane %v2610, 2
        %v2612 = vadd.f32 %v2610, %v2611
        %v2613 = vrot.slane %v2612, 1
        %v2614 = vadd.f32 %v2612, %v2613
        %v2615 = vsel %vm1014, %v2521, 0.0
        %v2616 = vrot.slane %v2615, 4
        %v2617 = vadd.f32 %v2615, %v2616
        %v2618 = vrot.slane %v2617, 2
        %v2619 = vadd.f32 %v2617, %v2618
        %v2620 = vrot.slane %v2619, 1
        %v2621 = vadd.f32 %v2619, %v2620
        %v2622 = vsel %vm1014, %v2522, 0.0
        %v2623 = vrot.slane %v2622, 4
        %v2624 = vadd.f32 %v2622, %v2623
        %v2625 = vrot.slane %v2624, 2
        %v2626 = vadd.f32 %v2624, %v2625
        %v2627 = vrot.slane %v2626, 1
        %v2628 = vadd.f32 %v2626, %v2627
        %v2629 = vsel %vm1014, %v2523, 0.0
        %v2630 = vrot.slane %v2629, 4
        %v2631 = vadd.f32 %v2629, %v2630
        %v2632 = vrot.slane %v2631, 2
        %v2633 = vadd.f32 %v2631, %v2632
        %v2634 = vrot.slane %v2633, 1
        %v2635 = vadd.f32 %v2633, %v2634
        %2652 = vrot.lane.b32.xlu0 %v2477, 120
        %v2653 = vpop.permute.xlu0 %2652
        %2654 = vrot.lane.b32.xlu0 %v2479, 120
        %v2655 = vpop.permute.xlu0 %2654
        %2656 = vrot.lane.b32.xlu0 %v2481, 120
        %v2657 = vpop.permute.xlu0 %2656
        %2658 = vrot.lane.b32.xlu0 %v2483, 120
        %v2659 = vpop.permute.xlu0 %2658
        %2660 = vrot.lane.b32.xlu0 %v2485, 120
        %v2661 = vpop.permute.xlu0 %2660
        %2662 = vrot.lane.b32.xlu0 %v2487, 120
        %v2663 = vpop.permute.xlu0 %2662
        %2664 = vrot.lane.b32.xlu0 %v2489, 120
        %v2665 = vpop.permute.xlu0 %2664
        %2666 = vrot.lane.b32.xlu0 %v2491, 120
        %v2667 = vpop.permute.xlu0 %2666
        %2668 = vrot.lane.b32.xlu0 %v2493, 120
        %v2669 = vpop.permute.xlu0 %2668
        %2670 = vrot.lane.b32.xlu0 %v2495, 120
        %v2671 = vpop.permute.xlu0 %2670
        %2672 = vrot.lane.b32.xlu0 %v2497, 120
        %v2673 = vpop.permute.xlu0 %2672
        %2674 = vrot.lane.b32.xlu0 %v2499, 120
        %v2675 = vpop.permute.xlu0 %2674
        %2676 = vrot.lane.b32.xlu0 %v2501, 120
        %v2677 = vpop.permute.xlu0 %2676
        %2678 = vrot.lane.b32.xlu0 %v2503, 120
        %v2679 = vpop.permute.xlu0 %2678
        %2680 = vrot.lane.b32.xlu0 %v2505, 120
        %v2681 = vpop.permute.xlu0 %2680
        %2682 = vrot.lane.b32.xlu0 %v2507, 120
        %v2683 = vpop.permute.xlu0 %2682
        %v2700 = vmul.f32 %v1252, %v2653
        %v2701 = vmul.f32 %v1253, %v2655
        %v2702 = vmul.f32 %v1254, %v2657
        %v2703 = vmul.f32 %v1255, %v2659
        %v2704 = vmul.f32 %v1256, %v2661
        %v2705 = vmul.f32 %v1257, %v2663
        %v2706 = vmul.f32 %v1258, %v2665
        %v2707 = vmul.f32 %v1259, %v2667
        %v2708 = vmul.f32 %v1260, %v2669
        %v2709 = vmul.f32 %v1261, %v2671
        %v2710 = vmul.f32 %v1262, %v2673
        %v2711 = vmul.f32 %v1263, %v2675
        %v2712 = vmul.f32 %v1264, %v2677
        %v2713 = vmul.f32 %v1265, %v2679
        %v2714 = vmul.f32 %v1266, %v2681
        %v2715 = vmul.f32 %v1267, %v2683
        %v2716 = vsel %vm1014, %v2700, 0.0
        %v2717 = vrot.slane %v2716, 4
        %v2718 = vadd.f32 %v2716, %v2717
        %v2719 = vrot.slane %v2718, 2
        %v2720 = vadd.f32 %v2718, %v2719
        %v2721 = vrot.slane %v2720, 1
        %v2722 = vadd.f32 %v2720, %v2721
        %v2723 = vsel %vm1014, %v2701, 0.0
        %v2724 = vrot.slane %v2723, 4
        %v2725 = vadd.f32 %v2723, %v2724
        %v2726 = vrot.slane %v2725, 2
        %v2727 = vadd.f32 %v2725, %v2726
        %v2728 = vrot.slane %v2727, 1
        %v2729 = vadd.f32 %v2727, %v2728
        %v2730 = vsel %vm1014, %v2702, 0.0
        %v2731 = vrot.slane %v2730, 4
        %v2732 = vadd.f32 %v2730, %v2731
        %v2733 = vrot.slane %v2732, 2
        %v2734 = vadd.f32 %v2732, %v2733
        %v2735 = vrot.slane %v2734, 1
        %v2736 = vadd.f32 %v2734, %v2735
        %v2737 = vsel %vm1014, %v2703, 0.0
        %v2738 = vrot.slane %v2737, 4
        %v2739 = vadd.f32 %v2737, %v2738
        %v2740 = vrot.slane %v2739, 2
        %v2741 = vadd.f32 %v2739, %v2740
        %v2742 = vrot.slane %v2741, 1
        %v2743 = vadd.f32 %v2741, %v2742
        %v2744 = vsel %vm1014, %v2704, 0.0
        %v2745 = vrot.slane %v2744, 4
        %v2746 = vadd.f32 %v2744, %v2745
        %v2747 = vrot.slane %v2746, 2
        %v2748 = vadd.f32 %v2746, %v2747
        %v2749 = vrot.slane %v2748, 1
        %v2750 = vadd.f32 %v2748, %v2749
        %v2751 = vsel %vm1014, %v2705, 0.0
        %v2752 = vrot.slane %v2751, 4
        %v2753 = vadd.f32 %v2751, %v2752
        %v2754 = vrot.slane %v2753, 2
        %v2755 = vadd.f32 %v2753, %v2754
        %v2756 = vrot.slane %v2755, 1
        %v2757 = vadd.f32 %v2755, %v2756
        %v2758 = vsel %vm1014, %v2706, 0.0
        %v2759 = vrot.slane %v2758, 4
        %v2760 = vadd.f32 %v2758, %v2759
        %v2761 = vrot.slane %v2760, 2
        %v2762 = vadd.f32 %v2760, %v2761
        %v2763 = vrot.slane %v2762, 1
        %v2764 = vadd.f32 %v2762, %v2763
        %v2765 = vsel %vm1014, %v2707, 0.0
        %v2766 = vrot.slane %v2765, 4
        %v2767 = vadd.f32 %v2765, %v2766
        %v2768 = vrot.slane %v2767, 2
        %v2769 = vadd.f32 %v2767, %v2768
        %v2770 = vrot.slane %v2769, 1
        %v2771 = vadd.f32 %v2769, %v2770
        %v2772 = vsel %vm1014, %v2708, 0.0
        %v2773 = vrot.slane %v2772, 4
        %v2774 = vadd.f32 %v2772, %v2773
        %v2775 = vrot.slane %v2774, 2
        %v2776 = vadd.f32 %v2774, %v2775
        %v2777 = vrot.slane %v2776, 1
        %v2778 = vadd.f32 %v2776, %v2777
        %v2779 = vsel %vm1014, %v2709, 0.0
        %v2780 = vrot.slane %v2779, 4
        %v2781 = vadd.f32 %v2779, %v2780
        %v2782 = vrot.slane %v2781, 2
        %v2783 = vadd.f32 %v2781, %v2782
        %v2784 = vrot.slane %v2783, 1
        %v2785 = vadd.f32 %v2783, %v2784
        %v2786 = vsel %vm1014, %v2710, 0.0
        %v2787 = vrot.slane %v2786, 4
        %v2788 = vadd.f32 %v2786, %v2787
        %v2789 = vrot.slane %v2788, 2
        %v2790 = vadd.f32 %v2788, %v2789
        %v2791 = vrot.slane %v2790, 1
        %v2792 = vadd.f32 %v2790, %v2791
        %v2793 = vsel %vm1014, %v2711, 0.0
        %v2794 = vrot.slane %v2793, 4
        %v2795 = vadd.f32 %v2793, %v2794
        %v2796 = vrot.slane %v2795, 2
        %v2797 = vadd.f32 %v2795, %v2796
        %v2798 = vrot.slane %v2797, 1
        %v2799 = vadd.f32 %v2797, %v2798
        %v2800 = vsel %vm1014, %v2712, 0.0
        %v2801 = vrot.slane %v2800, 4
        %v2802 = vadd.f32 %v2800, %v2801
        %v2803 = vrot.slane %v2802, 2
        %v2804 = vadd.f32 %v2802, %v2803
        %v2805 = vrot.slane %v2804, 1
        %v2806 = vadd.f32 %v2804, %v2805
        %v2807 = vsel %vm1014, %v2713, 0.0
        %v2808 = vrot.slane %v2807, 4
        %v2809 = vadd.f32 %v2807, %v2808
        %v2810 = vrot.slane %v2809, 2
        %v2811 = vadd.f32 %v2809, %v2810
        %v2812 = vrot.slane %v2811, 1
        %v2813 = vadd.f32 %v2811, %v2812
        %v2814 = vsel %vm1014, %v2714, 0.0
        %v2815 = vrot.slane %v2814, 4
        %v2816 = vadd.f32 %v2814, %v2815
        %v2817 = vrot.slane %v2816, 2
        %v2818 = vadd.f32 %v2816, %v2817
        %v2819 = vrot.slane %v2818, 1
        %v2820 = vadd.f32 %v2818, %v2819
        %v2821 = vsel %vm1014, %v2715, 0.0
        %v2822 = vrot.slane %v2821, 4
        %v2823 = vadd.f32 %v2821, %v2822
        %v2824 = vrot.slane %v2823, 2
        %v2825 = vadd.f32 %v2823, %v2824
        %v2826 = vrot.slane %v2825, 1
        %v2827 = vadd.f32 %v2825, %v2826
        %v2828 = vld [vmem:[%s14] sm:$0xff]
        %v2829 = vld [vmem:[%s15] sm:$0xff]
        %vm2846 = vcmask 1041409
        %v2847 = vsel %vm2846, %v2729, %v2722
        %vm2848 = vcmask 1042434
        %v2849 = vsel %vm2848, %v2736, %v2847
        %vm2850 = vcmask 1043459
        %v2851 = vsel %vm2850, %v2743, %v2849
        %vm2852 = vcmask 1044484
        %v2853 = vsel %vm2852, %v2750, %v2851
        %vm2854 = vcmask 1045509
        %v2855 = vsel %vm2854, %v2757, %v2853
        %vm2856 = vcmask 1046534
        %v2857 = vsel %vm2856, %v2764, %v2855
        %vm2858 = vcmask 1047559
        %v2859 = vsel %vm2858, %v2771, %v2857
        %v2860 = vsel %vm2846, %v2785, %v2778
        %v2861 = vsel %vm2848, %v2792, %v2860
        %v2862 = vsel %vm2850, %v2799, %v2861
        %v2863 = vsel %vm2852, %v2806, %v2862
        %v2864 = vsel %vm2854, %v2813, %v2863
        %v2865 = vsel %vm2856, %v2820, %v2864
        %v2866 = vsel %vm2858, %v2827, %v2865
        %v2867 = vsel %vm1014, %v2859, 0
        %v2869 = vsel %vm1014, %v2866, 0
        %2871 = vmatprep.subr.mxu0 0.0
        %2872 = vmatpush1.msra.mxu0 0.0
        %2873 = vmatprep.subr.mxu0 0.0
        %2874 = vmatpush1.msra.mxu0 0.0
        %2875 = vmatprep.subr.mxu0 0.0
        %2876 = vmatpush1.msra.mxu0 0.0
        %2877 = vmatprep.subr.mxu0 0.0
        %2878 = vmatpush1.msra.mxu0 0.0
        %2879 = vmatprep.subr.mxu0 0.0
        %2880 = vmatpush1.msra.mxu0 0.0
        %2881 = vmatprep.subr.mxu0 0.0
        %2882 = vmatpush1.msra.mxu0 0.0
        %2883 = vmatprep.subr.mxu0 0.0
        %2884 = vmatpush1.msra.mxu0 0.0
        %2885 = vmatprep.subr.mxu0 0.0
        %2886 = vmatpush1.msra.mxu0 0.0
        %2887 = vmatprep.subr.mxu0 0.0
        %2888 = vmatpush1.msra.mxu0 0.0
        %2889 = vmatprep.subr.mxu0 0.0
        %2890 = vmatpush1.msra.mxu0 0.0
        %2891 = vmatprep.subr.mxu0 0.0
        %2892 = vmatpush1.msra.mxu0 0.0
        %2893 = vmatprep.subr.mxu0 0.0
        %2894 = vmatpush1.msra.mxu0 0.0
        %2895 = vmatprep.subr.mxu0 0.0
        %2896 = vmatpush1.msra.mxu0 0.0
        %2897 = vmatprep.subr.mxu0 0.0
        %2898 = vmatpush1.msra.mxu0 0.0
        %2899 = vmatprep.subr.mxu0 0.0
        %2900 = vmatpush1.msra.mxu0 0.0
        %2901 = vmatprep.subr.mxu0 0.0
        %2902 = vmatpush1.msra.mxu0 %v2829
        %2903 = vmatprep.subr.mxu0 0.0
        %2904 = vmatpush2.msra.mxu0 0.0
        %2905 = vmatprep.subr.mxu0 0.0
        %2906 = vmatpush2.msra.mxu0 0.0
        %2907 = vmatprep.subr.mxu0 0.0
        %2908 = vmatpush2.msra.mxu0 0.0
        %2909 = vmatprep.subr.mxu0 0.0
        %2910 = vmatpush2.msra.mxu0 0.0
        %2911 = vmatprep.subr.mxu0 0.0
        %2912 = vmatpush2.msra.mxu0 0.0
        %2913 = vmatprep.subr.mxu0 0.0
        %2914 = vmatpush2.msra.mxu0 0.0
        %2915 = vmatprep.subr.mxu0 0.0
        %2916 = vmatpush2.msra.mxu0 0.0
        %2917 = vmatprep.subr.mxu0 0.0
        %2918 = vmatpush2.msra.mxu0 0.0
        %2919 = vmatprep.subr.mxu0 0.0
        %2920 = vmatpush2.msra.mxu0 0.0
        %2921 = vmatprep.subr.mxu0 0.0
        %2922 = vmatpush2.msra.mxu0 0.0
        %2923 = vmatprep.subr.mxu0 0.0
        %2924 = vmatpush2.msra.mxu0 0.0
        %2925 = vmatprep.subr.mxu0 0.0
        %2926 = vmatpush2.msra.mxu0 0.0
        %2927 = vmatprep.subr.mxu0 0.0
        %2928 = vmatpush2.msra.mxu0 0.0
        %2929 = vmatprep.subr.mxu0 0.0
        %2930 = vmatpush2.msra.mxu0 0.0
        %2931 = vmatprep.subr.mxu0 0.0
        %2932 = vmatpush2.msra.mxu0 0.0
        %2933 = vmatprep.subr.mxu0 0.0
        %2934 = vmatpush2.msra.mxu0 0.0
        %2935 = vmatprep.mubr.f32.mxu0 0.0
        %2936 = vmatmul.mubr.f32.gmra.mxu0 %v2867
        %v2937 = vpop.f32.mrf.mxu0
        %v2938 = vadd.f32 0.0, %v2937
        %v2939 = vpop.f32.mrf.mxu0
        %2940 = vmatprep.mubr.f32.mxu0 0.0
        %2941 = vmatmul.mubr.f32.gmra.mxu0 %v2869
        %v2942 = vpop.f32.mrf.mxu0
        %v2943 = vadd.f32 0.0, %v2942
        %v2944 = vpop.f32.mrf.mxu0
        %2945 = vdwg.mxu0
        %v2962 = vsel %vm2846, %v2537, %v2530
        %v2963 = vsel %vm2848, %v2544, %v2962
        %v2964 = vsel %vm2850, %v2551, %v2963
        %v2965 = vsel %vm2852, %v2558, %v2964
        %v2966 = vsel %vm2854, %v2565, %v2965
        %v2967 = vsel %vm2856, %v2572, %v2966
        %v2968 = vsel %vm2858, %v2579, %v2967
        %v2969 = vsel %vm2846, %v2593, %v2586
        %v2970 = vsel %vm2848, %v2600, %v2969
        %v2971 = vsel %vm2850, %v2607, %v2970
        %v2972 = vsel %vm2852, %v2614, %v2971
        %v2973 = vsel %vm2854, %v2621, %v2972
        %v2974 = vsel %vm2856, %v2628, %v2973
        %v2975 = vsel %vm2858, %v2635, %v2974
        %v2976 = vsel %vm1014, %v2968, 0
        %v2978 = vsel %vm1014, %v2975, 0
        %2980 = vmatprep.subr.mxu0 0.0
        %2981 = vmatpush1.msra.mxu0 0.0
        %2982 = vmatprep.subr.mxu0 0.0
        %2983 = vmatpush1.msra.mxu0 0.0
        %2984 = vmatprep.subr.mxu0 0.0
        %2985 = vmatpush1.msra.mxu0 0.0
        %2986 = vmatprep.subr.mxu0 0.0
        %2987 = vmatpush1.msra.mxu0 0.0
        %2988 = vmatprep.subr.mxu0 0.0
        %2989 = vmatpush1.msra.mxu0 0.0
        %2990 = vmatprep.subr.mxu0 0.0
        %2991 = vmatpush1.msra.mxu0 0.0
        %2992 = vmatprep.subr.mxu0 0.0
        %2993 = vmatpush1.msra.mxu0 0.0
        %2994 = vmatprep.subr.mxu0 0.0
        %2995 = vmatpush1.msra.mxu0 0.0
        %2996 = vmatprep.subr.mxu0 0.0
        %2997 = vmatpush1.msra.mxu0 0.0
        %2998 = vmatprep.subr.mxu0 0.0
        %2999 = vmatpush1.msra.mxu0 0.0
        %3000 = vmatprep.subr.mxu0 0.0
        %3001 = vmatpush1.msra.mxu0 0.0
        %3002 = vmatprep.subr.mxu0 0.0
        %3003 = vmatpush1.msra.mxu0 0.0
        %3004 = vmatprep.subr.mxu0 0.0
        %3005 = vmatpush1.msra.mxu0 0.0
        %3006 = vmatprep.subr.mxu0 0.0
        %3007 = vmatpush1.msra.mxu0 0.0
        %3008 = vmatprep.subr.mxu0 0.0
        %3009 = vmatpush1.msra.mxu0 0.0
        %3010 = vmatprep.subr.mxu0 0.0
        %3011 = vmatpush1.msra.mxu0 %v2828
        %3012 = vmatprep.subr.mxu0 0.0
        %3013 = vmatpush2.msra.mxu0 0.0
        %3014 = vmatprep.subr.mxu0 0.0
        %3015 = vmatpush2.msra.mxu0 0.0
        %3016 = vmatprep.subr.mxu0 0.0
        %3017 = vmatpush2.msra.mxu0 0.0
        %3018 = vmatprep.subr.mxu0 0.0
        %3019 = vmatpush2.msra.mxu0 0.0
        %3020 = vmatprep.subr.mxu0 0.0
        %3021 = vmatpush2.msra.mxu0 0.0
        %3022 = vmatprep.subr.mxu0 0.0
        %3023 = vmatpush2.msra.mxu0 0.0
        %3024 = vmatprep.subr.mxu0 0.0
        %3025 = vmatpush2.msra.mxu0 0.0
        %3026 = vmatprep.subr.mxu0 0.0
        %3027 = vmatpush2.msra.mxu0 0.0
        %3028 = vmatprep.subr.mxu0 0.0
        %3029 = vmatpush2.msra.mxu0 0.0
        %3030 = vmatprep.subr.mxu0 0.0
        %3031 = vmatpush2.msra.mxu0 0.0
        %3032 = vmatprep.subr.mxu0 0.0
        %3033 = vmatpush2.msra.mxu0 0.0
        %3034 = vmatprep.subr.mxu0 0.0
        %3035 = vmatpush2.msra.mxu0 0.0
        %3036 = vmatprep.subr.mxu0 0.0
        %3037 = vmatpush2.msra.mxu0 0.0
        %3038 = vmatprep.subr.mxu0 0.0
        %3039 = vmatpush2.msra.mxu0 0.0
        %3040 = vmatprep.subr.mxu0 0.0
        %3041 = vmatpush2.msra.mxu0 0.0
        %3042 = vmatprep.subr.mxu0 0.0
        %3043 = vmatpush2.msra.mxu0 0.0
        %3044 = vmatprep.mubr.f32.mxu0 0.0
        %3045 = vmatmul.mubr.f32.gmra.mxu0 %v2976
        %v3046 = vpop.f32.mrf.mxu0
        %v3047 = vadd.f32 %v2938, %v3046
        %v3048 = vpop.f32.mrf.mxu0
        %3049 = vmatprep.mubr.f32.mxu0 0.0
        %3050 = vmatmul.mubr.f32.gmra.mxu0 %v2978
        %v3051 = vpop.f32.mrf.mxu0
        %v3052 = vadd.f32 %v2943, %v3051
        %v3053 = vpop.f32.mrf.mxu0
        %3054 = vdwg.mxu0
        %v3055 = vld [vmem:[%s16] sm:$0x1]
        %v3057 = vlaneseq
        %v3058 = vshrl.u32 %v3057, 7
        %v3059 = vsub.s32 0, %v3058
        %v3060 = vrot.slane %v3055, %v3059
        %v3062 = vmul.f32 %v3047, %v3060
        %v3063 = vmul.f32 %v3052, %v3060
        %v3064 = vld [vmem:[%s17] sm:$0x1]
        %v3066 = vlaneseq
        %v3067 = vshrl.u32 %v3066, 7
        %v3068 = vsub.s32 0, %v3067
        %v3069 = vrot.slane %v3064, %v3068
        %v3071 = vadd.f32 %v3062, %v3069
        %v3072 = vadd.f32 %v3063, %v3069
        %v3073 = vmax.f32 %v3071, 0.0
        %v3074 = vmax.f32 %v3072, 0.0
        %3075 = vst.msk [vmem:[%s671] sm:$0xff] %vm2203, %v3073
        %3076 = vst.msk [vmem:[%s671 + $0x8] sm:$0xff] %vm2203, %v3074
        %s3077 = sand.u32 %s460, 1
        %s3078 = scalar_lea.sflag [#allocation3], %s3077
        %s3079 = sand.u32 %s460, 1
        %s3080 = smul.addr %s3079, 16
        %s3081 = scalar_lea.vmem [#allocation2], %s3080
        // Predicated region
        $region93: #{_lambda_.3} parent=91 // pred_check
          %p3082 = pneg %p470
        $region94: #{_lambda_.3} parent=91 // pred_check_branch
          %3084 = sbr.rel (%p3082) target = $region96
        $region95: #{_lambda_.3} parent=91 // pred_region
          %s3085 = smul.u32 2, %s37
          %s3087 = ssub.s32 256, 256
          %3088 = vsyncadd %s3078, %s3087
          %s3089 = smul.addr %s36, 2
          %s3090 = sadd.s32 %s3085, %s3089
          %s3091 = smul.addr %s3090, 128
          %s3092 = scalar_lea.hbm %s18, %s3091
          %s3093 = sshll.u32 %s3081, 4
          %s3094 = int_to_ptr.vmem [resolvable:$true] %s3093
          %3099 = dma.vmem_to_hbm [thread:$0]  %s3094, 256, %s3092, %s3078, 128, 128, 8
        $region96: #{_lambda_.3} parent=91 // pred_fallthru
          _
      $region92: #{_lambda_.3} parent=5 // pred_fallthru
        _
      %p3100 = scmp.le.s32.totalorder 2, %s27
      // Predicated region
      $region97: #{_lambda_.3} parent=5 // pred_check
        %p3101 = pneg %p3100
      $region98: #{_lambda_.3} parent=5 // pred_check_branch
        %3103 = sbr.rel (%p3101) target = $region100
      $region99: #{_lambda_.3} parent=5 // pred_region
        %s3104 = ssub.s32 %s27, 2
        // Predicated region
        $region101: #{_lambda_.3} parent=99 // pred_check
          %p3105 = pneg %p476
        $region102: #{_lambda_.3} parent=99 // pred_check_branch
          %3107 = sbr.rel (%p3105) target = $region104
        $region103: #{_lambda_.3} parent=99 // pred_region
          %s3108 = sand.u32 %s461, 1
          %s3109 = scalar_lea.sflag [#allocation3], %s3108
          %s3110 = sand.u32 %s461, 1
          %s3111 = smul.addr %s3110, 16
          %s3112 = scalar_lea.vmem [#allocation2], %s3111
          %3113 = dma.done %s3109, 256
        $region104: #{_lambda_.3} parent=99 // pred_fallthru
          _
      $region100: #{_lambda_.3} parent=5 // pred_fallthru
        _
    $region6: #{_lambda_.3} parent=1 // loop_footer
      %s31 = sadd.s32 1, %s27
    $region7: #{_lambda_.3} parent=1 // loop_footer_branch
      %26 = sbr.rel target = $region3
    $region8: #{_lambda_.3} parent=1 // loop_exit
      _
    %3114 = vsyncpa [#allocation3], 1
    %s3115 = scalar_lea.sflag [#allocation3], 1
    %3116 = vsyncpa %s3115, 1

</llo_original>
